<compile_context>
chip_gen: v7x
topology: tpu7x:2x2x1
jax: 0.10.0
libtpu: 0.0.40
codegen_flags: <defaults>
</compile_context>

<pallas_src>
import math

import numpy as np

import jax
import jax.numpy as jnp
from jax.experimental import pallas as pl
from jax.experimental.pallas import tpu as pltpu


# -----------------------------------------------------------------------------
# Synthetic (small) SSD config mirroring the structure of the original `cfg`.
# -----------------------------------------------------------------------------
class cfg:
    num_class = 3
    num_box_points = 4
    num_anchors = [4, 6, 6, 6, 4, 4]
    feature_dimensions = [8, 16, 8, 8, 8, 8]
    feature_resolutions = [8, 4, 2, 2, 1, 1]


NUM_CLS_LOC = cfg.num_box_points + cfg.num_class              # 7
NUM_HEADS = 6
FEAT_RES = cfg.feature_resolutions                            # [8, 4, 2, 2, 1, 1]
FEAT_DIM = cfg.feature_dimensions                             # [8, 16, 8, 8, 8, 8]
NUM_ANCH = cfg.num_anchors                                    # [4, 6, 6, 6, 4, 4]
COUT = [NUM_CLS_LOC * a for a in NUM_ANCH]                    # [28, 42, 42, 42, 28, 28]
K_IN = [c * r * r for c, r in zip(FEAT_DIM, FEAT_RES)]        # NCHW-flat image length
OUT_VALID = [r * r * c for r, c in zip(FEAT_RES, COUT)]       # valid output per head
OUT_PAD = [((v + 127) // 128) * 128 for v in OUT_VALID]       # lane-dense segment width
OUT_OFF = [sum(OUT_PAD[:i]) for i in range(NUM_HEADS)]        # 128-aligned segment start
OUT_TOTAL = sum(OUT_PAD)                                      # 3328 = 26 * 128


# -----------------------------------------------------------------------------
# Fused Pallas kernel: all 6 prediction-head convs, whole batch, one invocation.
# -----------------------------------------------------------------------------
def _fused_heads_kernel(*refs):
    x_refs = refs[:NUM_HEADS]                   # (N, K_i)        NCHW-flat inputs
    w_refs = refs[NUM_HEADS:2 * NUM_HEADS]      # (K_i, OUT_PAD_i) im2col weights
    b_ref = refs[2 * NUM_HEADS]                 # (1, OUT_TOTAL)   packed bias
    o_ref = refs[2 * NUM_HEADS + 1]             # (N, OUT_TOTAL)   packed output

    for i in range(NUM_HEADS):
        off, pad = OUT_OFF[i], OUT_PAD[i]
        acc = jnp.dot(x_refs[i][...], w_refs[i][...],
                      preferred_element_type=jnp.float32)
        # 128-aligned, lane-dense store of this head's segment (+ its bias).
        o_ref[:, off:off + pad] = (acc + b_ref[:, off:off + pad]).astype(o_ref.dtype)


def _fused_heads_call(xs, ws, bias):
    """xs[i]: (N, K_i); ws[i]: (K_i, OUT_PAD_i); bias: (1, OUT_TOTAL).
    Single invocation (no grid): everything resident in VMEM (~4.6 MiB)."""
    N = xs[0].shape[0]
    return pl.pallas_call(
        _fused_heads_kernel,
        out_shape=jax.ShapeDtypeStruct((N, OUT_TOTAL), jnp.float32),
        compiler_params=pltpu.CompilerParams(vmem_limit_bytes=16 * 1024 * 1024),
    )(*xs, *ws, bias)


# -----------------------------------------------------------------------------
# Init-time preprocessing: im2col weights (NCHW-in, packed NHWC-out) + bias.
# -----------------------------------------------------------------------------
def _kaiming_conv(key, cin, cout):
    # kaiming_normal_(mode='fan_out') for a 3x3 conv: std = sqrt(2 / (cout*9))
    std = math.sqrt(2.0 / (cout * 9))
    return jax.random.normal(key, (3, 3, cin, cout), jnp.float32) * std


def _im2col_weight(w_hwio, R, out_pad):
    """Weight W such that, with x_flat the NCHW-flattened (c,h,w) image row,
    (x_flat @ W)[(ho*R+wo)*Cout + co] == SAMEconv(x)[ho, wo, co] (NHWC order).
    Zero padding of the conv is absorbed as zero rows/columns; the output is
    lane-padded with zero columns up to out_pad (multiple of 128)."""
    Cin, Cout = int(w_hwio.shape[2]), int(w_hwio.shape[3])
    W = np.zeros((Cin * R * R, R * R * Cout), np.float32)
    c_rows = np.arange(Cin) * R * R
    for ho in range(R):
        for wo in range(R):
            col = (ho * R + wo) * Cout
            for kh in range(3):
                hi = ho + kh - 1
                if hi < 0 or hi >= R:
                    continue
                for kw in range(3):
                    wi = wo + kw - 1
                    if wi < 0 or wi >= R:
                        continue
                    W[c_rows + hi * R + wi, col:col + Cout] = w_hwio[kh, kw]
    return np.pad(W, ((0, 0), (0, out_pad - R * R * Cout)))


def _packed_bias(biases):
    b = np.zeros((1, OUT_TOTAL), np.float32)
    for i in range(NUM_HEADS):
        tiled = np.tile(np.asarray(biases[i], np.float32), FEAT_RES[i] * FEAT_RES[i])
        b[0, OUT_OFF[i]:OUT_OFF[i] + OUT_VALID[i]] = tiled
    return jnp.asarray(b)


# -----------------------------------------------------------------------------
# Forward paths (pure functions so params are jit args, not burned constants).
# -----------------------------------------------------------------------------
def _forward_pallas(packed_w, packed_b, feats_nchw):
    N = feats_nchw[0].shape[0]
    # Free (layout-preserving) flatten of the NCHW feature maps; no transposes.
    xs = tuple(f.astype(jnp.float32).reshape(N, K_IN[i])
               for i, f in enumerate(feats_nchw))
    out = _fused_heads_call(xs, packed_w, packed_b)

    # Collapsed glue: per-head slice+reshape, ONE concat, ONE split.
    ys = []
    for i in range(NUM_HEADS):
        seg = out[:, OUT_OFF[i]:OUT_OFF[i] + OUT_VALID[i]]
        ys.append(seg.reshape(N, FEAT_RES[i] * FEAT_RES[i] * NUM_ANCH[i],
                              NUM_CLS_LOC))
    y = jnp.concatenate(ys, axis=1)
    return y[:, :, :cfg.num_box_points], y[:, :, cfg.num_box_points:]


def _forward_ref(weights, biases, feats_nchw):
    """Pure-JAX reference (conv_general_dilated) for validation."""
    N = feats_nchw[0].shape[0]
    locs, clss = [], []
    for i, f in enumerate(feats_nchw):
        x = jnp.transpose(f, (0, 2, 3, 1)).astype(jnp.float32)
        y = jax.lax.conv_general_dilated(
            x, weights[i], (1, 1), "SAME",
            dimension_numbers=("NHWC", "HWIO", "NHWC")) + biases[i]
        y = y.reshape(N, -1, NUM_CLS_LOC)
        locs.append(y[:, :, :cfg.num_box_points])
        clss.append(y[:, :, cfg.num_box_points:])
    return jnp.concatenate(locs, axis=1), jnp.concatenate(clss, axis=1)


# -----------------------------------------------------------------------------
# PredictBlock module.
# -----------------------------------------------------------------------------
class PredictBlock:
    """JAX/Pallas equivalent of the PyTorch PredictBlock.

    # TODO(synk): the `predict_block` factory argument is assumed to be a plain
    # nn.Conv2d (kaiming_normal fan_out weights, zero bias); norm-wrapped
    # factories (BatchNorm/GroupNorm variants) are not modeled.
    """

    def __init__(self, key):
        self.num_cls_loc = NUM_CLS_LOC
        keys = jax.random.split(key, NUM_HEADS)
        self.weights = [_kaiming_conv(keys[i], FEAT_DIM[i], COUT[i])
                        for i in range(NUM_HEADS)]
        self.biases = [jnp.zeros((COUT[i],), jnp.float32)
                       for i in range(NUM_HEADS)]
        self._repack()
        self._fwd = jax.jit(_forward_pallas)
        self._fwd_ref = jax.jit(_forward_ref)

    def _repack(self):
        self.packed_w = tuple(
            jnp.asarray(_im2col_weight(np.asarray(self.weights[i]),
                                       FEAT_RES[i], OUT_PAD[i]))
            for i in range(NUM_HEADS))
        self.packed_b = _packed_bias(self.biases)

    def set_params(self, weights=None, biases=None):
        if weights is not None:
            self.weights = list(weights)
        if biases is not None:
            self.biases = list(biases)
        self._repack()

    def __call__(self, feats_nchw):
        return self._fwd(self.packed_w, self.packed_b, tuple(feats_nchw))

    def forward_ref(self, feats_nchw):
        return self._fwd_ref(tuple(self.weights), tuple(self.biases),
                             tuple(feats_nchw))


# -----------------------------------------------------------------------------
if __name__ == "__main__":
    model = PredictBlock(jax.random.PRNGKey(1))

    # 6 backbone/aux feature maps (NCHW, as PredictBlock.forward expects).
    N = 2
    fkeys = jax.random.split(jax.random.PRNGKey(0), NUM_HEADS)
    feats = tuple(
        jax.random.normal(fkeys[i], (N, FEAT_DIM[i], FEAT_RES[i], FEAT_RES[i]),
                          jnp.float32)
        for i in range(NUM_HEADS))

    locs, clss = model(feats)
    locs, clss = jax.block_until_ready((locs, clss))

    n_priors = sum(r * r * a for r, a in zip(FEAT_RES, NUM_ANCH))   # 408
    assert locs.shape == (N, n_priors, cfg.num_box_points), locs.shape
    assert clss.shape == (N, n_priors, cfg.num_class), clss.shape

    # Validate the fused Pallas kernel against a pure-JAX conv reference.
    locs_r, clss_r = model.forward_ref(feats)
    assert jnp.allclose(locs, locs_r, atol=1e-4, rtol=1e-4)
    assert jnp.allclose(clss, clss_r, atol=1e-4, rtol=1e-4)

    # Exercise the packed-bias path with nonzero biases (review concern).
    bkeys = jax.random.split(jax.random.PRNGKey(2), NUM_HEADS)
    model.set_params(biases=[0.1 * jax.random.normal(bkeys[i], (COUT[i],),
                                                     jnp.float32)
                             for i in range(NUM_HEADS)])
    locs2, clss2 = jax.block_until_ready(model(feats))
    locs2_r, clss2_r = model.forward_ref(feats)
    assert jnp.allclose(locs2, locs2_r, atol=1e-4, rtol=1e-4)
    assert jnp.allclose(clss2, clss2_r, atol=1e-4, rtol=1e-4)

    print("KERNEL_OK")
</pallas_src>

<mosaic_0001>
module attributes {stable_mosaic.version = 11 : i64} {
  func.func @_fused_heads_kernel(%arg0: memref<2x512xf32, #tpu.memory_space<vmem>>, %arg1: memref<2x256xf32, #tpu.memory_space<vmem>>, %arg2: memref<2x32xf32, #tpu.memory_space<vmem>>, %arg3: memref<2x32xf32, #tpu.memory_space<vmem>>, %arg4: memref<2x8xf32, #tpu.memory_space<vmem>>, %arg5: memref<2x8xf32, #tpu.memory_space<vmem>>, %arg6: memref<512x1792xf32, #tpu.memory_space<vmem>>, %arg7: memref<256x768xf32, #tpu.memory_space<vmem>>, %arg8: memref<32x256xf32, #tpu.memory_space<vmem>>, %arg9: memref<32x256xf32, #tpu.memory_space<vmem>>, %arg10: memref<8x128xf32, #tpu.memory_space<vmem>>, %arg11: memref<8x128xf32, #tpu.memory_space<vmem>>, %arg12: memref<1x3328xf32, #tpu.memory_space<vmem>>, %arg13: memref<2x3328xf32, #tpu.memory_space<vmem>>) attributes {dimension_semantics = [], scalar_prefetch = 0 : i64, scratch_operands = 0 : i64, tpu.core_type = #tpu.core_type<tc>} {
    %c0 = arith.constant 0 : index
    %c0_0 = arith.constant 0 : index
    %0 = vector.load %arg0[%c0, %c0_0] : memref<2x512xf32, #tpu.memory_space<vmem>>, vector<2x512xf32>
    %c0_1 = arith.constant 0 : index
    %c0_2 = arith.constant 0 : index
    %1 = vector.load %arg6[%c0_1, %c0_2] : memref<512x1792xf32, #tpu.memory_space<vmem>>, vector<512x1792xf32>
    %cst = arith.constant dense<0.000000e+00> : vector<2x1792xf32>
    %2 = tpu.matmul %0, %1, %cst {dimension_numbers = #tpu.dot_dimension_numbers<[1], [0], [0], [1], [0, 0, 1, 1], [], []>} : vector<2x512xf32>, vector<512x1792xf32>, vector<2x1792xf32> -> vector<2x1792xf32>
    %c0_3 = arith.constant 0 : index
    %c0_4 = arith.constant 0 : index
    %3 = vector.load %arg12[%c0_3, %c0_4] : memref<1x3328xf32, #tpu.memory_space<vmem>>, vector<1x1792xf32>
    %4 = vector.broadcast %3 : vector<1x1792xf32> to vector<2x1792xf32>
    %5 = arith.addf %2, %4 : vector<2x1792xf32>
    %c0_5 = arith.constant 0 : index
    %c0_6 = arith.constant 0 : index
    %6 = vector.load %arg13[%c0_5, %c0_6] : memref<2x3328xf32, #tpu.memory_space<vmem>>, vector<2x1792xf32>
    tpu.vector_store %arg13[%c0_5, %c0_6], %5 {strides = array<i32>} : memref<2x3328xf32, #tpu.memory_space<vmem>>, vector<2x1792xf32>,
    %c0_7 = arith.constant 0 : index
    %c0_8 = arith.constant 0 : index
    %7 = vector.load %arg1[%c0_7, %c0_8] : memref<2x256xf32, #tpu.memory_space<vmem>>, vector<2x256xf32>
    %c0_9 = arith.constant 0 : index
    %c0_10 = arith.constant 0 : index
    %8 = vector.load %arg7[%c0_9, %c0_10] : memref<256x768xf32, #tpu.memory_space<vmem>>, vector<256x768xf32>
    %cst_11 = arith.constant dense<0.000000e+00> : vector<2x768xf32>
    %9 = tpu.matmul %7, %8, %cst_11 {dimension_numbers = #tpu.dot_dimension_numbers<[1], [0], [0], [1], [0, 0, 1, 1], [], []>} : vector<2x256xf32>, vector<256x768xf32>, vector<2x768xf32> -> vector<2x768xf32>
    %c0_12 = arith.constant 0 : index
    %c1792 = arith.constant 1792 : index
    %10 = vector.load %arg12[%c0_12, %c1792] : memref<1x3328xf32, #tpu.memory_space<vmem>>, vector<1x768xf32>
    %11 = vector.broadcast %10 : vector<1x768xf32> to vector<2x768xf32>
    %12 = arith.addf %9, %11 : vector<2x768xf32>
    %c0_13 = arith.constant 0 : index
    %c1792_14 = arith.constant 1792 : index
    %13 = vector.load %arg13[%c0_13, %c1792_14] : memref<2x3328xf32, #tpu.memory_space<vmem>>, vector<2x768xf32>
    tpu.vector_store %arg13[%c0_13, %c1792_14], %12 {strides = array<i32>} : memref<2x3328xf32, #tpu.memory_space<vmem>>, vector<2x768xf32>,
    %c0_15 = arith.constant 0 : index
    %c0_16 = arith.constant 0 : index
    %14 = vector.load %arg2[%c0_15, %c0_16] : memref<2x32xf32, #tpu.memory_space<vmem>>, vector<2x32xf32>
    %c0_17 = arith.constant 0 : index
    %c0_18 = arith.constant 0 : index
    %15 = vector.load %arg8[%c0_17, %c0_18] : memref<32x256xf32, #tpu.memory_space<vmem>>, vector<32x256xf32>
    %cst_19 = arith.constant dense<0.000000e+00> : vector<2x256xf32>
    %16 = tpu.matmul %14, %15, %cst_19 {dimension_numbers = #tpu.dot_dimension_numbers<[1], [0], [0], [1], [0, 0, 1, 1], [], []>} : vector<2x32xf32>, vector<32x256xf32>, vector<2x256xf32> -> vector<2x256xf32>
    %c0_20 = arith.constant 0 : index
    %c2560 = arith.constant 2560 : index
    %17 = vector.load %arg12[%c0_20, %c2560] : memref<1x3328xf32, #tpu.memory_space<vmem>>, vector<1x256xf32>
    %18 = vector.broadcast %17 : vector<1x256xf32> to vector<2x256xf32>
    %19 = arith.addf %16, %18 : vector<2x256xf32>
    %c0_21 = arith.constant 0 : index
    %c2560_22 = arith.constant 2560 : index
    %20 = vector.load %arg13[%c0_21, %c2560_22] : memref<2x3328xf32, #tpu.memory_space<vmem>>, vector<2x256xf32>
    tpu.vector_store %arg13[%c0_21, %c2560_22], %19 {strides = array<i32>} : memref<2x3328xf32, #tpu.memory_space<vmem>>, vector<2x256xf32>,
    %c0_23 = arith.constant 0 : index
    %c0_24 = arith.constant 0 : index
    %21 = vector.load %arg3[%c0_23, %c0_24] : memref<2x32xf32, #tpu.memory_space<vmem>>, vector<2x32xf32>
    %c0_25 = arith.constant 0 : index
    %c0_26 = arith.constant 0 : index
    %22 = vector.load %arg9[%c0_25, %c0_26] : memref<32x256xf32, #tpu.memory_space<vmem>>, vector<32x256xf32>
    %cst_27 = arith.constant dense<0.000000e+00> : vector<2x256xf32>
    %23 = tpu.matmul %21, %22, %cst_27 {dimension_numbers = #tpu.dot_dimension_numbers<[1], [0], [0], [1], [0, 0, 1, 1], [], []>} : vector<2x32xf32>, vector<32x256xf32>, vector<2x256xf32> -> vector<2x256xf32>
    %c0_28 = arith.constant 0 : index
    %c2816 = arith.constant 2816 : index
    %24 = vector.load %arg12[%c0_28, %c2816] : memref<1x3328xf32, #tpu.memory_space<vmem>>, vector<1x256xf32>
    %25 = vector.broadcast %24 : vector<1x256xf32> to vector<2x256xf32>
    %26 = arith.addf %23, %25 : vector<2x256xf32>
    %c0_29 = arith.constant 0 : index
    %c2816_30 = arith.constant 2816 : index
    %27 = vector.load %arg13[%c0_29, %c2816_30] : memref<2x3328xf32, #tpu.memory_space<vmem>>, vector<2x256xf32>
    tpu.vector_store %arg13[%c0_29, %c2816_30], %26 {strides = array<i32>} : memref<2x3328xf32, #tpu.memory_space<vmem>>, vector<2x256xf32>,
    %c0_31 = arith.constant 0 : index
    %c0_32 = arith.constant 0 : index
    %28 = vector.load %arg4[%c0_31, %c0_32] : memref<2x8xf32, #tpu.memory_space<vmem>>, vector<2x8xf32>
    %c0_33 = arith.constant 0 : index
    %c0_34 = arith.constant 0 : index
    %29 = vector.load %arg10[%c0_33, %c0_34] : memref<8x128xf32, #tpu.memory_space<vmem>>, vector<8x128xf32>
    %cst_35 = arith.constant dense<0.000000e+00> : vector<2x128xf32>
    %30 = tpu.matmul %28, %29, %cst_35 {dimension_numbers = #tpu.dot_dimension_numbers<[1], [0], [0], [1], [0, 0, 1, 1], [], []>} : vector<2x8xf32>, vector<8x128xf32>, vector<2x128xf32> -> vector<2x128xf32>
    %c0_36 = arith.constant 0 : index
    %c3072 = arith.constant 3072 : index
    %31 = vector.load %arg12[%c0_36, %c3072] : memref<1x3328xf32, #tpu.memory_space<vmem>>, vector<1x128xf32>
    %32 = vector.broadcast %31 : vector<1x128xf32> to vector<2x128xf32>
    %33 = arith.addf %30, %32 : vector<2x128xf32>
    %c0_37 = arith.constant 0 : index
    %c3072_38 = arith.constant 3072 : index
    %34 = vector.load %arg13[%c0_37, %c3072_38] : memref<2x3328xf32, #tpu.memory_space<vmem>>, vector<2x128xf32>
    tpu.vector_store %arg13[%c0_37, %c3072_38], %33 {strides = array<i32>} : memref<2x3328xf32, #tpu.memory_space<vmem>>, vector<2x128xf32>,
    %c0_39 = arith.constant 0 : index
    %c0_40 = arith.constant 0 : index
    %35 = vector.load %arg5[%c0_39, %c0_40] : memref<2x8xf32, #tpu.memory_space<vmem>>, vector<2x8xf32>
    %c0_41 = arith.constant 0 : index
    %c0_42 = arith.constant 0 : index
    %36 = vector.load %arg11[%c0_41, %c0_42] : memref<8x128xf32, #tpu.memory_space<vmem>>, vector<8x128xf32>
    %cst_43 = arith.constant dense<0.000000e+00> : vector<2x128xf32>
    %37 = tpu.matmul %35, %36, %cst_43 {dimension_numbers = #tpu.dot_dimension_numbers<[1], [0], [0], [1], [0, 0, 1, 1], [], []>} : vector<2x8xf32>, vector<8x128xf32>, vector<2x128xf32> -> vector<2x128xf32>
    %c0_44 = arith.constant 0 : index
    %c3200 = arith.constant 3200 : index
    %38 = vector.load %arg12[%c0_44, %c3200] : memref<1x3328xf32, #tpu.memory_space<vmem>>, vector<1x128xf32>
    %39 = vector.broadcast %38 : vector<1x128xf32> to vector<2x128xf32>
    %40 = arith.addf %37, %39 : vector<2x128xf32>
    %c0_45 = arith.constant 0 : index
    %c3200_46 = arith.constant 3200 : index
    %41 = vector.load %arg13[%c0_45, %c3200_46] : memref<2x3328xf32, #tpu.memory_space<vmem>>, vector<2x128xf32>
    tpu.vector_store %arg13[%c0_45, %c3200_46], %40 {strides = array<i32>} : memref<2x3328xf32, #tpu.memory_space<vmem>>, vector<2x128xf32>,
    return
  }
}

</mosaic_0001>

<llo_original>
// kernel: _forward_pallas.1
$region0: #{_forward_pallas.1}
  #allocation0 [shape = 'u32[]', space=smem, size = 0x4, offset = 0x4, fixed_abs, tag = 'smem constant byte address 0x4 - core index']
  #allocation1 [shape = 'u32[144,128]{1,0:T(1,128)}', space=vmem, size = 0x12000, scoped, tag = 'internal scratch']
  %s0 = inlined_call_operand.vmem [shape: f32[2,512], index: 0, kind: input, shape index: {}]
  %s1 = inlined_call_operand.vmem [shape: f32[2,256], index: 1, kind: input, shape index: {}]
  %s2 = inlined_call_operand.vmem [shape: f32[2,32], index: 2, kind: input, shape index: {}]
  %s3 = inlined_call_operand.vmem [shape: f32[2,32], index: 3, kind: input, shape index: {}]
  %s4 = inlined_call_operand.hbm [shape: f32[2,8], index: 4, kind: input, shape index: {}]
  %s5 = inlined_call_operand.hbm [shape: f32[2,8], index: 5, kind: input, shape index: {}]
  %s6 = inlined_call_operand.hbm [shape: f32[512,1792], index: 6, kind: input, shape index: {}]
  %s7 = inlined_call_operand.hbm [shape: f32[256,768], index: 7, kind: input, shape index: {}]
  %s8 = inlined_call_operand.hbm [shape: f32[32,256], index: 8, kind: input, shape index: {}]
  %s9 = inlined_call_operand.hbm [shape: f32[32,256], index: 9, kind: input, shape index: {}]
  %s10 = inlined_call_operand.hbm [shape: f32[8,128], index: 10, kind: input, shape index: {}]
  %s11 = inlined_call_operand.hbm [shape: f32[8,128], index: 11, kind: input, shape index: {}]
  %s12 = inlined_call_operand.hbm [shape: f32[1,3328], index: 12, kind: input, shape index: {}]
  %s13 = inlined_call_operand.vmem [shape: f32[2,3328], index: 13, kind: output, shape index: {}]
  %s14 = sld [smem:[#allocation0]]
  $region98: #{_forward_pallas.1} parent=0
    _
  %s16 = ssub.s32 1, %s14
  %s17 = scalar_select 0, %s16, %s14
  $region1: #{_forward_pallas.1} parent=0
    #allocation2 [shape = 'u8[1024]{0}', space=vmem, size = 0x400, scoped, tag = 'input window, operand 4, single buffered']
    #allocation3 [shape = 's32[1]{0}', space=sflag, size = 0x4, scoped, tag = 'scoped memory for _forward_pallas.1']
    #allocation4 [shape = 'u8[1024]{0}', space=vmem, size = 0x400, scoped, tag = 'input window, operand 5, single buffered']
    #allocation5 [shape = 's32[1]{0}', space=sflag, size = 0x4, scoped, tag = 'scoped memory for _forward_pallas.1']
    #allocation6 [shape = 'u8[3670016]{0}', space=vmem, size = 0x380000, scoped, tag = 'input window, operand 6, single buffered']
    #allocation7 [shape = 'u8[786432]{0}', space=vmem, size = 0xc0000, scoped, tag = 'input window, operand 7, single buffered']
    #allocation8 [shape = 's32[1]{0}', space=sflag, size = 0x4, scoped, tag = 'scoped memory for _forward_pallas.1']
    #allocation9 [shape = 'u8[32768]{0}', space=vmem, size = 0x8000, scoped, tag = 'input window, operand 8, single buffered']
    #allocation10 [shape = 'u8[32768]{0}', space=vmem, size = 0x8000, scoped, tag = 'input window, operand 9, single buffered']
    #allocation11 [shape = 's32[1]{0}', space=sflag, size = 0x4, scoped, tag = 'scoped memory for _forward_pallas.1']
    #allocation12 [shape = 'u8[4096]{0}', space=vmem, size = 0x1000, scoped, tag = 'input window, operand 10, single buffered']
    #allocation13 [shape = 'u8[4096]{0}', space=vmem, size = 0x1000, scoped, tag = 'input window, operand 11, single buffered']
    #allocation14 [shape = 's32[1]{0}', space=sflag, size = 0x4, scoped, tag = 'scoped memory for _forward_pallas.1']
    #allocation15 [shape = 'u8[13312]{0}', space=vmem, size = 0x3400, scoped, tag = 'input window, operand 12, single buffered']
    %18 = vsyncpa [#allocation3], 0
    %19 = vsyncpa [#allocation5], 0
    %20 = vsyncpa [#allocation8], 0
    %21 = vsyncpa [#allocation11], 0
    %22 = vsyncpa [#allocation14], 0
    // Predicated region
    $region2: #{_forward_pallas.1} parent=1 // pred_check
      _
    $region3: #{_forward_pallas.1} parent=1 // pred_check_branch
      %24 = sbr.rel (0) target = $region5
    $region4: #{_forward_pallas.1} parent=1 // pred_region
      _
    $region5: #{_forward_pallas.1} parent=1 // pred_fallthru
      _
    // Predicated region
    $region6: #{_forward_pallas.1} parent=1 // pred_check
      _
    $region7: #{_forward_pallas.1} parent=1 // pred_check_branch
      %26 = sbr.rel (0) target = $region9
    $region8: #{_forward_pallas.1} parent=1 // pred_region
      _
    $region9: #{_forward_pallas.1} parent=1 // pred_fallthru
      _
    // Predicated region
    $region10: #{_forward_pallas.1} parent=1 // pred_check
      _
    $region11: #{_forward_pallas.1} parent=1 // pred_check_branch
      %28 = sbr.rel (0) target = $region13
    $region12: #{_forward_pallas.1} parent=1 // pred_region
      _
    $region13: #{_forward_pallas.1} parent=1 // pred_fallthru
      _
    // Predicated region
    $region14: #{_forward_pallas.1} parent=1 // pred_check
      _
    $region15: #{_forward_pallas.1} parent=1 // pred_check_branch
      %30 = sbr.rel (0) target = $region17
    $region16: #{_forward_pallas.1} parent=1 // pred_region
      _
    $region17: #{_forward_pallas.1} parent=1 // pred_fallthru
      _
    // Predicated region
    $region18: #{_forward_pallas.1} parent=1 // pred_check
      _
    $region19: #{_forward_pallas.1} parent=1 // pred_check_branch
      %32 = sbr.rel (0) target = $region21
    $region20: #{_forward_pallas.1} parent=1 // pred_region
      %s34 = ssub.s32 32, 32
      %35 = vsyncadd [#allocation3], %s34
      %s37 = sshll.u32 [#allocation2], 4
      %s38 = int_to_ptr.vmem [resolvable:$true] %s37
      %40 = dma.hbm_to_vmem [thread:$0]  %s4, 32, %s38, [#allocation3]
    $region21: #{_forward_pallas.1} parent=1 // pred_fallthru
      _
    // Predicated region
    $region22: #{_forward_pallas.1} parent=1 // pred_check
      _
    $region23: #{_forward_pallas.1} parent=1 // pred_check_branch
      %42 = sbr.rel (0) target = $region25
    $region24: #{_forward_pallas.1} parent=1 // pred_region
      %s44 = ssub.s32 32, 32
      %45 = vsyncadd [#allocation5], %s44
      %s47 = sshll.u32 [#allocation4], 4
      %s48 = int_to_ptr.vmem [resolvable:$true] %s47
      %50 = dma.hbm_to_vmem [thread:$0]  %s5, 32, %s48, [#allocation5]
    $region25: #{_forward_pallas.1} parent=1 // pred_fallthru
      _
    // Predicated region
    $region26: #{_forward_pallas.1} parent=1 // pred_check
      _
    $region27: #{_forward_pallas.1} parent=1 // pred_check_branch
      %52 = sbr.rel (0) target = $region29
    $region28: #{_forward_pallas.1} parent=1 // pred_region
      %s54 = ssub.s32 114688, 114688
      %55 = vsyncadd [#allocation5], %s54
      %s56 = sshll.u32 [#allocation6], 4
      %s57 = int_to_ptr.vmem [resolvable:$true] %s56
      %62 = dma.hbm_to_vmem [thread:$0]  %s6, 114688, %s57, [#allocation5], 1792, 1792, 112
    $region29: #{_forward_pallas.1} parent=1 // pred_fallthru
      _
    // Predicated region
    $region30: #{_forward_pallas.1} parent=1 // pred_check
      _
    $region31: #{_forward_pallas.1} parent=1 // pred_check_branch
      %64 = sbr.rel (0) target = $region33
    $region32: #{_forward_pallas.1} parent=1 // pred_region
      %s66 = ssub.s32 24576, 24576
      %67 = vsyncadd [#allocation8], %s66
      %s68 = sshll.u32 [#allocation7], 4
      %s69 = int_to_ptr.vmem [resolvable:$true] %s68
      %74 = dma.hbm_to_vmem [thread:$0]  %s7, 24576, %s69, [#allocation8], 768, 768, 48
    $region33: #{_forward_pallas.1} parent=1 // pred_fallthru
      _
    // Predicated region
    $region34: #{_forward_pallas.1} parent=1 // pred_check
      _
    $region35: #{_forward_pallas.1} parent=1 // pred_check_branch
      %76 = sbr.rel (0) target = $region37
    $region36: #{_forward_pallas.1} parent=1 // pred_region
      %s78 = ssub.s32 1024, 1024
      %79 = vsyncadd [#allocation8], %s78
      %s80 = sshll.u32 [#allocation9], 4
      %s81 = int_to_ptr.vmem [resolvable:$true] %s80
      %86 = dma.hbm_to_vmem [thread:$0]  %s8, 1024, %s81, [#allocation8], 256, 256, 16
    $region37: #{_forward_pallas.1} parent=1 // pred_fallthru
      _
    // Predicated region
    $region38: #{_forward_pallas.1} parent=1 // pred_check
      _
    $region39: #{_forward_pallas.1} parent=1 // pred_check_branch
      %88 = sbr.rel (0) target = $region41
    $region40: #{_forward_pallas.1} parent=1 // pred_region
      %s90 = ssub.s32 1024, 1024
      %91 = vsyncadd [#allocation11], %s90
      %s92 = sshll.u32 [#allocation10], 4
      %s93 = int_to_ptr.vmem [resolvable:$true] %s92
      %98 = dma.hbm_to_vmem [thread:$0]  %s9, 1024, %s93, [#allocation11], 256, 256, 16
    $region41: #{_forward_pallas.1} parent=1 // pred_fallthru
      _
    // Predicated region
    $region42: #{_forward_pallas.1} parent=1 // pred_check
      _
    $region43: #{_forward_pallas.1} parent=1 // pred_check_branch
      %100 = sbr.rel (0) target = $region45
    $region44: #{_forward_pallas.1} parent=1 // pred_region
      %s102 = ssub.s32 128, 128
      %103 = vsyncadd [#allocation11], %s102
      %s105 = sshll.u32 [#allocation12], 4
      %s106 = int_to_ptr.vmem [resolvable:$true] %s105
      %108 = dma.hbm_to_vmem [thread:$0]  %s10, 128, %s106, [#allocation11]
    $region45: #{_forward_pallas.1} parent=1 // pred_fallthru
      _
    // Predicated region
    $region46: #{_forward_pallas.1} parent=1 // pred_check
      _
    $region47: #{_forward_pallas.1} parent=1 // pred_check_branch
      %110 = sbr.rel (0) target = $region49
    $region48: #{_forward_pallas.1} parent=1 // pred_region
      %s112 = ssub.s32 128, 128
      %113 = vsyncadd [#allocation14], %s112
      %s115 = sshll.u32 [#allocation13], 4
      %s116 = int_to_ptr.vmem [resolvable:$true] %s115
      %118 = dma.hbm_to_vmem [thread:$0]  %s11, 128, %s116, [#allocation14]
    $region49: #{_forward_pallas.1} parent=1 // pred_fallthru
      _
    // Predicated region
    $region50: #{_forward_pallas.1} parent=1 // pred_check
      _
    $region51: #{_forward_pallas.1} parent=1 // pred_check_branch
      %120 = sbr.rel (0) target = $region53
    $region52: #{_forward_pallas.1} parent=1 // pred_region
      %s122 = ssub.s32 416, 416
      %123 = vsyncadd [#allocation14], %s122
      %s125 = sshll.u32 [#allocation15], 4
      %s126 = int_to_ptr.vmem [resolvable:$true] %s125
      %128 = dma.hbm_to_vmem [thread:$0]  %s12, 416, %s126, [#allocation14]
    $region53: #{_forward_pallas.1} parent=1 // pred_fallthru
      _
    // Predicated region
    $region54: #{_forward_pallas.1} parent=1 // pred_check
      _
    $region55: #{_forward_pallas.1} parent=1 // pred_check_branch
      %130 = sbr.rel (0) target = $region57
    $region56: #{_forward_pallas.1} parent=1 // pred_region
      %131 = dma.done [#allocation3], 32
    $region57: #{_forward_pallas.1} parent=1 // pred_fallthru
      _
    // Predicated region
    $region58: #{_forward_pallas.1} parent=1 // pred_check
      _
    $region59: #{_forward_pallas.1} parent=1 // pred_check_branch
      %133 = sbr.rel (0) target = $region61
    $region60: #{_forward_pallas.1} parent=1 // pred_region
      %134 = dma.done [#allocation5], 32
    $region61: #{_forward_pallas.1} parent=1 // pred_fallthru
      _
    // Predicated region
    $region62: #{_forward_pallas.1} parent=1 // pred_check
      _
    $region63: #{_forward_pallas.1} parent=1 // pred_check_branch
      %136 = sbr.rel (0) target = $region65
    $region64: #{_forward_pallas.1} parent=1 // pred_region
      %137 = dma.done [#allocation5], 114688
    $region65: #{_forward_pallas.1} parent=1 // pred_fallthru
      _
    // Predicated region
    $region66: #{_forward_pallas.1} parent=1 // pred_check
      _
    $region67: #{_forward_pallas.1} parent=1 // pred_check_branch
      %139 = sbr.rel (0) target = $region69
    $region68: #{_forward_pallas.1} parent=1 // pred_region
      %140 = dma.done [#allocation8], 24576
    $region69: #{_forward_pallas.1} parent=1 // pred_fallthru
      _
    // Predicated region
    $region70: #{_forward_pallas.1} parent=1 // pred_check
      _
    $region71: #{_forward_pallas.1} parent=1 // pred_check_branch
      %142 = sbr.rel (0) target = $region73
    $region72: #{_forward_pallas.1} parent=1 // pred_region
      %143 = dma.done [#allocation8], 1024
    $region73: #{_forward_pallas.1} parent=1 // pred_fallthru
      _
    // Predicated region
    $region74: #{_forward_pallas.1} parent=1 // pred_check
      _
    $region75: #{_forward_pallas.1} parent=1 // pred_check_branch
      %145 = sbr.rel (0) target = $region77
    $region76: #{_forward_pallas.1} parent=1 // pred_region
      %146 = dma.done [#allocation11], 1024
    $region77: #{_forward_pallas.1} parent=1 // pred_fallthru
      _
    // Predicated region
    $region78: #{_forward_pallas.1} parent=1 // pred_check
      _
    $region79: #{_forward_pallas.1} parent=1 // pred_check_branch
      %148 = sbr.rel (0) target = $region81
    $region80: #{_forward_pallas.1} parent=1 // pred_region
      %149 = dma.done [#allocation11], 128
    $region81: #{_forward_pallas.1} parent=1 // pred_fallthru
      _
    // Predicated region
    $region82: #{_forward_pallas.1} parent=1 // pred_check
      _
    $region83: #{_forward_pallas.1} parent=1 // pred_check_branch
      %151 = sbr.rel (0) target = $region85
    $region84: #{_forward_pallas.1} parent=1 // pred_region
      %152 = dma.done [#allocation14], 128
    $region85: #{_forward_pallas.1} parent=1 // pred_fallthru
      _
    // Predicated region
    $region86: #{_forward_pallas.1} parent=1 // pred_check
      _
    $region87: #{_forward_pallas.1} parent=1 // pred_check_branch
      %154 = sbr.rel (0) target = $region89
    $region88: #{_forward_pallas.1} parent=1 // pred_region
      %155 = dma.done [#allocation14], 416
    $region89: #{_forward_pallas.1} parent=1 // pred_fallthru
      _
    %v156 = vld [vmem:[%s0] sm:$0xff]
    %v157 = vld [vmem:[#allocation6] sm:$0xff]
    %v158 = vld [vmem:[#allocation6 + $0x8] sm:$0xff]
    %v159 = vld [vmem:[#allocation6 + $0x10] sm:$0xff]
    %v160 = vld [vmem:[#allocation6 + $0x18] sm:$0xff]
    %v161 = vld [vmem:[#allocation6 + $0x20] sm:$0xff]
    %v162 = vld [vmem:[#allocation6 + $0x28] sm:$0xff]
    %v163 = vld [vmem:[#allocation6 + $0x30] sm:$0xff]
    %v164 = vld [vmem:[#allocation6 + $0x38] sm:$0xff]
    %v165 = vld [vmem:[#allocation6 + $0x40] sm:$0xff]
    %v166 = vld [vmem:[#allocation6 + $0x48] sm:$0xff]
    %v167 = vld [vmem:[#allocation6 + $0x50] sm:$0xff]
    %v168 = vld [vmem:[#allocation6 + $0x58] sm:$0xff]
    %v169 = vld [vmem:[#allocation6 + $0x60] sm:$0xff]
    %v170 = vld [vmem:[#allocation6 + $0x68] sm:$0xff]
    %v171 = vld [vmem:[#allocation6 + $0x70] sm:$0xff]
    %v172 = vld [vmem:[#allocation6 + $0x78] sm:$0xff]
    %v173 = vld [vmem:[#allocation6 + $0x80] sm:$0xff]
    %v174 = vld [vmem:[#allocation6 + $0x88] sm:$0xff]
    %v175 = vld [vmem:[#allocation6 + $0x90] sm:$0xff]
    %v176 = vld [vmem:[#allocation6 + $0x98] sm:$0xff]
    %v177 = vld [vmem:[#allocation6 + $0xa0] sm:$0xff]
    %v178 = vld [vmem:[#allocation6 + $0xa8] sm:$0xff]
    %v179 = vld [vmem:[#allocation6 + $0xb0] sm:$0xff]
    %v180 = vld [vmem:[#allocation6 + $0xb8] sm:$0xff]
    %v181 = vld [vmem:[#allocation6 + $0xc0] sm:$0xff]
    %v182 = vld [vmem:[#allocation6 + $0xc8] sm:$0xff]
    %v183 = vld [vmem:[#allocation6 + $0xd0] sm:$0xff]
    %v184 = vld [vmem:[#allocation6 + $0xd8] sm:$0xff]
    %v185 = vld [vmem:[#allocation6 + $0xe0] sm:$0xff]
    %v186 = vld [vmem:[#allocation6 + $0xe8] sm:$0xff]
    %v187 = vld [vmem:[#allocation6 + $0xf0] sm:$0xff]
    %v188 = vld [vmem:[#allocation6 + $0xf8] sm:$0xff]
    %v189 = vld [vmem:[#allocation6 + $0x100] sm:$0xff]
    %v190 = vld [vmem:[#allocation6 + $0x108] sm:$0xff]
    %v191 = vld [vmem:[#allocation6 + $0x110] sm:$0xff]
    %v192 = vld [vmem:[#allocation6 + $0x118] sm:$0xff]
    %v193 = vld [vmem:[#allocation6 + $0x120] sm:$0xff]
    %v194 = vld [vmem:[#allocation6 + $0x128] sm:$0xff]
    %v195 = vld [vmem:[#allocation6 + $0x130] sm:$0xff]
    %v196 = vld [vmem:[#allocation6 + $0x138] sm:$0xff]
    %v197 = vld [vmem:[#allocation6 + $0x140] sm:$0xff]
    %v198 = vld [vmem:[#allocation6 + $0x148] sm:$0xff]
    %v199 = vld [vmem:[#allocation6 + $0x150] sm:$0xff]
    %v200 = vld [vmem:[#allocation6 + $0x158] sm:$0xff]
    %v201 = vld [vmem:[#allocation6 + $0x160] sm:$0xff]
    %v202 = vld [vmem:[#allocation6 + $0x168] sm:$0xff]
    %v203 = vld [vmem:[#allocation6 + $0x170] sm:$0xff]
    %v204 = vld [vmem:[#allocation6 + $0x178] sm:$0xff]
    %v205 = vld [vmem:[#allocation6 + $0x180] sm:$0xff]
    %v206 = vld [vmem:[#allocation6 + $0x188] sm:$0xff]
    %v207 = vld [vmem:[#allocation6 + $0x190] sm:$0xff]
    %v208 = vld [vmem:[#allocation6 + $0x198] sm:$0xff]
    %v209 = vld [vmem:[#allocation6 + $0x1a0] sm:$0xff]
    %v210 = vld [vmem:[#allocation6 + $0x1a8] sm:$0xff]
    %v211 = vld [vmem:[#allocation6 + $0x1b0] sm:$0xff]
    %v212 = vld [vmem:[#allocation6 + $0x1b8] sm:$0xff]
    %v213 = vld [vmem:[#allocation6 + $0x1c0] sm:$0xff]
    %v214 = vld [vmem:[#allocation6 + $0x1c8] sm:$0xff]
    %v215 = vld [vmem:[#allocation6 + $0x1d0] sm:$0xff]
    %v216 = vld [vmem:[#allocation6 + $0x1d8] sm:$0xff]
    %v217 = vld [vmem:[#allocation6 + $0x1e0] sm:$0xff]
    %v218 = vld [vmem:[#allocation6 + $0x1e8] sm:$0xff]
    %v219 = vld [vmem:[#allocation6 + $0x1f0] sm:$0xff]
    %v220 = vld [vmem:[#allocation6 + $0x1f8] sm:$0xff]
    %v221 = vld [vmem:[#allocation6 + $0x200] sm:$0xff]
    %v222 = vld [vmem:[#allocation6 + $0x208] sm:$0xff]
    %v223 = vld [vmem:[#allocation6 + $0x210] sm:$0xff]
    %v224 = vld [vmem:[#allocation6 + $0x218] sm:$0xff]
    %v225 = vld [vmem:[#allocation6 + $0x220] sm:$0xff]
    %v226 = vld [vmem:[#allocation6 + $0x228] sm:$0xff]
    %v227 = vld [vmem:[#allocation6 + $0x230] sm:$0xff]
    %v228 = vld [vmem:[#allocation6 + $0x238] sm:$0xff]
    %v229 = vld [vmem:[#allocation6 + $0x240] sm:$0xff]
    %v230 = vld [vmem:[#allocation6 + $0x248] sm:$0xff]
    %v231 = vld [vmem:[#allocation6 + $0x250] sm:$0xff]
    %v232 = vld [vmem:[#allocation6 + $0x258] sm:$0xff]
    %v233 = vld [vmem:[#allocation6 + $0x260] sm:$0xff]
    %v234 = vld [vmem:[#allocation6 + $0x268] sm:$0xff]
    %v235 = vld [vmem:[#allocation6 + $0x270] sm:$0xff]
    %v236 = vld [vmem:[#allocation6 + $0x278] sm:$0xff]
    %v237 = vld [vmem:[#allocation6 + $0x280] sm:$0xff]
    %v238 = vld [vmem:[#allocation6 + $0x288] sm:$0xff]
    %v239 = vld [vmem:[#allocation6 + $0x290] sm:$0xff]
    %v240 = vld [vmem:[#allocation6 + $0x298] sm:$0xff]
    %v241 = vld [vmem:[#allocation6 + $0x2a0] sm:$0xff]
    %v242 = vld [vmem:[#allocation6 + $0x2a8] sm:$0xff]
    %v243 = vld [vmem:[#allocation6 + $0x2b0] sm:$0xff]
    %v244 = vld [vmem:[#allocation6 + $0x2b8] sm:$0xff]
    %v245 = vld [vmem:[#allocation6 + $0x2c0] sm:$0xff]
    %v246 = vld [vmem:[#allocation6 + $0x2c8] sm:$0xff]
    %v247 = vld [vmem:[#allocation6 + $0x2d0] sm:$0xff]
    %v248 = vld [vmem:[#allocation6 + $0x2d8] sm:$0xff]
    %v249 = vld [vmem:[#allocation6 + $0x2e0] sm:$0xff]
    %v250 = vld [vmem:[#allocation6 + $0x2e8] sm:$0xff]
    %v251 = vld [vmem:[#allocation6 + $0x2f0] sm:$0xff]
    %v252 = vld [vmem:[#allocation6 + $0x2f8] sm:$0xff]
    %v253 = vld [vmem:[#allocation6 + $0x300] sm:$0xff]
    %v254 = vld [vmem:[#allocation6 + $0x308] sm:$0xff]
    %v255 = vld [vmem:[#allocation6 + $0x310] sm:$0xff]
    %v256 = vld [vmem:[#allocation6 + $0x318] sm:$0xff]
    %v257 = vld [vmem:[#allocation6 + $0x320] sm:$0xff]
    %v258 = vld [vmem:[#allocation6 + $0x328] sm:$0xff]
    %v259 = vld [vmem:[#allocation6 + $0x330] sm:$0xff]
    %v260 = vld [vmem:[#allocation6 + $0x338] sm:$0xff]
    %v261 = vld [vmem:[#allocation6 + $0x340] sm:$0xff]
    %v262 = vld [vmem:[#allocation6 + $0x348] sm:$0xff]
    %v263 = vld [vmem:[#allocation6 + $0x350] sm:$0xff]
    %v264 = vld [vmem:[#allocation6 + $0x358] sm:$0xff]
    %v265 = vld [vmem:[#allocation6 + $0x360] sm:$0xff]
    %v266 = vld [vmem:[#allocation6 + $0x368] sm:$0xff]
    %v267 = vld [vmem:[#allocation6 + $0x370] sm:$0xff]
    %v268 = vld [vmem:[#allocation6 + $0x378] sm:$0xff]
    %v269 = vld [vmem:[#allocation6 + $0x380] sm:$0xff]
    %v270 = vld [vmem:[#allocation6 + $0x388] sm:$0xff]
    %v271 = vld [vmem:[#allocation6 + $0x390] sm:$0xff]
    %v272 = vld [vmem:[#allocation6 + $0x398] sm:$0xff]
    %v273 = vld [vmem:[#allocation6 + $0x3a0] sm:$0xff]
    %v274 = vld [vmem:[#allocation6 + $0x3a8] sm:$0xff]
    %v275 = vld [vmem:[#allocation6 + $0x3b0] sm:$0xff]
    %v276 = vld [vmem:[#allocation6 + $0x3b8] sm:$0xff]
    %v277 = vld [vmem:[#allocation6 + $0x3c0] sm:$0xff]
    %v278 = vld [vmem:[#allocation6 + $0x3c8] sm:$0xff]
    %v279 = vld [vmem:[#allocation6 + $0x3d0] sm:$0xff]
    %v280 = vld [vmem:[#allocation6 + $0x3d8] sm:$0xff]
    %v281 = vld [vmem:[#allocation6 + $0x3e0] sm:$0xff]
    %v282 = vld [vmem:[#allocation6 + $0x3e8] sm:$0xff]
    %v283 = vld [vmem:[#allocation6 + $0x3f0] sm:$0xff]
    %v284 = vld [vmem:[#allocation6 + $0x3f8] sm:$0xff]
    %v285 = vld [vmem:[#allocation6 + $0x400] sm:$0xff]
    %v286 = vld [vmem:[#allocation6 + $0x408] sm:$0xff]
    %v287 = vld [vmem:[#allocation6 + $0x410] sm:$0xff]
    %v288 = vld [vmem:[#allocation6 + $0x418] sm:$0xff]
    %v289 = vld [vmem:[#allocation6 + $0x420] sm:$0xff]
    %v290 = vld [vmem:[#allocation6 + $0x428] sm:$0xff]
    %v291 = vld [vmem:[#allocation6 + $0x430] sm:$0xff]
    %v292 = vld [vmem:[#allocation6 + $0x438] sm:$0xff]
    %v293 = vld [vmem:[#allocation6 + $0x440] sm:$0xff]
    %v294 = vld [vmem:[#allocation6 + $0x448] sm:$0xff]
    %v295 = vld [vmem:[#allocation6 + $0x450] sm:$0xff]
    %v296 = vld [vmem:[#allocation6 + $0x458] sm:$0xff]
    %v297 = vld [vmem:[#allocation6 + $0x460] sm:$0xff]
    %v298 = vld [vmem:[#allocation6 + $0x468] sm:$0xff]
    %v299 = vld [vmem:[#allocation6 + $0x470] sm:$0xff]
    %v300 = vld [vmem:[#allocation6 + $0x478] sm:$0xff]
    %v301 = vld [vmem:[#allocation6 + $0x480] sm:$0xff]
    %v302 = vld [vmem:[#allocation6 + $0x488] sm:$0xff]
    %v303 = vld [vmem:[#allocation6 + $0x490] sm:$0xff]
    %v304 = vld [vmem:[#allocation6 + $0x498] sm:$0xff]
    %v305 = vld [vmem:[#allocation6 + $0x4a0] sm:$0xff]
    %v306 = vld [vmem:[#allocation6 + $0x4a8] sm:$0xff]
    %v307 = vld [vmem:[#allocation6 + $0x4b0] sm:$0xff]
    %v308 = vld [vmem:[#allocation6 + $0x4b8] sm:$0xff]
    %v309 = vld [vmem:[#allocation6 + $0x4c0] sm:$0xff]
    %v310 = vld [vmem:[#allocation6 + $0x4c8] sm:$0xff]
    %v311 = vld [vmem:[#allocation6 + $0x4d0] sm:$0xff]
    %v312 = vld [vmem:[#allocation6 + $0x4d8] sm:$0xff]
    %v313 = vld [vmem:[#allocation6 + $0x4e0] sm:$0xff]
    %v314 = vld [vmem:[#allocation6 + $0x4e8] sm:$0xff]
    %v315 = vld [vmem:[#allocation6 + $0x4f0] sm:$0xff]
    %v316 = vld [vmem:[#allocation6 + $0x4f8] sm:$0xff]
    %v317 = vld [vmem:[#allocation6 + $0x500] sm:$0xff]
    %v318 = vld [vmem:[#allocation6 + $0x508] sm:$0xff]
    %v319 = vld [vmem:[#allocation6 + $0x510] sm:$0xff]
    %v320 = vld [vmem:[#allocation6 + $0x518] sm:$0xff]
    %v321 = vld [vmem:[#allocation6 + $0x520] sm:$0xff]
    %v322 = vld [vmem:[#allocation6 + $0x528] sm:$0xff]
    %v323 = vld [vmem:[#allocation6 + $0x530] sm:$0xff]
    %v324 = vld [vmem:[#allocation6 + $0x538] sm:$0xff]
    %v325 = vld [vmem:[#allocation6 + $0x540] sm:$0xff]
    %v326 = vld [vmem:[#allocation6 + $0x548] sm:$0xff]
    %v327 = vld [vmem:[#allocation6 + $0x550] sm:$0xff]
    %v328 = vld [vmem:[#allocation6 + $0x558] sm:$0xff]
    %v329 = vld [vmem:[#allocation6 + $0x560] sm:$0xff]
    %v330 = vld [vmem:[#allocation6 + $0x568] sm:$0xff]
    %v331 = vld [vmem:[#allocation6 + $0x570] sm:$0xff]
    %v332 = vld [vmem:[#allocation6 + $0x578] sm:$0xff]
    %v333 = vld [vmem:[#allocation6 + $0x580] sm:$0xff]
    %v334 = vld [vmem:[#allocation6 + $0x588] sm:$0xff]
    %v335 = vld [vmem:[#allocation6 + $0x590] sm:$0xff]
    %v336 = vld [vmem:[#allocation6 + $0x598] sm:$0xff]
    %v337 = vld [vmem:[#allocation6 + $0x5a0] sm:$0xff]
    %v338 = vld [vmem:[#allocation6 + $0x5a8] sm:$0xff]
    %v339 = vld [vmem:[#allocation6 + $0x5b0] sm:$0xff]
    %v340 = vld [vmem:[#allocation6 + $0x5b8] sm:$0xff]
    %v341 = vld [vmem:[#allocation6 + $0x5c0] sm:$0xff]
    %v342 = vld [vmem:[#allocation6 + $0x5c8] sm:$0xff]
    %v343 = vld [vmem:[#allocation6 + $0x5d0] sm:$0xff]
    %v344 = vld [vmem:[#allocation6 + $0x5d8] sm:$0xff]
    %v345 = vld [vmem:[#allocation6 + $0x5e0] sm:$0xff]
    %v346 = vld [vmem:[#allocation6 + $0x5e8] sm:$0xff]
    %v347 = vld [vmem:[#allocation6 + $0x5f0] sm:$0xff]
    %v348 = vld [vmem:[#allocation6 + $0x5f8] sm:$0xff]
    %v349 = vld [vmem:[#allocation6 + $0x600] sm:$0xff]
    %v350 = vld [vmem:[#allocation6 + $0x608] sm:$0xff]
    %v351 = vld [vmem:[#allocation6 + $0x610] sm:$0xff]
    %v352 = vld [vmem:[#allocation6 + $0x618] sm:$0xff]
    %v353 = vld [vmem:[#allocation6 + $0x620] sm:$0xff]
    %v354 = vld [vmem:[#allocation6 + $0x628] sm:$0xff]
    %v355 = vld [vmem:[#allocation6 + $0x630] sm:$0xff]
    %v356 = vld [vmem:[#allocation6 + $0x638] sm:$0xff]
    %v357 = vld [vmem:[#allocation6 + $0x640] sm:$0xff]
    %v358 = vld [vmem:[#allocation6 + $0x648] sm:$0xff]
    %v359 = vld [vmem:[#allocation6 + $0x650] sm:$0xff]
    %v360 = vld [vmem:[#allocation6 + $0x658] sm:$0xff]
    %v361 = vld [vmem:[#allocation6 + $0x660] sm:$0xff]
    %v362 = vld [vmem:[#allocation6 + $0x668] sm:$0xff]
    %v363 = vld [vmem:[#allocation6 + $0x670] sm:$0xff]
    %v364 = vld [vmem:[#allocation6 + $0x678] sm:$0xff]
    %v365 = vld [vmem:[#allocation6 + $0x680] sm:$0xff]
    %v366 = vld [vmem:[#allocation6 + $0x688] sm:$0xff]
    %v367 = vld [vmem:[#allocation6 + $0x690] sm:$0xff]
    %v368 = vld [vmem:[#allocation6 + $0x698] sm:$0xff]
    %v369 = vld [vmem:[#allocation6 + $0x6a0] sm:$0xff]
    %v370 = vld [vmem:[#allocation6 + $0x6a8] sm:$0xff]
    %v371 = vld [vmem:[#allocation6 + $0x6b0] sm:$0xff]
    %v372 = vld [vmem:[#allocation6 + $0x6b8] sm:$0xff]
    %v373 = vld [vmem:[#allocation6 + $0x6c0] sm:$0xff]
    %v374 = vld [vmem:[#allocation6 + $0x6c8] sm:$0xff]
    %v375 = vld [vmem:[#allocation6 + $0x6d0] sm:$0xff]
    %v376 = vld [vmem:[#allocation6 + $0x6d8] sm:$0xff]
    %v377 = vld [vmem:[#allocation6 + $0x6e0] sm:$0xff]
    %v378 = vld [vmem:[#allocation6 + $0x6e8] sm:$0xff]
    %v379 = vld [vmem:[#allocation6 + $0x6f0] sm:$0xff]
    %v380 = vld [vmem:[#allocation6 + $0x6f8] sm:$0xff]
    %v381 = vld [vmem:[#allocation6 + $0x700] sm:$0xff]
    %v382 = vld [vmem:[#allocation6 + $0x708] sm:$0xff]
    %v383 = vld [vmem:[#allocation6 + $0x710] sm:$0xff]
    %v384 = vld [vmem:[#allocation6 + $0x718] sm:$0xff]
    %v385 = vld [vmem:[#allocation6 + $0x720] sm:$0xff]
    %v386 = vld [vmem:[#allocation6 + $0x728] sm:$0xff]
    %v387 = vld [vmem:[#allocation6 + $0x730] sm:$0xff]
    %v388 = vld [vmem:[#allocation6 + $0x738] sm:$0xff]
    %v389 = vld [vmem:[#allocation6 + $0x740] sm:$0xff]
    %v390 = vld [vmem:[#allocation6 + $0x748] sm:$0xff]
    %v391 = vld [vmem:[#allocation6 + $0x750] sm:$0xff]
    %v392 = vld [vmem:[#allocation6 + $0x758] sm:$0xff]
    %v393 = vld [vmem:[#allocation6 + $0x760] sm:$0xff]
    %v394 = vld [vmem:[#allocation6 + $0x768] sm:$0xff]
    %v395 = vld [vmem:[#allocation6 + $0x770] sm:$0xff]
    %v396 = vld [vmem:[#allocation6 + $0x778] sm:$0xff]
    %v397 = vld [vmem:[#allocation6 + $0x780] sm:$0xff]
    %v398 = vld [vmem:[#allocation6 + $0x788] sm:$0xff]
    %v399 = vld [vmem:[#allocation6 + $0x790] sm:$0xff]
    %v400 = vld [vmem:[#allocation6 + $0x798] sm:$0xff]
    %v401 = vld [vmem:[#allocation6 + $0x7a0] sm:$0xff]
    %v402 = vld [vmem:[#allocation6 + $0x7a8] sm:$0xff]
    %v403 = vld [vmem:[#allocation6 + $0x7b0] sm:$0xff]
    %v404 = vld [vmem:[#allocation6 + $0x7b8] sm:$0xff]
    %v405 = vld [vmem:[#allocation6 + $0x7c0] sm:$0xff]
    %v406 = vld [vmem:[#allocation6 + $0x7c8] sm:$0xff]
    %v407 = vld [vmem:[#allocation6 + $0x7d0] sm:$0xff]
    %v408 = vld [vmem:[#allocation6 + $0x7d8] sm:$0xff]
    %v409 = vld [vmem:[#allocation6 + $0x7e0] sm:$0xff]
    %v410 = vld [vmem:[#allocation6 + $0x7e8] sm:$0xff]
    %v411 = vld [vmem:[#allocation6 + $0x7f0] sm:$0xff]
    %v412 = vld [vmem:[#allocation6 + $0x7f8] sm:$0xff]
    %v413 = vld [vmem:[#allocation6 + $0x800] sm:$0xff]
    %v414 = vld [vmem:[#allocation6 + $0x808] sm:$0xff]
    %v415 = vld [vmem:[#allocation6 + $0x810] sm:$0xff]
    %v416 = vld [vmem:[#allocation6 + $0x818] sm:$0xff]
    %v417 = vld [vmem:[#allocation6 + $0x820] sm:$0xff]
    %v418 = vld [vmem:[#allocation6 + $0x828] sm:$0xff]
    %v419 = vld [vmem:[#allocation6 + $0x830] sm:$0xff]
    %v420 = vld [vmem:[#allocation6 + $0x838] sm:$0xff]
    %v421 = vld [vmem:[#allocation6 + $0x840] sm:$0xff]
    %v422 = vld [vmem:[#allocation6 + $0x848] sm:$0xff]
    %v423 = vld [vmem:[#allocation6 + $0x850] sm:$0xff]
    %v424 = vld [vmem:[#allocation6 + $0x858] sm:$0xff]
    %v425 = vld [vmem:[#allocation6 + $0x860] sm:$0xff]
    %v426 = vld [vmem:[#allocation6 + $0x868] sm:$0xff]
    %v427 = vld [vmem:[#allocation6 + $0x870] sm:$0xff]
    %v428 = vld [vmem:[#allocation6 + $0x878] sm:$0xff]
    %v429 = vld [vmem:[#allocation6 + $0x880] sm:$0xff]
    %v430 = vld [vmem:[#allocation6 + $0x888] sm:$0xff]
    %v431 = vld [vmem:[#allocation6 + $0x890] sm:$0xff]
    %v432 = vld [vmem:[#allocation6 + $0x898] sm:$0xff]
    %v433 = vld [vmem:[#allocation6 + $0x8a0] sm:$0xff]
    %v434 = vld [vmem:[#allocation6 + $0x8a8] sm:$0xff]
    %v435 = vld [vmem:[#allocation6 + $0x8b0] sm:$0xff]
    %v436 = vld [vmem:[#allocation6 + $0x8b8] sm:$0xff]
    %v437 = vld [vmem:[#allocation6 + $0x8c0] sm:$0xff]
    %v438 = vld [vmem:[#allocation6 + $0x8c8] sm:$0xff]
    %v439 = vld [vmem:[#allocation6 + $0x8d0] sm:$0xff]
    %v440 = vld [vmem:[#allocation6 + $0x8d8] sm:$0xff]
    %v441 = vld [vmem:[#allocation6 + $0x8e0] sm:$0xff]
    %v442 = vld [vmem:[#allocation6 + $0x8e8] sm:$0xff]
    %v443 = vld [vmem:[#allocation6 + $0x8f0] sm:$0xff]
    %v444 = vld [vmem:[#allocation6 + $0x8f8] sm:$0xff]
    %v445 = vld [vmem:[#allocation6 + $0x900] sm:$0xff]
    %v446 = vld [vmem:[#allocation6 + $0x908] sm:$0xff]
    %v447 = vld [vmem:[#allocation6 + $0x910] sm:$0xff]
    %v448 = vld [vmem:[#allocation6 + $0x918] sm:$0xff]
    %v449 = vld [vmem:[#allocation6 + $0x920] sm:$0xff]
    %v450 = vld [vmem:[#allocation6 + $0x928] sm:$0xff]
    %v451 = vld [vmem:[#allocation6 + $0x930] sm:$0xff]
    %v452 = vld [vmem:[#allocation6 + $0x938] sm:$0xff]
    %v453 = vld [vmem:[#allocation6 + $0x940] sm:$0xff]
    %v454 = vld [vmem:[#allocation6 + $0x948] sm:$0xff]
    %v455 = vld [vmem:[#allocation6 + $0x950] sm:$0xff]
    %v456 = vld [vmem:[#allocation6 + $0x958] sm:$0xff]
    %v457 = vld [vmem:[#allocation6 + $0x960] sm:$0xff]
    %v458 = vld [vmem:[#allocation6 + $0x968] sm:$0xff]
    %v459 = vld [vmem:[#allocation6 + $0x970] sm:$0xff]
    %v460 = vld [vmem:[#allocation6 + $0x978] sm:$0xff]
    %v461 = vld [vmem:[#allocation6 + $0x980] sm:$0xff]
    %v462 = vld [vmem:[#allocation6 + $0x988] sm:$0xff]
    %v463 = vld [vmem:[#allocation6 + $0x990] sm:$0xff]
    %v464 = vld [vmem:[#allocation6 + $0x998] sm:$0xff]
    %v465 = vld [vmem:[#allocation6 + $0x9a0] sm:$0xff]
    %v466 = vld [vmem:[#allocation6 + $0x9a8] sm:$0xff]
    %v467 = vld [vmem:[#allocation6 + $0x9b0] sm:$0xff]
    %v468 = vld [vmem:[#allocation6 + $0x9b8] sm:$0xff]
    %v469 = vld [vmem:[#allocation6 + $0x9c0] sm:$0xff]
    %v470 = vld [vmem:[#allocation6 + $0x9c8] sm:$0xff]
    %v471 = vld [vmem:[#allocation6 + $0x9d0] sm:$0xff]
    %v472 = vld [vmem:[#allocation6 + $0x9d8] sm:$0xff]
    %v473 = vld [vmem:[#allocation6 + $0x9e0] sm:$0xff]
    %v474 = vld [vmem:[#allocation6 + $0x9e8] sm:$0xff]
    %v475 = vld [vmem:[#allocation6 + $0x9f0] sm:$0xff]
    %v476 = vld [vmem:[#allocation6 + $0x9f8] sm:$0xff]
    %v477 = vld [vmem:[#allocation6 + $0xa00] sm:$0xff]
    %v478 = vld [vmem:[#allocation6 + $0xa08] sm:$0xff]
    %v479 = vld [vmem:[#allocation6 + $0xa10] sm:$0xff]
    %v480 = vld [vmem:[#allocation6 + $0xa18] sm:$0xff]
    %v481 = vld [vmem:[#allocation6 + $0xa20] sm:$0xff]
    %v482 = vld [vmem:[#allocation6 + $0xa28] sm:$0xff]
    %v483 = vld [vmem:[#allocation6 + $0xa30] sm:$0xff]
    %v484 = vld [vmem:[#allocation6 + $0xa38] sm:$0xff]
    %v485 = vld [vmem:[#allocation6 + $0xa40] sm:$0xff]
    %v486 = vld [vmem:[#allocation6 + $0xa48] sm:$0xff]
    %v487 = vld [vmem:[#allocation6 + $0xa50] sm:$0xff]
    %v488 = vld [vmem:[#allocation6 + $0xa58] sm:$0xff]
    %v489 = vld [vmem:[#allocation6 + $0xa60] sm:$0xff]
    %v490 = vld [vmem:[#allocation6 + $0xa68] sm:$0xff]
    %v491 = vld [vmem:[#allocation6 + $0xa70] sm:$0xff]
    %v492 = vld [vmem:[#allocation6 + $0xa78] sm:$0xff]
    %v493 = vld [vmem:[#allocation6 + $0xa80] sm:$0xff]
    %v494 = vld [vmem:[#allocation6 + $0xa88] sm:$0xff]
    %v495 = vld [vmem:[#allocation6 + $0xa90] sm:$0xff]
    %v496 = vld [vmem:[#allocation6 + $0xa98] sm:$0xff]
    %v497 = vld [vmem:[#allocation6 + $0xaa0] sm:$0xff]
    %v498 = vld [vmem:[#allocation6 + $0xaa8] sm:$0xff]
    %v499 = vld [vmem:[#allocation6 + $0xab0] sm:$0xff]
    %v500 = vld [vmem:[#allocation6 + $0xab8] sm:$0xff]
    %v501 = vld [vmem:[#allocation6 + $0xac0] sm:$0xff]
    %v502 = vld [vmem:[#allocation6 + $0xac8] sm:$0xff]
    %v503 = vld [vmem:[#allocation6 + $0xad0] sm:$0xff]
    %v504 = vld [vmem:[#allocation6 + $0xad8] sm:$0xff]
    %v505 = vld [vmem:[#allocation6 + $0xae0] sm:$0xff]
    %v506 = vld [vmem:[#allocation6 + $0xae8] sm:$0xff]
    %v507 = vld [vmem:[#allocation6 + $0xaf0] sm:$0xff]
    %v508 = vld [vmem:[#allocation6 + $0xaf8] sm:$0xff]
    %v509 = vld [vmem:[#allocation6 + $0xb00] sm:$0xff]
    %v510 = vld [vmem:[#allocation6 + $0xb08] sm:$0xff]
    %v511 = vld [vmem:[#allocation6 + $0xb10] sm:$0xff]
    %v512 = vld [vmem:[#allocation6 + $0xb18] sm:$0xff]
    %v513 = vld [vmem:[#allocation6 + $0xb20] sm:$0xff]
    %v514 = vld [vmem:[#allocation6 + $0xb28] sm:$0xff]
    %v515 = vld [vmem:[#allocation6 + $0xb30] sm:$0xff]
    %v516 = vld [vmem:[#allocation6 + $0xb38] sm:$0xff]
    %v517 = vld [vmem:[#allocation6 + $0xb40] sm:$0xff]
    %v518 = vld [vmem:[#allocation6 + $0xb48] sm:$0xff]
    %v519 = vld [vmem:[#allocation6 + $0xb50] sm:$0xff]
    %v520 = vld [vmem:[#allocation6 + $0xb58] sm:$0xff]
    %v521 = vld [vmem:[#allocation6 + $0xb60] sm:$0xff]
    %v522 = vld [vmem:[#allocation6 + $0xb68] sm:$0xff]
    %v523 = vld [vmem:[#allocation6 + $0xb70] sm:$0xff]
    %v524 = vld [vmem:[#allocation6 + $0xb78] sm:$0xff]
    %v525 = vld [vmem:[#allocation6 + $0xb80] sm:$0xff]
    %v526 = vld [vmem:[#allocation6 + $0xb88] sm:$0xff]
    %v527 = vld [vmem:[#allocation6 + $0xb90] sm:$0xff]
    %v528 = vld [vmem:[#allocation6 + $0xb98] sm:$0xff]
    %v529 = vld [vmem:[#allocation6 + $0xba0] sm:$0xff]
    %v530 = vld [vmem:[#allocation6 + $0xba8] sm:$0xff]
    %v531 = vld [vmem:[#allocation6 + $0xbb0] sm:$0xff]
    %v532 = vld [vmem:[#allocation6 + $0xbb8] sm:$0xff]
    %v533 = vld [vmem:[#allocation6 + $0xbc0] sm:$0xff]
    %v534 = vld [vmem:[#allocation6 + $0xbc8] sm:$0xff]
    %v535 = vld [vmem:[#allocation6 + $0xbd0] sm:$0xff]
    %v536 = vld [vmem:[#allocation6 + $0xbd8] sm:$0xff]
    %v537 = vld [vmem:[#allocation6 + $0xbe0] sm:$0xff]
    %v538 = vld [vmem:[#allocation6 + $0xbe8] sm:$0xff]
    %v539 = vld [vmem:[#allocation6 + $0xbf0] sm:$0xff]
    %v540 = vld [vmem:[#allocation6 + $0xbf8] sm:$0xff]
    %v541 = vld [vmem:[#allocation6 + $0xc00] sm:$0xff]
    %v542 = vld [vmem:[#allocation6 + $0xc08] sm:$0xff]
    %v543 = vld [vmem:[#allocation6 + $0xc10] sm:$0xff]
    %v544 = vld [vmem:[#allocation6 + $0xc18] sm:$0xff]
    %v545 = vld [vmem:[#allocation6 + $0xc20] sm:$0xff]
    %v546 = vld [vmem:[#allocation6 + $0xc28] sm:$0xff]
    %v547 = vld [vmem:[#allocation6 + $0xc30] sm:$0xff]
    %v548 = vld [vmem:[#allocation6 + $0xc38] sm:$0xff]
    %v549 = vld [vmem:[#allocation6 + $0xc40] sm:$0xff]
    %v550 = vld [vmem:[#allocation6 + $0xc48] sm:$0xff]
    %v551 = vld [vmem:[#allocation6 + $0xc50] sm:$0xff]
    %v552 = vld [vmem:[#allocation6 + $0xc58] sm:$0xff]
    %v553 = vld [vmem:[#allocation6 + $0xc60] sm:$0xff]
    %v554 = vld [vmem:[#allocation6 + $0xc68] sm:$0xff]
    %v555 = vld [vmem:[#allocation6 + $0xc70] sm:$0xff]
    %v556 = vld [vmem:[#allocation6 + $0xc78] sm:$0xff]
    %v557 = vld [vmem:[#allocation6 + $0xc80] sm:$0xff]
    %v558 = vld [vmem:[#allocation6 + $0xc88] sm:$0xff]
    %v559 = vld [vmem:[#allocation6 + $0xc90] sm:$0xff]
    %v560 = vld [vmem:[#allocation6 + $0xc98] sm:$0xff]
    %v561 = vld [vmem:[#allocation6 + $0xca0] sm:$0xff]
    %v562 = vld [vmem:[#allocation6 + $0xca8] sm:$0xff]
    %v563 = vld [vmem:[#allocation6 + $0xcb0] sm:$0xff]
    %v564 = vld [vmem:[#allocation6 + $0xcb8] sm:$0xff]
    %v565 = vld [vmem:[#allocation6 + $0xcc0] sm:$0xff]
    %v566 = vld [vmem:[#allocation6 + $0xcc8] sm:$0xff]
    %v567 = vld [vmem:[#allocation6 + $0xcd0] sm:$0xff]
    %v568 = vld [vmem:[#allocation6 + $0xcd8] sm:$0xff]
    %v569 = vld [vmem:[#allocation6 + $0xce0] sm:$0xff]
    %v570 = vld [vmem:[#allocation6 + $0xce8] sm:$0xff]
    %v571 = vld [vmem:[#allocation6 + $0xcf0] sm:$0xff]
    %v572 = vld [vmem:[#allocation6 + $0xcf8] sm:$0xff]
    %v573 = vld [vmem:[#allocation6 + $0xd00] sm:$0xff]
    %v574 = vld [vmem:[#allocation6 + $0xd08] sm:$0xff]
    %v575 = vld [vmem:[#allocation6 + $0xd10] sm:$0xff]
    %v576 = vld [vmem:[#allocation6 + $0xd18] sm:$0xff]
    %v577 = vld [vmem:[#allocation6 + $0xd20] sm:$0xff]
    %v578 = vld [vmem:[#allocation6 + $0xd28] sm:$0xff]
    %v579 = vld [vmem:[#allocation6 + $0xd30] sm:$0xff]
    %v580 = vld [vmem:[#allocation6 + $0xd38] sm:$0xff]
    %v581 = vld [vmem:[#allocation6 + $0xd40] sm:$0xff]
    %v582 = vld [vmem:[#allocation6 + $0xd48] sm:$0xff]
    %v583 = vld [vmem:[#allocation6 + $0xd50] sm:$0xff]
    %v584 = vld [vmem:[#allocation6 + $0xd58] sm:$0xff]
    %v585 = vld [vmem:[#allocation6 + $0xd60] sm:$0xff]
    %v586 = vld [vmem:[#allocation6 + $0xd68] sm:$0xff]
    %v587 = vld [vmem:[#allocation6 + $0xd70] sm:$0xff]
    %v588 = vld [vmem:[#allocation6 + $0xd78] sm:$0xff]
    %v589 = vld [vmem:[#allocation6 + $0xd80] sm:$0xff]
    %v590 = vld [vmem:[#allocation6 + $0xd88] sm:$0xff]
    %v591 = vld [vmem:[#allocation6 + $0xd90] sm:$0xff]
    %v592 = vld [vmem:[#allocation6 + $0xd98] sm:$0xff]
    %v593 = vld [vmem:[#allocation6 + $0xda0] sm:$0xff]
    %v594 = vld [vmem:[#allocation6 + $0xda8] sm:$0xff]
    %v595 = vld [vmem:[#allocation6 + $0xdb0] sm:$0xff]
    %v596 = vld [vmem:[#allocation6 + $0xdb8] sm:$0xff]
    %v597 = vld [vmem:[#allocation6 + $0xdc0] sm:$0xff]
    %v598 = vld [vmem:[#allocation6 + $0xdc8] sm:$0xff]
    %v599 = vld [vmem:[#allocation6 + $0xdd0] sm:$0xff]
    %v600 = vld [vmem:[#allocation6 + $0xdd8] sm:$0xff]
    %v601 = vld [vmem:[#allocation6 + $0xde0] sm:$0xff]
    %v602 = vld [vmem:[#allocation6 + $0xde8] sm:$0xff]
    %v603 = vld [vmem:[#allocation6 + $0xdf0] sm:$0xff]
    %v604 = vld [vmem:[#allocation6 + $0xdf8] sm:$0xff]
    %v605 = vld [vmem:[#allocation6 + $0xe00] sm:$0xff]
    %v606 = vld [vmem:[#allocation6 + $0xe08] sm:$0xff]
    %v607 = vld [vmem:[#allocation6 + $0xe10] sm:$0xff]
    %v608 = vld [vmem:[#allocation6 + $0xe18] sm:$0xff]
    %v609 = vld [vmem:[#allocation6 + $0xe20] sm:$0xff]
    %v610 = vld [vmem:[#allocation6 + $0xe28] sm:$0xff]
    %v611 = vld [vmem:[#allocation6 + $0xe30] sm:$0xff]
    %v612 = vld [vmem:[#allocation6 + $0xe38] sm:$0xff]
    %v613 = vld [vmem:[#allocation6 + $0xe40] sm:$0xff]
    %v614 = vld [vmem:[#allocation6 + $0xe48] sm:$0xff]
    %v615 = vld [vmem:[#allocation6 + $0xe50] sm:$0xff]
    %v616 = vld [vmem:[#allocation6 + $0xe58] sm:$0xff]
    %v617 = vld [vmem:[#allocation6 + $0xe60] sm:$0xff]
    %v618 = vld [vmem:[#allocation6 + $0xe68] sm:$0xff]
    %v619 = vld [vmem:[#allocation6 + $0xe70] sm:$0xff]
    %v620 = vld [vmem:[#allocation6 + $0xe78] sm:$0xff]
    %v621 = vld [vmem:[#allocation6 + $0xe80] sm:$0xff]
    %v622 = vld [vmem:[#allocation6 + $0xe88] sm:$0xff]
    %v623 = vld [vmem:[#allocation6 + $0xe90] sm:$0xff]
    %v624 = vld [vmem:[#allocation6 + $0xe98] sm:$0xff]
    %v625 = vld [vmem:[#allocation6 + $0xea0] sm:$0xff]
    %v626 = vld [vmem:[#allocation6 + $0xea8] sm:$0xff]
    %v627 = vld [vmem:[#allocation6 + $0xeb0] sm:$0xff]
    %v628 = vld [vmem:[#allocation6 + $0xeb8] sm:$0xff]
    %v629 = vld [vmem:[#allocation6 + $0xec0] sm:$0xff]
    %v630 = vld [vmem:[#allocation6 + $0xec8] sm:$0xff]
    %v631 = vld [vmem:[#allocation6 + $0xed0] sm:$0xff]
    %v632 = vld [vmem:[#allocation6 + $0xed8] sm:$0xff]
    %v633 = vld [vmem:[#allocation6 + $0xee0] sm:$0xff]
    %v634 = vld [vmem:[#allocation6 + $0xee8] sm:$0xff]
    %v635 = vld [vmem:[#allocation6 + $0xef0] sm:$0xff]
    %v636 = vld [vmem:[#allocation6 + $0xef8] sm:$0xff]
    %v637 = vld [vmem:[#allocation6 + $0xf00] sm:$0xff]
    %v638 = vld [vmem:[#allocation6 + $0xf08] sm:$0xff]
    %v639 = vld [vmem:[#allocation6 + $0xf10] sm:$0xff]
    %v640 = vld [vmem:[#allocation6 + $0xf18] sm:$0xff]
    %v641 = vld [vmem:[#allocation6 + $0xf20] sm:$0xff]
    %v642 = vld [vmem:[#allocation6 + $0xf28] sm:$0xff]
    %v643 = vld [vmem:[#allocation6 + $0xf30] sm:$0xff]
    %v644 = vld [vmem:[#allocation6 + $0xf38] sm:$0xff]
    %v645 = vld [vmem:[#allocation6 + $0xf40] sm:$0xff]
    %v646 = vld [vmem:[#allocation6 + $0xf48] sm:$0xff]
    %v647 = vld [vmem:[#allocation6 + $0xf50] sm:$0xff]
    %v648 = vld [vmem:[#allocation6 + $0xf58] sm:$0xff]
    %v649 = vld [vmem:[#allocation6 + $0xf60] sm:$0xff]
    %v650 = vld [vmem:[#allocation6 + $0xf68] sm:$0xff]
    %v651 = vld [vmem:[#allocation6 + $0xf70] sm:$0xff]
    %v652 = vld [vmem:[#allocation6 + $0xf78] sm:$0xff]
    %v653 = vld [vmem:[#allocation6 + $0xf80] sm:$0xff]
    %v654 = vld [vmem:[#allocation6 + $0xf88] sm:$0xff]
    %v655 = vld [vmem:[#allocation6 + $0xf90] sm:$0xff]
    %v656 = vld [vmem:[#allocation6 + $0xf98] sm:$0xff]
    %v657 = vld [vmem:[#allocation6 + $0xfa0] sm:$0xff]
    %v658 = vld [vmem:[#allocation6 + $0xfa8] sm:$0xff]
    %v659 = vld [vmem:[#allocation6 + $0xfb0] sm:$0xff]
    %v660 = vld [vmem:[#allocation6 + $0xfb8] sm:$0xff]
    %v661 = vld [vmem:[#allocation6 + $0xfc0] sm:$0xff]
    %v662 = vld [vmem:[#allocation6 + $0xfc8] sm:$0xff]
    %v663 = vld [vmem:[#allocation6 + $0xfd0] sm:$0xff]
    %v664 = vld [vmem:[#allocation6 + $0xfd8] sm:$0xff]
    %v665 = vld [vmem:[#allocation6 + $0xfe0] sm:$0xff]
    %v666 = vld [vmem:[#allocation6 + $0xfe8] sm:$0xff]
    %v667 = vld [vmem:[#allocation6 + $0xff0] sm:$0xff]
    %v668 = vld [vmem:[#allocation6 + $0xff8] sm:$0xff]
    %v669 = vld [vmem:[#allocation6 + $0x1000] sm:$0xff]
    %v670 = vld [vmem:[#allocation6 + $0x1008] sm:$0xff]
    %v671 = vld [vmem:[#allocation6 + $0x1010] sm:$0xff]
    %v672 = vld [vmem:[#allocation6 + $0x1018] sm:$0xff]
    %v673 = vld [vmem:[#allocation6 + $0x1020] sm:$0xff]
    %v674 = vld [vmem:[#allocation6 + $0x1028] sm:$0xff]
    %v675 = vld [vmem:[#allocation6 + $0x1030] sm:$0xff]
    %v676 = vld [vmem:[#allocation6 + $0x1038] sm:$0xff]
    %v677 = vld [vmem:[#allocation6 + $0x1040] sm:$0xff]
    %v678 = vld [vmem:[#allocation6 + $0x1048] sm:$0xff]
    %v679 = vld [vmem:[#allocation6 + $0x1050] sm:$0xff]
    %v680 = vld [vmem:[#allocation6 + $0x1058] sm:$0xff]
    %v681 = vld [vmem:[#allocation6 + $0x1060] sm:$0xff]
    %v682 = vld [vmem:[#allocation6 + $0x1068] sm:$0xff]
    %v683 = vld [vmem:[#allocation6 + $0x1070] sm:$0xff]
    %v684 = vld [vmem:[#allocation6 + $0x1078] sm:$0xff]
    %v685 = vld [vmem:[#allocation6 + $0x1080] sm:$0xff]
    %v686 = vld [vmem:[#allocation6 + $0x1088] sm:$0xff]
    %v687 = vld [vmem:[#allocation6 + $0x1090] sm:$0xff]
    %v688 = vld [vmem:[#allocation6 + $0x1098] sm:$0xff]
    %v689 = vld [vmem:[#allocation6 + $0x10a0] sm:$0xff]
    %v690 = vld [vmem:[#allocation6 + $0x10a8] sm:$0xff]
    %v691 = vld [vmem:[#allocation6 + $0x10b0] sm:$0xff]
    %v692 = vld [vmem:[#allocation6 + $0x10b8] sm:$0xff]
    %v693 = vld [vmem:[#allocation6 + $0x10c0] sm:$0xff]
    %v694 = vld [vmem:[#allocation6 + $0x10c8] sm:$0xff]
    %v695 = vld [vmem:[#allocation6 + $0x10d0] sm:$0xff]
    %v696 = vld [vmem:[#allocation6 + $0x10d8] sm:$0xff]
    %v697 = vld [vmem:[#allocation6 + $0x10e0] sm:$0xff]
    %v698 = vld [vmem:[#allocation6 + $0x10e8] sm:$0xff]
    %v699 = vld [vmem:[#allocation6 + $0x10f0] sm:$0xff]
    %v700 = vld [vmem:[#allocation6 + $0x10f8] sm:$0xff]
    %v701 = vld [vmem:[#allocation6 + $0x1100] sm:$0xff]
    %v702 = vld [vmem:[#allocation6 + $0x1108] sm:$0xff]
    %v703 = vld [vmem:[#allocation6 + $0x1110] sm:$0xff]
    %v704 = vld [vmem:[#allocation6 + $0x1118] sm:$0xff]
    %v705 = vld [vmem:[#allocation6 + $0x1120] sm:$0xff]
    %v706 = vld [vmem:[#allocation6 + $0x1128] sm:$0xff]
    %v707 = vld [vmem:[#allocation6 + $0x1130] sm:$0xff]
    %v708 = vld [vmem:[#allocation6 + $0x1138] sm:$0xff]
    %v709 = vld [vmem:[#allocation6 + $0x1140] sm:$0xff]
    %v710 = vld [vmem:[#allocation6 + $0x1148] sm:$0xff]
    %v711 = vld [vmem:[#allocation6 + $0x1150] sm:$0xff]
    %v712 = vld [vmem:[#allocation6 + $0x1158] sm:$0xff]
    %v713 = vld [vmem:[#allocation6 + $0x1160] sm:$0xff]
    %v714 = vld [vmem:[#allocation6 + $0x1168] sm:$0xff]
    %v715 = vld [vmem:[#allocation6 + $0x1170] sm:$0xff]
    %v716 = vld [vmem:[#allocation6 + $0x1178] sm:$0xff]
    %v717 = vld [vmem:[#allocation6 + $0x1180] sm:$0xff]
    %v718 = vld [vmem:[#allocation6 + $0x1188] sm:$0xff]
    %v719 = vld [vmem:[#allocation6 + $0x1190] sm:$0xff]
    %v720 = vld [vmem:[#allocation6 + $0x1198] sm:$0xff]
    %v721 = vld [vmem:[#allocation6 + $0x11a0] sm:$0xff]
    %v722 = vld [vmem:[#allocation6 + $0x11a8] sm:$0xff]
    %v723 = vld [vmem:[#allocation6 + $0x11b0] sm:$0xff]
    %v724 = vld [vmem:[#allocation6 + $0x11b8] sm:$0xff]
    %v725 = vld [vmem:[#allocation6 + $0x11c0] sm:$0xff]
    %v726 = vld [vmem:[#allocation6 + $0x11c8] sm:$0xff]
    %v727 = vld [vmem:[#allocation6 + $0x11d0] sm:$0xff]
    %v728 = vld [vmem:[#allocation6 + $0x11d8] sm:$0xff]
    %v729 = vld [vmem:[#allocation6 + $0x11e0] sm:$0xff]
    %v730 = vld [vmem:[#allocation6 + $0x11e8] sm:$0xff]
    %v731 = vld [vmem:[#allocation6 + $0x11f0] sm:$0xff]
    %v732 = vld [vmem:[#allocation6 + $0x11f8] sm:$0xff]
    %v733 = vld [vmem:[#allocation6 + $0x1200] sm:$0xff]
    %v734 = vld [vmem:[#allocation6 + $0x1208] sm:$0xff]
    %v735 = vld [vmem:[#allocation6 + $0x1210] sm:$0xff]
    %v736 = vld [vmem:[#allocation6 + $0x1218] sm:$0xff]
    %v737 = vld [vmem:[#allocation6 + $0x1220] sm:$0xff]
    %v738 = vld [vmem:[#allocation6 + $0x1228] sm:$0xff]
    %v739 = vld [vmem:[#allocation6 + $0x1230] sm:$0xff]
    %v740 = vld [vmem:[#allocation6 + $0x1238] sm:$0xff]
    %v741 = vld [vmem:[#allocation6 + $0x1240] sm:$0xff]
    %v742 = vld [vmem:[#allocation6 + $0x1248] sm:$0xff]
    %v743 = vld [vmem:[#allocation6 + $0x1250] sm:$0xff]
    %v744 = vld [vmem:[#allocation6 + $0x1258] sm:$0xff]
    %v745 = vld [vmem:[#allocation6 + $0x1260] sm:$0xff]
    %v746 = vld [vmem:[#allocation6 + $0x1268] sm:$0xff]
    %v747 = vld [vmem:[#allocation6 + $0x1270] sm:$0xff]
    %v748 = vld [vmem:[#allocation6 + $0x1278] sm:$0xff]
    %v749 = vld [vmem:[#allocation6 + $0x1280] sm:$0xff]
    %v750 = vld [vmem:[#allocation6 + $0x1288] sm:$0xff]
    %v751 = vld [vmem:[#allocation6 + $0x1290] sm:$0xff]
    %v752 = vld [vmem:[#allocation6 + $0x1298] sm:$0xff]
    %v753 = vld [vmem:[#allocation6 + $0x12a0] sm:$0xff]
    %v754 = vld [vmem:[#allocation6 + $0x12a8] sm:$0xff]
    %v755 = vld [vmem:[#allocation6 + $0x12b0] sm:$0xff]
    %v756 = vld [vmem:[#allocation6 + $0x12b8] sm:$0xff]
    %v757 = vld [vmem:[#allocation6 + $0x12c0] sm:$0xff]
    %v758 = vld [vmem:[#allocation6 + $0x12c8] sm:$0xff]
    %v759 = vld [vmem:[#allocation6 + $0x12d0] sm:$0xff]
    %v760 = vld [vmem:[#allocation6 + $0x12d8] sm:$0xff]
    %v761 = vld [vmem:[#allocation6 + $0x12e0] sm:$0xff]
    %v762 = vld [vmem:[#allocation6 + $0x12e8] sm:$0xff]
    %v763 = vld [vmem:[#allocation6 + $0x12f0] sm:$0xff]
    %v764 = vld [vmem:[#allocation6 + $0x12f8] sm:$0xff]
    %v765 = vld [vmem:[#allocation6 + $0x1300] sm:$0xff]
    %v766 = vld [vmem:[#allocation6 + $0x1308] sm:$0xff]
    %v767 = vld [vmem:[#allocation6 + $0x1310] sm:$0xff]
    %v768 = vld [vmem:[#allocation6 + $0x1318] sm:$0xff]
    %v769 = vld [vmem:[#allocation6 + $0x1320] sm:$0xff]
    %v770 = vld [vmem:[#allocation6 + $0x1328] sm:$0xff]
    %v771 = vld [vmem:[#allocation6 + $0x1330] sm:$0xff]
    %v772 = vld [vmem:[#allocation6 + $0x1338] sm:$0xff]
    %v773 = vld [vmem:[#allocation6 + $0x1340] sm:$0xff]
    %v774 = vld [vmem:[#allocation6 + $0x1348] sm:$0xff]
    %v775 = vld [vmem:[#allocation6 + $0x1350] sm:$0xff]
    %v776 = vld [vmem:[#allocation6 + $0x1358] sm:$0xff]
    %v777 = vld [vmem:[#allocation6 + $0x1360] sm:$0xff]
    %v778 = vld [vmem:[#allocation6 + $0x1368] sm:$0xff]
    %v779 = vld [vmem:[#allocation6 + $0x1370] sm:$0xff]
    %v780 = vld [vmem:[#allocation6 + $0x1378] sm:$0xff]
    %v781 = vld [vmem:[#allocation6 + $0x1380] sm:$0xff]
    %v782 = vld [vmem:[#allocation6 + $0x1388] sm:$0xff]
    %v783 = vld [vmem:[#allocation6 + $0x1390] sm:$0xff]
    %v784 = vld [vmem:[#allocation6 + $0x1398] sm:$0xff]
    %v785 = vld [vmem:[#allocation6 + $0x13a0] sm:$0xff]
    %v786 = vld [vmem:[#allocation6 + $0x13a8] sm:$0xff]
    %v787 = vld [vmem:[#allocation6 + $0x13b0] sm:$0xff]
    %v788 = vld [vmem:[#allocation6 + $0x13b8] sm:$0xff]
    %v789 = vld [vmem:[#allocation6 + $0x13c0] sm:$0xff]
    %v790 = vld [vmem:[#allocation6 + $0x13c8] sm:$0xff]
    %v791 = vld [vmem:[#allocation6 + $0x13d0] sm:$0xff]
    %v792 = vld [vmem:[#allocation6 + $0x13d8] sm:$0xff]
    %v793 = vld [vmem:[#allocation6 + $0x13e0] sm:$0xff]
    %v794 = vld [vmem:[#allocation6 + $0x13e8] sm:$0xff]
    %v795 = vld [vmem:[#allocation6 + $0x13f0] sm:$0xff]
    %v796 = vld [vmem:[#allocation6 + $0x13f8] sm:$0xff]
    %v797 = vld [vmem:[#allocation6 + $0x1400] sm:$0xff]
    %v798 = vld [vmem:[#allocation6 + $0x1408] sm:$0xff]
    %v799 = vld [vmem:[#allocation6 + $0x1410] sm:$0xff]
    %v800 = vld [vmem:[#allocation6 + $0x1418] sm:$0xff]
    %v801 = vld [vmem:[#allocation6 + $0x1420] sm:$0xff]
    %v802 = vld [vmem:[#allocation6 + $0x1428] sm:$0xff]
    %v803 = vld [vmem:[#allocation6 + $0x1430] sm:$0xff]
    %v804 = vld [vmem:[#allocation6 + $0x1438] sm:$0xff]
    %v805 = vld [vmem:[#allocation6 + $0x1440] sm:$0xff]
    %v806 = vld [vmem:[#allocation6 + $0x1448] sm:$0xff]
    %v807 = vld [vmem:[#allocation6 + $0x1450] sm:$0xff]
    %v808 = vld [vmem:[#allocation6 + $0x1458] sm:$0xff]
    %v809 = vld [vmem:[#allocation6 + $0x1460] sm:$0xff]
    %v810 = vld [vmem:[#allocation6 + $0x1468] sm:$0xff]
    %v811 = vld [vmem:[#allocation6 + $0x1470] sm:$0xff]
    %v812 = vld [vmem:[#allocation6 + $0x1478] sm:$0xff]
    %v813 = vld [vmem:[#allocation6 + $0x1480] sm:$0xff]
    %v814 = vld [vmem:[#allocation6 + $0x1488] sm:$0xff]
    %v815 = vld [vmem:[#allocation6 + $0x1490] sm:$0xff]
    %v816 = vld [vmem:[#allocation6 + $0x1498] sm:$0xff]
    %v817 = vld [vmem:[#allocation6 + $0x14a0] sm:$0xff]
    %v818 = vld [vmem:[#allocation6 + $0x14a8] sm:$0xff]
    %v819 = vld [vmem:[#allocation6 + $0x14b0] sm:$0xff]
    %v820 = vld [vmem:[#allocation6 + $0x14b8] sm:$0xff]
    %v821 = vld [vmem:[#allocation6 + $0x14c0] sm:$0xff]
    %v822 = vld [vmem:[#allocation6 + $0x14c8] sm:$0xff]
    %v823 = vld [vmem:[#allocation6 + $0x14d0] sm:$0xff]
    %v824 = vld [vmem:[#allocation6 + $0x14d8] sm:$0xff]
    %v825 = vld [vmem:[#allocation6 + $0x14e0] sm:$0xff]
    %v826 = vld [vmem:[#allocation6 + $0x14e8] sm:$0xff]
    %v827 = vld [vmem:[#allocation6 + $0x14f0] sm:$0xff]
    %v828 = vld [vmem:[#allocation6 + $0x14f8] sm:$0xff]
    %v829 = vld [vmem:[#allocation6 + $0x1500] sm:$0xff]
    %v830 = vld [vmem:[#allocation6 + $0x1508] sm:$0xff]
    %v831 = vld [vmem:[#allocation6 + $0x1510] sm:$0xff]
    %v832 = vld [vmem:[#allocation6 + $0x1518] sm:$0xff]
    %v833 = vld [vmem:[#allocation6 + $0x1520] sm:$0xff]
    %v834 = vld [vmem:[#allocation6 + $0x1528] sm:$0xff]
    %v835 = vld [vmem:[#allocation6 + $0x1530] sm:$0xff]
    %v836 = vld [vmem:[#allocation6 + $0x1538] sm:$0xff]
    %v837 = vld [vmem:[#allocation6 + $0x1540] sm:$0xff]
    %v838 = vld [vmem:[#allocation6 + $0x1548] sm:$0xff]
    %v839 = vld [vmem:[#allocation6 + $0x1550] sm:$0xff]
    %v840 = vld [vmem:[#allocation6 + $0x1558] sm:$0xff]
    %v841 = vld [vmem:[#allocation6 + $0x1560] sm:$0xff]
    %v842 = vld [vmem:[#allocation6 + $0x1568] sm:$0xff]
    %v843 = vld [vmem:[#allocation6 + $0x1570] sm:$0xff]
    %v844 = vld [vmem:[#allocation6 + $0x1578] sm:$0xff]
    %v845 = vld [vmem:[#allocation6 + $0x1580] sm:$0xff]
    %v846 = vld [vmem:[#allocation6 + $0x1588] sm:$0xff]
    %v847 = vld [vmem:[#allocation6 + $0x1590] sm:$0xff]
    %v848 = vld [vmem:[#allocation6 + $0x1598] sm:$0xff]
    %v849 = vld [vmem:[#allocation6 + $0x15a0] sm:$0xff]
    %v850 = vld [vmem:[#allocation6 + $0x15a8] sm:$0xff]
    %v851 = vld [vmem:[#allocation6 + $0x15b0] sm:$0xff]
    %v852 = vld [vmem:[#allocation6 + $0x15b8] sm:$0xff]
    %v853 = vld [vmem:[#allocation6 + $0x15c0] sm:$0xff]
    %v854 = vld [vmem:[#allocation6 + $0x15c8] sm:$0xff]
    %v855 = vld [vmem:[#allocation6 + $0x15d0] sm:$0xff]
    %v856 = vld [vmem:[#allocation6 + $0x15d8] sm:$0xff]
    %v857 = vld [vmem:[#allocation6 + $0x15e0] sm:$0xff]
    %v858 = vld [vmem:[#allocation6 + $0x15e8] sm:$0xff]
    %v859 = vld [vmem:[#allocation6 + $0x15f0] sm:$0xff]
    %v860 = vld [vmem:[#allocation6 + $0x15f8] sm:$0xff]
    %v861 = vld [vmem:[#allocation6 + $0x1600] sm:$0xff]
    %v862 = vld [vmem:[#allocation6 + $0x1608] sm:$0xff]
    %v863 = vld [vmem:[#allocation6 + $0x1610] sm:$0xff]
    %v864 = vld [vmem:[#allocation6 + $0x1618] sm:$0xff]
    %v865 = vld [vmem:[#allocation6 + $0x1620] sm:$0xff]
    %v866 = vld [vmem:[#allocation6 + $0x1628] sm:$0xff]
    %v867 = vld [vmem:[#allocation6 + $0x1630] sm:$0xff]
    %v868 = vld [vmem:[#allocation6 + $0x1638] sm:$0xff]
    %v869 = vld [vmem:[#allocation6 + $0x1640] sm:$0xff]
    %v870 = vld [vmem:[#allocation6 + $0x1648] sm:$0xff]
    %v871 = vld [vmem:[#allocation6 + $0x1650] sm:$0xff]
    %v872 = vld [vmem:[#allocation6 + $0x1658] sm:$0xff]
    %v873 = vld [vmem:[#allocation6 + $0x1660] sm:$0xff]
    %v874 = vld [vmem:[#allocation6 + $0x1668] sm:$0xff]
    %v875 = vld [vmem:[#allocation6 + $0x1670] sm:$0xff]
    %v876 = vld [vmem:[#allocation6 + $0x1678] sm:$0xff]
    %v877 = vld [vmem:[#allocation6 + $0x1680] sm:$0xff]
    %v878 = vld [vmem:[#allocation6 + $0x1688] sm:$0xff]
    %v879 = vld [vmem:[#allocation6 + $0x1690] sm:$0xff]
    %v880 = vld [vmem:[#allocation6 + $0x1698] sm:$0xff]
    %v881 = vld [vmem:[#allocation6 + $0x16a0] sm:$0xff]
    %v882 = vld [vmem:[#allocation6 + $0x16a8] sm:$0xff]
    %v883 = vld [vmem:[#allocation6 + $0x16b0] sm:$0xff]
    %v884 = vld [vmem:[#allocation6 + $0x16b8] sm:$0xff]
    %v885 = vld [vmem:[#allocation6 + $0x16c0] sm:$0xff]
    %v886 = vld [vmem:[#allocation6 + $0x16c8] sm:$0xff]
    %v887 = vld [vmem:[#allocation6 + $0x16d0] sm:$0xff]
    %v888 = vld [vmem:[#allocation6 + $0x16d8] sm:$0xff]
    %v889 = vld [vmem:[#allocation6 + $0x16e0] sm:$0xff]
    %v890 = vld [vmem:[#allocation6 + $0x16e8] sm:$0xff]
    %v891 = vld [vmem:[#allocation6 + $0x16f0] sm:$0xff]
    %v892 = vld [vmem:[#allocation6 + $0x16f8] sm:$0xff]
    %v893 = vld [vmem:[#allocation6 + $0x1700] sm:$0xff]
    %v894 = vld [vmem:[#allocation6 + $0x1708] sm:$0xff]
    %v895 = vld [vmem:[#allocation6 + $0x1710] sm:$0xff]
    %v896 = vld [vmem:[#allocation6 + $0x1718] sm:$0xff]
    %v897 = vld [vmem:[#allocation6 + $0x1720] sm:$0xff]
    %v898 = vld [vmem:[#allocation6 + $0x1728] sm:$0xff]
    %v899 = vld [vmem:[#allocation6 + $0x1730] sm:$0xff]
    %v900 = vld [vmem:[#allocation6 + $0x1738] sm:$0xff]
    %v901 = vld [vmem:[#allocation6 + $0x1740] sm:$0xff]
    %v902 = vld [vmem:[#allocation6 + $0x1748] sm:$0xff]
    %v903 = vld [vmem:[#allocation6 + $0x1750] sm:$0xff]
    %v904 = vld [vmem:[#allocation6 + $0x1758] sm:$0xff]
    %v905 = vld [vmem:[#allocation6 + $0x1760] sm:$0xff]
    %v906 = vld [vmem:[#allocation6 + $0x1768] sm:$0xff]
    %v907 = vld [vmem:[#allocation6 + $0x1770] sm:$0xff]
    %v908 = vld [vmem:[#allocation6 + $0x1778] sm:$0xff]
    %v909 = vld [vmem:[#allocation6 + $0x1780] sm:$0xff]
    %v910 = vld [vmem:[#allocation6 + $0x1788] sm:$0xff]
    %v911 = vld [vmem:[#allocation6 + $0x1790] sm:$0xff]
    %v912 = vld [vmem:[#allocation6 + $0x1798] sm:$0xff]
    %v913 = vld [vmem:[#allocation6 + $0x17a0] sm:$0xff]
    %v914 = vld [vmem:[#allocation6 + $0x17a8] sm:$0xff]
    %v915 = vld [vmem:[#allocation6 + $0x17b0] sm:$0xff]
    %v916 = vld [vmem:[#allocation6 + $0x17b8] sm:$0xff]
    %v917 = vld [vmem:[#allocation6 + $0x17c0] sm:$0xff]
    %v918 = vld [vmem:[#allocation6 + $0x17c8] sm:$0xff]
    %v919 = vld [vmem:[#allocation6 + $0x17d0] sm:$0xff]
    %v920 = vld [vmem:[#allocation6 + $0x17d8] sm:$0xff]
    %v921 = vld [vmem:[#allocation6 + $0x17e0] sm:$0xff]
    %v922 = vld [vmem:[#allocation6 + $0x17e8] sm:$0xff]
    %v923 = vld [vmem:[#allocation6 + $0x17f0] sm:$0xff]
    %v924 = vld [vmem:[#allocation6 + $0x17f8] sm:$0xff]
    %v925 = vld [vmem:[#allocation6 + $0x1800] sm:$0xff]
    %v926 = vld [vmem:[#allocation6 + $0x1808] sm:$0xff]
    %v927 = vld [vmem:[#allocation6 + $0x1810] sm:$0xff]
    %v928 = vld [vmem:[#allocation6 + $0x1818] sm:$0xff]
    %v929 = vld [vmem:[#allocation6 + $0x1820] sm:$0xff]
    %v930 = vld [vmem:[#allocation6 + $0x1828] sm:$0xff]
    %v931 = vld [vmem:[#allocation6 + $0x1830] sm:$0xff]
    %v932 = vld [vmem:[#allocation6 + $0x1838] sm:$0xff]
    %v933 = vld [vmem:[#allocation6 + $0x1840] sm:$0xff]
    %v934 = vld [vmem:[#allocation6 + $0x1848] sm:$0xff]
    %v935 = vld [vmem:[#allocation6 + $0x1850] sm:$0xff]
    %v936 = vld [vmem:[#allocation6 + $0x1858] sm:$0xff]
    %v937 = vld [vmem:[#allocation6 + $0x1860] sm:$0xff]
    %v938 = vld [vmem:[#allocation6 + $0x1868] sm:$0xff]
    %v939 = vld [vmem:[#allocation6 + $0x1870] sm:$0xff]
    %v940 = vld [vmem:[#allocation6 + $0x1878] sm:$0xff]
    %v941 = vld [vmem:[#allocation6 + $0x1880] sm:$0xff]
    %v942 = vld [vmem:[#allocation6 + $0x1888] sm:$0xff]
    %v943 = vld [vmem:[#allocation6 + $0x1890] sm:$0xff]
    %v944 = vld [vmem:[#allocation6 + $0x1898] sm:$0xff]
    %v945 = vld [vmem:[#allocation6 + $0x18a0] sm:$0xff]
    %v946 = vld [vmem:[#allocation6 + $0x18a8] sm:$0xff]
    %v947 = vld [vmem:[#allocation6 + $0x18b0] sm:$0xff]
    %v948 = vld [vmem:[#allocation6 + $0x18b8] sm:$0xff]
    %v949 = vld [vmem:[#allocation6 + $0x18c0] sm:$0xff]
    %v950 = vld [vmem:[#allocation6 + $0x18c8] sm:$0xff]
    %v951 = vld [vmem:[#allocation6 + $0x18d0] sm:$0xff]
    %v952 = vld [vmem:[#allocation6 + $0x18d8] sm:$0xff]
    %v953 = vld [vmem:[#allocation6 + $0x18e0] sm:$0xff]
    %v954 = vld [vmem:[#allocation6 + $0x18e8] sm:$0xff]
    %v955 = vld [vmem:[#allocation6 + $0x18f0] sm:$0xff]
    %v956 = vld [vmem:[#allocation6 + $0x18f8] sm:$0xff]
    %v957 = vld [vmem:[#allocation6 + $0x1900] sm:$0xff]
    %v958 = vld [vmem:[#allocation6 + $0x1908] sm:$0xff]
    %v959 = vld [vmem:[#allocation6 + $0x1910] sm:$0xff]
    %v960 = vld [vmem:[#allocation6 + $0x1918] sm:$0xff]
    %v961 = vld [vmem:[#allocation6 + $0x1920] sm:$0xff]
    %v962 = vld [vmem:[#allocation6 + $0x1928] sm:$0xff]
    %v963 = vld [vmem:[#allocation6 + $0x1930] sm:$0xff]
    %v964 = vld [vmem:[#allocation6 + $0x1938] sm:$0xff]
    %v965 = vld [vmem:[#allocation6 + $0x1940] sm:$0xff]
    %v966 = vld [vmem:[#allocation6 + $0x1948] sm:$0xff]
    %v967 = vld [vmem:[#allocation6 + $0x1950] sm:$0xff]
    %v968 = vld [vmem:[#allocation6 + $0x1958] sm:$0xff]
    %v969 = vld [vmem:[#allocation6 + $0x1960] sm:$0xff]
    %v970 = vld [vmem:[#allocation6 + $0x1968] sm:$0xff]
    %v971 = vld [vmem:[#allocation6 + $0x1970] sm:$0xff]
    %v972 = vld [vmem:[#allocation6 + $0x1978] sm:$0xff]
    %v973 = vld [vmem:[#allocation6 + $0x1980] sm:$0xff]
    %v974 = vld [vmem:[#allocation6 + $0x1988] sm:$0xff]
    %v975 = vld [vmem:[#allocation6 + $0x1990] sm:$0xff]
    %v976 = vld [vmem:[#allocation6 + $0x1998] sm:$0xff]
    %v977 = vld [vmem:[#allocation6 + $0x19a0] sm:$0xff]
    %v978 = vld [vmem:[#allocation6 + $0x19a8] sm:$0xff]
    %v979 = vld [vmem:[#allocation6 + $0x19b0] sm:$0xff]
    %v980 = vld [vmem:[#allocation6 + $0x19b8] sm:$0xff]
    %v981 = vld [vmem:[#allocation6 + $0x19c0] sm:$0xff]
    %v982 = vld [vmem:[#allocation6 + $0x19c8] sm:$0xff]
    %v983 = vld [vmem:[#allocation6 + $0x19d0] sm:$0xff]
    %v984 = vld [vmem:[#allocation6 + $0x19d8] sm:$0xff]
    %v985 = vld [vmem:[#allocation6 + $0x19e0] sm:$0xff]
    %v986 = vld [vmem:[#allocation6 + $0x19e8] sm:$0xff]
    %v987 = vld [vmem:[#allocation6 + $0x19f0] sm:$0xff]
    %v988 = vld [vmem:[#allocation6 + $0x19f8] sm:$0xff]
    %v989 = vld [vmem:[#allocation6 + $0x1a00] sm:$0xff]
    %v990 = vld [vmem:[#allocation6 + $0x1a08] sm:$0xff]
    %v991 = vld [vmem:[#allocation6 + $0x1a10] sm:$0xff]
    %v992 = vld [vmem:[#allocation6 + $0x1a18] sm:$0xff]
    %v993 = vld [vmem:[#allocation6 + $0x1a20] sm:$0xff]
    %v994 = vld [vmem:[#allocation6 + $0x1a28] sm:$0xff]
    %v995 = vld [vmem:[#allocation6 + $0x1a30] sm:$0xff]
    %v996 = vld [vmem:[#allocation6 + $0x1a38] sm:$0xff]
    %v997 = vld [vmem:[#allocation6 + $0x1a40] sm:$0xff]
    %v998 = vld [vmem:[#allocation6 + $0x1a48] sm:$0xff]
    %v999 = vld [vmem:[#allocation6 + $0x1a50] sm:$0xff]
    %v1000 = vld [vmem:[#allocation6 + $0x1a58] sm:$0xff]
    %v1001 = vld [vmem:[#allocation6 + $0x1a60] sm:$0xff]
    %v1002 = vld [vmem:[#allocation6 + $0x1a68] sm:$0xff]
    %v1003 = vld [vmem:[#allocation6 + $0x1a70] sm:$0xff]
    %v1004 = vld [vmem:[#allocation6 + $0x1a78] sm:$0xff]
    %v1005 = vld [vmem:[#allocation6 + $0x1a80] sm:$0xff]
    %v1006 = vld [vmem:[#allocation6 + $0x1a88] sm:$0xff]
    %v1007 = vld [vmem:[#allocation6 + $0x1a90] sm:$0xff]
    %v1008 = vld [vmem:[#allocation6 + $0x1a98] sm:$0xff]
    %v1009 = vld [vmem:[#allocation6 + $0x1aa0] sm:$0xff]
    %v1010 = vld [vmem:[#allocation6 + $0x1aa8] sm:$0xff]
    %v1011 = vld [vmem:[#allocation6 + $0x1ab0] sm:$0xff]
    %v1012 = vld [vmem:[#allocation6 + $0x1ab8] sm:$0xff]
    %v1013 = vld [vmem:[#allocation6 + $0x1ac0] sm:$0xff]
    %v1014 = vld [vmem:[#allocation6 + $0x1ac8] sm:$0xff]
    %v1015 = vld [vmem:[#allocation6 + $0x1ad0] sm:$0xff]
    %v1016 = vld [vmem:[#allocation6 + $0x1ad8] sm:$0xff]
    %v1017 = vld [vmem:[#allocation6 + $0x1ae0] sm:$0xff]
    %v1018 = vld [vmem:[#allocation6 + $0x1ae8] sm:$0xff]
    %v1019 = vld [vmem:[#allocation6 + $0x1af0] sm:$0xff]
    %v1020 = vld [vmem:[#allocation6 + $0x1af8] sm:$0xff]
    %v1021 = vld [vmem:[#allocation6 + $0x1b00] sm:$0xff]
    %v1022 = vld [vmem:[#allocation6 + $0x1b08] sm:$0xff]
    %v1023 = vld [vmem:[#allocation6 + $0x1b10] sm:$0xff]
    %v1024 = vld [vmem:[#allocation6 + $0x1b18] sm:$0xff]
    %v1025 = vld [vmem:[#allocation6 + $0x1b20] sm:$0xff]
    %v1026 = vld [vmem:[#allocation6 + $0x1b28] sm:$0xff]
    %v1027 = vld [vmem:[#allocation6 + $0x1b30] sm:$0xff]
    %v1028 = vld [vmem:[#allocation6 + $0x1b38] sm:$0xff]
    %v1029 = vld [vmem:[#allocation6 + $0x1b40] sm:$0xff]
    %v1030 = vld [vmem:[#allocation6 + $0x1b48] sm:$0xff]
    %v1031 = vld [vmem:[#allocation6 + $0x1b50] sm:$0xff]
    %v1032 = vld [vmem:[#allocation6 + $0x1b58] sm:$0xff]
    %v1033 = vld [vmem:[#allocation6 + $0x1b60] sm:$0xff]
    %v1034 = vld [vmem:[#allocation6 + $0x1b68] sm:$0xff]
    %v1035 = vld [vmem:[#allocation6 + $0x1b70] sm:$0xff]
    %v1036 = vld [vmem:[#allocation6 + $0x1b78] sm:$0xff]
    %v1037 = vld [vmem:[#allocation6 + $0x1b80] sm:$0xff]
    %v1038 = vld [vmem:[#allocation6 + $0x1b88] sm:$0xff]
    %v1039 = vld [vmem:[#allocation6 + $0x1b90] sm:$0xff]
    %v1040 = vld [vmem:[#allocation6 + $0x1b98] sm:$0xff]
    %v1041 = vld [vmem:[#allocation6 + $0x1ba0] sm:$0xff]
    %v1042 = vld [vmem:[#allocation6 + $0x1ba8] sm:$0xff]
    %v1043 = vld [vmem:[#allocation6 + $0x1bb0] sm:$0xff]
    %v1044 = vld [vmem:[#allocation6 + $0x1bb8] sm:$0xff]
    %v1045 = vld [vmem:[#allocation6 + $0x1bc0] sm:$0xff]
    %v1046 = vld [vmem:[#allocation6 + $0x1bc8] sm:$0xff]
    %v1047 = vld [vmem:[#allocation6 + $0x1bd0] sm:$0xff]
    %v1048 = vld [vmem:[#allocation6 + $0x1bd8] sm:$0xff]
    %v1049 = vld [vmem:[#allocation6 + $0x1be0] sm:$0xff]
    %v1050 = vld [vmem:[#allocation6 + $0x1be8] sm:$0xff]
    %v1051 = vld [vmem:[#allocation6 + $0x1bf0] sm:$0xff]
    %v1052 = vld [vmem:[#allocation6 + $0x1bf8] sm:$0xff]
    %v1053 = vld [vmem:[#allocation15] sm:$0xff]
    %v1054 = vld [vmem:[#allocation15 + $0x8] sm:$0x3f]
    %v1057 = vlaneseq
    %v1058 = vshrl.u32 %v1057, 7
    %v1059 = vsub.s32 0, %v1058
    %v1060 = vrot.slane %v1053, %v1059
    %v1061 = vlaneseq
    %v1062 = vshrl.u32 %v1061, 7
    %v1063 = vsub.s32 1, %v1062
    %v1064 = vrot.slane %v1053, %v1063
    %v1065 = vlaneseq
    %v1066 = vshrl.u32 %v1065, 7
    %v1067 = vsub.s32 2, %v1066
    %v1068 = vrot.slane %v1053, %v1067
    %v1069 = vlaneseq
    %v1070 = vshrl.u32 %v1069, 7
    %v1071 = vsub.s32 3, %v1070
    %v1072 = vrot.slane %v1053, %v1071
    %v1073 = vlaneseq
    %v1074 = vshrl.u32 %v1073, 7
    %v1075 = vsub.s32 4, %v1074
    %v1076 = vrot.slane %v1053, %v1075
    %v1077 = vlaneseq
    %v1078 = vshrl.u32 %v1077, 7
    %v1079 = vsub.s32 5, %v1078
    %v1080 = vrot.slane %v1053, %v1079
    %v1081 = vlaneseq
    %v1082 = vshrl.u32 %v1081, 7
    %v1083 = vsub.s32 6, %v1082
    %v1084 = vrot.slane %v1053, %v1083
    %v1085 = vlaneseq
    %v1086 = vshrl.u32 %v1085, 7
    %v1087 = vsub.s32 7, %v1086
    %v1088 = vrot.slane %v1053, %v1087
    %v1089 = vlaneseq
    %v1090 = vshrl.u32 %v1089, 7
    %v1091 = vsub.s32 0, %v1090
    %v1092 = vrot.slane %v1054, %v1091
    %v1093 = vlaneseq
    %v1094 = vshrl.u32 %v1093, 7
    %v1095 = vsub.s32 1, %v1094
    %v1096 = vrot.slane %v1054, %v1095
    %v1097 = vlaneseq
    %v1098 = vshrl.u32 %v1097, 7
    %v1099 = vsub.s32 2, %v1098
    %v1100 = vrot.slane %v1054, %v1099
    %v1101 = vlaneseq
    %v1102 = vshrl.u32 %v1101, 7
    %v1103 = vsub.s32 3, %v1102
    %v1104 = vrot.slane %v1054, %v1103
    %v1105 = vlaneseq
    %v1106 = vshrl.u32 %v1105, 7
    %v1107 = vsub.s32 4, %v1106
    %v1108 = vrot.slane %v1054, %v1107
    %v1109 = vlaneseq
    %v1110 = vshrl.u32 %v1109, 7
    %v1111 = vsub.s32 5, %v1110
    %v1112 = vrot.slane %v1054, %v1111
    %v1128 = vcombine.high %v156, %v156
    %v1130 = vunpack.c.l.s4 1983009808
    %v1131 = vunpack.c.0.s8 %v1130
    %v1132 = vlaneseq
    %v1133 = vshrl.u32 %v1132, 7
    %v1134 = vsub.s32 %v1131, %v1133
    %v1135 = vrot.slane %v156, %v1134
    %v1137 = vunpack.c.l.s4 1983009808
    %v1138 = vunpack.c.0.s8 %v1137
    %v1139 = vlaneseq
    %v1140 = vshrl.u32 %v1139, 7
    %v1141 = vsub.s32 %v1138, %v1140
    %v1142 = vrot.slane %v1128, %v1141
    %v1143 = vcombine.high %v1135, %v1135
    %v1144 = vcombine.high %v1142, %v1142
    %1149 = vmatprep.subr.mxu0 %v158
    %1150 = vmatpush1.msra.mxu0 %v157
    %1151 = vmatprep.subr.mxu0 %v172
    %1152 = vmatpush1.msra.mxu0 %v171
    %1153 = vmatprep.subr.mxu0 %v186
    %1154 = vmatpush1.msra.mxu0 %v185
    %1155 = vmatprep.subr.mxu0 %v200
    %1156 = vmatpush1.msra.mxu0 %v199
    %1157 = vmatprep.subr.mxu0 %v214
    %1158 = vmatpush1.msra.mxu0 %v213
    %1159 = vmatprep.subr.mxu0 %v228
    %1160 = vmatpush1.msra.mxu0 %v227
    %1161 = vmatprep.subr.mxu0 %v242
    %1162 = vmatpush1.msra.mxu0 %v241
    %1163 = vmatprep.subr.mxu0 %v256
    %1164 = vmatpush1.msra.mxu0 %v255
    %1165 = vmatprep.subr.mxu0 %v270
    %1166 = vmatpush1.msra.mxu0 %v269
    %1167 = vmatprep.subr.mxu0 %v284
    %1168 = vmatpush1.msra.mxu0 %v283
    %1169 = vmatprep.subr.mxu0 %v298
    %1170 = vmatpush1.msra.mxu0 %v297
    %1171 = vmatprep.subr.mxu0 %v312
    %1172 = vmatpush1.msra.mxu0 %v311
    %1173 = vmatprep.subr.mxu0 %v326
    %1174 = vmatpush1.msra.mxu0 %v325
    %1175 = vmatprep.subr.mxu0 %v340
    %1176 = vmatpush1.msra.mxu0 %v339
    %1177 = vmatprep.subr.mxu0 %v354
    %1178 = vmatpush1.msra.mxu0 %v353
    %1179 = vmatprep.subr.mxu0 %v368
    %1180 = vmatpush1.msra.mxu0 %v367
    %1181 = vmatprep.subr.mxu0 %v382
    %1182 = vmatpush1.msra.mxu0 %v381
    %1183 = vmatprep.subr.mxu0 %v396
    %1184 = vmatpush1.msra.mxu0 %v395
    %1185 = vmatprep.subr.mxu0 %v410
    %1186 = vmatpush1.msra.mxu0 %v409
    %1187 = vmatprep.subr.mxu0 %v424
    %1188 = vmatpush1.msra.mxu0 %v423
    %1189 = vmatprep.subr.mxu0 %v438
    %1190 = vmatpush1.msra.mxu0 %v437
    %1191 = vmatprep.subr.mxu0 %v452
    %1192 = vmatpush1.msra.mxu0 %v451
    %1193 = vmatprep.subr.mxu0 %v466
    %1194 = vmatpush1.msra.mxu0 %v465
    %1195 = vmatprep.subr.mxu0 %v480
    %1196 = vmatpush1.msra.mxu0 %v479
    %1197 = vmatprep.subr.mxu0 %v494
    %1198 = vmatpush1.msra.mxu0 %v493
    %1199 = vmatprep.subr.mxu0 %v508
    %1200 = vmatpush1.msra.mxu0 %v507
    %1201 = vmatprep.subr.mxu0 %v522
    %1202 = vmatpush1.msra.mxu0 %v521
    %1203 = vmatprep.subr.mxu0 %v536
    %1204 = vmatpush1.msra.mxu0 %v535
    %1205 = vmatprep.subr.mxu0 %v550
    %1206 = vmatpush1.msra.mxu0 %v549
    %1207 = vmatprep.subr.mxu0 %v564
    %1208 = vmatpush1.msra.mxu0 %v563
    %1209 = vmatprep.subr.mxu0 %v578
    %1210 = vmatpush1.msra.mxu0 %v577
    %1211 = vmatprep.subr.mxu0 %v592
    %1212 = vmatpush1.msra.mxu0 %v591
    %1213 = vmatprep.mubr.f32.mxu0 %v1143
    %1214 = vmatmul.mubr.f32.gmra.mrb[0].mxu0 %v1135
    %v1215 = vpop.f32.mrb[0].mxu0
    %v1216 = vadd.f32 %v1060, %v1215
    %v1217 = vpop.f32.mrb[0].mxu0
    %v1218 = vadd.f32 %v1064, %v1217
    %1219 = vdwg.mxu0
    %1220 = vmatprep.subr.mxu0 %v606
    %1221 = vmatpush1.msra.mxu0 %v605
    %1222 = vmatprep.subr.mxu0 %v620
    %1223 = vmatpush1.msra.mxu0 %v619
    %1224 = vmatprep.subr.mxu0 %v634
    %1225 = vmatpush1.msra.mxu0 %v633
    %1226 = vmatprep.subr.mxu0 %v648
    %1227 = vmatpush1.msra.mxu0 %v647
    %1228 = vmatprep.subr.mxu0 %v662
    %1229 = vmatpush1.msra.mxu0 %v661
    %1230 = vmatprep.subr.mxu0 %v676
    %1231 = vmatpush1.msra.mxu0 %v675
    %1232 = vmatprep.subr.mxu0 %v690
    %1233 = vmatpush1.msra.mxu0 %v689
    %1234 = vmatprep.subr.mxu0 %v704
    %1235 = vmatpush1.msra.mxu0 %v703
    %1236 = vmatprep.subr.mxu0 %v718
    %1237 = vmatpush1.msra.mxu0 %v717
    %1238 = vmatprep.subr.mxu0 %v732
    %1239 = vmatpush1.msra.mxu0 %v731
    %1240 = vmatprep.subr.mxu0 %v746
    %1241 = vmatpush1.msra.mxu0 %v745
    %1242 = vmatprep.subr.mxu0 %v760
    %1243 = vmatpush1.msra.mxu0 %v759
    %1244 = vmatprep.subr.mxu0 %v774
    %1245 = vmatpush1.msra.mxu0 %v773
    %1246 = vmatprep.subr.mxu0 %v788
    %1247 = vmatpush1.msra.mxu0 %v787
    %1248 = vmatprep.subr.mxu0 %v802
    %1249 = vmatpush1.msra.mxu0 %v801
    %1250 = vmatprep.subr.mxu0 %v816
    %1251 = vmatpush1.msra.mxu0 %v815
    %1252 = vmatprep.subr.mxu0 %v830
    %1253 = vmatpush1.msra.mxu0 %v829
    %1254 = vmatprep.subr.mxu0 %v844
    %1255 = vmatpush1.msra.mxu0 %v843
    %1256 = vmatprep.subr.mxu0 %v858
    %1257 = vmatpush1.msra.mxu0 %v857
    %1258 = vmatprep.subr.mxu0 %v872
    %1259 = vmatpush1.msra.mxu0 %v871
    %1260 = vmatprep.subr.mxu0 %v886
    %1261 = vmatpush1.msra.mxu0 %v885
    %1262 = vmatprep.subr.mxu0 %v900
    %1263 = vmatpush1.msra.mxu0 %v899
    %1264 = vmatprep.subr.mxu0 %v914
    %1265 = vmatpush1.msra.mxu0 %v913
    %1266 = vmatprep.subr.mxu0 %v928
    %1267 = vmatpush1.msra.mxu0 %v927
    %1268 = vmatprep.subr.mxu0 %v942
    %1269 = vmatpush1.msra.mxu0 %v941
    %1270 = vmatprep.subr.mxu0 %v956
    %1271 = vmatpush1.msra.mxu0 %v955
    %1272 = vmatprep.subr.mxu0 %v970
    %1273 = vmatpush1.msra.mxu0 %v969
    %1274 = vmatprep.subr.mxu0 %v984
    %1275 = vmatpush1.msra.mxu0 %v983
    %1276 = vmatprep.subr.mxu0 %v998
    %1277 = vmatpush1.msra.mxu0 %v997
    %1278 = vmatprep.subr.mxu0 %v1012
    %1279 = vmatpush1.msra.mxu0 %v1011
    %1280 = vmatprep.subr.mxu0 %v1026
    %1281 = vmatpush1.msra.mxu0 %v1025
    %1282 = vmatprep.subr.mxu0 %v1040
    %1283 = vmatpush1.msra.mxu0 %v1039
    %1284 = vmatprep.mubr.f32.mxu0 %v1144
    %1285 = vmatmul.mubr.f32.gmra.mrb[0].mxu0 %v1142
    %v1286 = vpop.f32.mrb[0].mxu0
    %v1287 = vadd.f32 %v1216, %v1286
    %v1288 = vpop.f32.mrb[0].mxu0
    %v1289 = vadd.f32 %v1218, %v1288
    %1290 = vdwg.mxu0
    %1291 = vmatprep.subr.mxu0 %v160
    %1292 = vmatpush1.msra.mxu0 %v159
    %1293 = vmatprep.subr.mxu0 %v174
    %1294 = vmatpush1.msra.mxu0 %v173
    %1295 = vmatprep.subr.mxu0 %v188
    %1296 = vmatpush1.msra.mxu0 %v187
    %1297 = vmatprep.subr.mxu0 %v202
    %1298 = vmatpush1.msra.mxu0 %v201
    %1299 = vmatprep.subr.mxu0 %v216
    %1300 = vmatpush1.msra.mxu0 %v215
    %1301 = vmatprep.subr.mxu0 %v230
    %1302 = vmatpush1.msra.mxu0 %v229
    %1303 = vmatprep.subr.mxu0 %v244
    %1304 = vmatpush1.msra.mxu0 %v243
    %1305 = vmatprep.subr.mxu0 %v258
    %1306 = vmatpush1.msra.mxu0 %v257
    %1307 = vmatprep.subr.mxu0 %v272
    %1308 = vmatpush1.msra.mxu0 %v271
    %1309 = vmatprep.subr.mxu0 %v286
    %1310 = vmatpush1.msra.mxu0 %v285
    %1311 = vmatprep.subr.mxu0 %v300
    %1312 = vmatpush1.msra.mxu0 %v299
    %1313 = vmatprep.subr.mxu0 %v314
    %1314 = vmatpush1.msra.mxu0 %v313
    %1315 = vmatprep.subr.mxu0 %v328
    %1316 = vmatpush1.msra.mxu0 %v327
    %1317 = vmatprep.subr.mxu0 %v342
    %1318 = vmatpush1.msra.mxu0 %v341
    %1319 = vmatprep.subr.mxu0 %v356
    %1320 = vmatpush1.msra.mxu0 %v355
    %1321 = vmatprep.subr.mxu0 %v370
    %1322 = vmatpush1.msra.mxu0 %v369
    %1323 = vmatprep.subr.mxu0 %v384
    %1324 = vmatpush1.msra.mxu0 %v383
    %1325 = vmatprep.subr.mxu0 %v398
    %1326 = vmatpush1.msra.mxu0 %v397
    %1327 = vmatprep.subr.mxu0 %v412
    %1328 = vmatpush1.msra.mxu0 %v411
    %1329 = vmatprep.subr.mxu0 %v426
    %1330 = vmatpush1.msra.mxu0 %v425
    %1331 = vmatprep.subr.mxu0 %v440
    %1332 = vmatpush1.msra.mxu0 %v439
    %1333 = vmatprep.subr.mxu0 %v454
    %1334 = vmatpush1.msra.mxu0 %v453
    %1335 = vmatprep.subr.mxu0 %v468
    %1336 = vmatpush1.msra.mxu0 %v467
    %1337 = vmatprep.subr.mxu0 %v482
    %1338 = vmatpush1.msra.mxu0 %v481
    %1339 = vmatprep.subr.mxu0 %v496
    %1340 = vmatpush1.msra.mxu0 %v495
    %1341 = vmatprep.subr.mxu0 %v510
    %1342 = vmatpush1.msra.mxu0 %v509
    %1343 = vmatprep.subr.mxu0 %v524
    %1344 = vmatpush1.msra.mxu0 %v523
    %1345 = vmatprep.subr.mxu0 %v538
    %1346 = vmatpush1.msra.mxu0 %v537
    %1347 = vmatprep.subr.mxu0 %v552
    %1348 = vmatpush1.msra.mxu0 %v551
    %1349 = vmatprep.subr.mxu0 %v566
    %1350 = vmatpush1.msra.mxu0 %v565
    %1351 = vmatprep.subr.mxu0 %v580
    %1352 = vmatpush1.msra.mxu0 %v579
    %1353 = vmatprep.subr.mxu0 %v594
    %1354 = vmatpush1.msra.mxu0 %v593
    %1355 = vmatprep.mubr.f32.mxu0 %v1143
    %1356 = vmatmul.mubr.f32.gmra.mrb[0].mxu0 %v1135
    %v1357 = vpop.f32.mrb[0].mxu0
    %v1358 = vadd.f32 %v1068, %v1357
    %v1359 = vpop.f32.mrb[0].mxu0
    %v1360 = vadd.f32 %v1072, %v1359
    %1361 = vdwg.mxu0
    %1362 = vmatprep.subr.mxu0 %v608
    %1363 = vmatpush1.msra.mxu0 %v607
    %1364 = vmatprep.subr.mxu0 %v622
    %1365 = vmatpush1.msra.mxu0 %v621
    %1366 = vmatprep.subr.mxu0 %v636
    %1367 = vmatpush1.msra.mxu0 %v635
    %1368 = vmatprep.subr.mxu0 %v650
    %1369 = vmatpush1.msra.mxu0 %v649
    %1370 = vmatprep.subr.mxu0 %v664
    %1371 = vmatpush1.msra.mxu0 %v663
    %1372 = vmatprep.subr.mxu0 %v678
    %1373 = vmatpush1.msra.mxu0 %v677
    %1374 = vmatprep.subr.mxu0 %v692
    %1375 = vmatpush1.msra.mxu0 %v691
    %1376 = vmatprep.subr.mxu0 %v706
    %1377 = vmatpush1.msra.mxu0 %v705
    %1378 = vmatprep.subr.mxu0 %v720
    %1379 = vmatpush1.msra.mxu0 %v719
    %1380 = vmatprep.subr.mxu0 %v734
    %1381 = vmatpush1.msra.mxu0 %v733
    %1382 = vmatprep.subr.mxu0 %v748
    %1383 = vmatpush1.msra.mxu0 %v747
    %1384 = vmatprep.subr.mxu0 %v762
    %1385 = vmatpush1.msra.mxu0 %v761
    %1386 = vmatprep.subr.mxu0 %v776
    %1387 = vmatpush1.msra.mxu0 %v775
    %1388 = vmatprep.subr.mxu0 %v790
    %1389 = vmatpush1.msra.mxu0 %v789
    %1390 = vmatprep.subr.mxu0 %v804
    %1391 = vmatpush1.msra.mxu0 %v803
    %1392 = vmatprep.subr.mxu0 %v818
    %1393 = vmatpush1.msra.mxu0 %v817
    %1394 = vmatprep.subr.mxu0 %v832
    %1395 = vmatpush1.msra.mxu0 %v831
    %1396 = vmatprep.subr.mxu0 %v846
    %1397 = vmatpush1.msra.mxu0 %v845
    %1398 = vmatprep.subr.mxu0 %v860
    %1399 = vmatpush1.msra.mxu0 %v859
    %1400 = vmatprep.subr.mxu0 %v874
    %1401 = vmatpush1.msra.mxu0 %v873
    %1402 = vmatprep.subr.mxu0 %v888
    %1403 = vmatpush1.msra.mxu0 %v887
    %1404 = vmatprep.subr.mxu0 %v902
    %1405 = vmatpush1.msra.mxu0 %v901
    %1406 = vmatprep.subr.mxu0 %v916
    %1407 = vmatpush1.msra.mxu0 %v915
    %1408 = vmatprep.subr.mxu0 %v930
    %1409 = vmatpush1.msra.mxu0 %v929
    %1410 = vmatprep.subr.mxu0 %v944
    %1411 = vmatpush1.msra.mxu0 %v943
    %1412 = vmatprep.subr.mxu0 %v958
    %1413 = vmatpush1.msra.mxu0 %v957
    %1414 = vmatprep.subr.mxu0 %v972
    %1415 = vmatpush1.msra.mxu0 %v971
    %1416 = vmatprep.subr.mxu0 %v986
    %1417 = vmatpush1.msra.mxu0 %v985
    %1418 = vmatprep.subr.mxu0 %v1000
    %1419 = vmatpush1.msra.mxu0 %v999
    %1420 = vmatprep.subr.mxu0 %v1014
    %1421 = vmatpush1.msra.mxu0 %v1013
    %1422 = vmatprep.subr.mxu0 %v1028
    %1423 = vmatpush1.msra.mxu0 %v1027
    %1424 = vmatprep.subr.mxu0 %v1042
    %1425 = vmatpush1.msra.mxu0 %v1041
    %1426 = vmatprep.mubr.f32.mxu0 %v1144
    %1427 = vmatmul.mubr.f32.gmra.mrb[0].mxu0 %v1142
    %v1428 = vpop.f32.mrb[0].mxu0
    %v1429 = vadd.f32 %v1358, %v1428
    %v1430 = vpop.f32.mrb[0].mxu0
    %v1431 = vadd.f32 %v1360, %v1430
    %1432 = vdwg.mxu0
    %1433 = vmatprep.subr.mxu0 %v162
    %1434 = vmatpush1.msra.mxu0 %v161
    %1435 = vmatprep.subr.mxu0 %v176
    %1436 = vmatpush1.msra.mxu0 %v175
    %1437 = vmatprep.subr.mxu0 %v190
    %1438 = vmatpush1.msra.mxu0 %v189
    %1439 = vmatprep.subr.mxu0 %v204
    %1440 = vmatpush1.msra.mxu0 %v203
    %1441 = vmatprep.subr.mxu0 %v218
    %1442 = vmatpush1.msra.mxu0 %v217
    %1443 = vmatprep.subr.mxu0 %v232
    %1444 = vmatpush1.msra.mxu0 %v231
    %1445 = vmatprep.subr.mxu0 %v246
    %1446 = vmatpush1.msra.mxu0 %v245
    %1447 = vmatprep.subr.mxu0 %v260
    %1448 = vmatpush1.msra.mxu0 %v259
    %1449 = vmatprep.subr.mxu0 %v274
    %1450 = vmatpush1.msra.mxu0 %v273
    %1451 = vmatprep.subr.mxu0 %v288
    %1452 = vmatpush1.msra.mxu0 %v287
    %1453 = vmatprep.subr.mxu0 %v302
    %1454 = vmatpush1.msra.mxu0 %v301
    %1455 = vmatprep.subr.mxu0 %v316
    %1456 = vmatpush1.msra.mxu0 %v315
    %1457 = vmatprep.subr.mxu0 %v330
    %1458 = vmatpush1.msra.mxu0 %v329
    %1459 = vmatprep.subr.mxu0 %v344
    %1460 = vmatpush1.msra.mxu0 %v343
    %1461 = vmatprep.subr.mxu0 %v358
    %1462 = vmatpush1.msra.mxu0 %v357
    %1463 = vmatprep.subr.mxu0 %v372
    %1464 = vmatpush1.msra.mxu0 %v371
    %1465 = vmatprep.subr.mxu0 %v386
    %1466 = vmatpush1.msra.mxu0 %v385
    %1467 = vmatprep.subr.mxu0 %v400
    %1468 = vmatpush1.msra.mxu0 %v399
    %1469 = vmatprep.subr.mxu0 %v414
    %1470 = vmatpush1.msra.mxu0 %v413
    %1471 = vmatprep.subr.mxu0 %v428
    %1472 = vmatpush1.msra.mxu0 %v427
    %1473 = vmatprep.subr.mxu0 %v442
    %1474 = vmatpush1.msra.mxu0 %v441
    %1475 = vmatprep.subr.mxu0 %v456
    %1476 = vmatpush1.msra.mxu0 %v455
    %1477 = vmatprep.subr.mxu0 %v470
    %1478 = vmatpush1.msra.mxu0 %v469
    %1479 = vmatprep.subr.mxu0 %v484
    %1480 = vmatpush1.msra.mxu0 %v483
    %1481 = vmatprep.subr.mxu0 %v498
    %1482 = vmatpush1.msra.mxu0 %v497
    %1483 = vmatprep.subr.mxu0 %v512
    %1484 = vmatpush1.msra.mxu0 %v511
    %1485 = vmatprep.subr.mxu0 %v526
    %1486 = vmatpush1.msra.mxu0 %v525
    %1487 = vmatprep.subr.mxu0 %v540
    %1488 = vmatpush1.msra.mxu0 %v539
    %1489 = vmatprep.subr.mxu0 %v554
    %1490 = vmatpush1.msra.mxu0 %v553
    %1491 = vmatprep.subr.mxu0 %v568
    %1492 = vmatpush1.msra.mxu0 %v567
    %1493 = vmatprep.subr.mxu0 %v582
    %1494 = vmatpush1.msra.mxu0 %v581
    %1495 = vmatprep.subr.mxu0 %v596
    %1496 = vmatpush1.msra.mxu0 %v595
    %1497 = vmatprep.mubr.f32.mxu0 %v1143
    %1498 = vmatmul.mubr.f32.gmra.mrb[0].mxu0 %v1135
    %v1499 = vpop.f32.mrb[0].mxu0
    %v1500 = vadd.f32 %v1076, %v1499
    %v1501 = vpop.f32.mrb[0].mxu0
    %v1502 = vadd.f32 %v1080, %v1501
    %1503 = vdwg.mxu0
    %1504 = vmatprep.subr.mxu0 %v610
    %1505 = vmatpush1.msra.mxu0 %v609
    %1506 = vmatprep.subr.mxu0 %v624
    %1507 = vmatpush1.msra.mxu0 %v623
    %1508 = vmatprep.subr.mxu0 %v638
    %1509 = vmatpush1.msra.mxu0 %v637
    %1510 = vmatprep.subr.mxu0 %v652
    %1511 = vmatpush1.msra.mxu0 %v651
    %1512 = vmatprep.subr.mxu0 %v666
    %1513 = vmatpush1.msra.mxu0 %v665
    %1514 = vmatprep.subr.mxu0 %v680
    %1515 = vmatpush1.msra.mxu0 %v679
    %1516 = vmatprep.subr.mxu0 %v694
    %1517 = vmatpush1.msra.mxu0 %v693
    %1518 = vmatprep.subr.mxu0 %v708
    %1519 = vmatpush1.msra.mxu0 %v707
    %1520 = vmatprep.subr.mxu0 %v722
    %1521 = vmatpush1.msra.mxu0 %v721
    %1522 = vmatprep.subr.mxu0 %v736
    %1523 = vmatpush1.msra.mxu0 %v735
    %1524 = vmatprep.subr.mxu0 %v750
    %1525 = vmatpush1.msra.mxu0 %v749
    %1526 = vmatprep.subr.mxu0 %v764
    %1527 = vmatpush1.msra.mxu0 %v763
    %1528 = vmatprep.subr.mxu0 %v778
    %1529 = vmatpush1.msra.mxu0 %v777
    %1530 = vmatprep.subr.mxu0 %v792
    %1531 = vmatpush1.msra.mxu0 %v791
    %1532 = vmatprep.subr.mxu0 %v806
    %1533 = vmatpush1.msra.mxu0 %v805
    %1534 = vmatprep.subr.mxu0 %v820
    %1535 = vmatpush1.msra.mxu0 %v819
    %1536 = vmatprep.subr.mxu0 %v834
    %1537 = vmatpush1.msra.mxu0 %v833
    %1538 = vmatprep.subr.mxu0 %v848
    %1539 = vmatpush1.msra.mxu0 %v847
    %1540 = vmatprep.subr.mxu0 %v862
    %1541 = vmatpush1.msra.mxu0 %v861
    %1542 = vmatprep.subr.mxu0 %v876
    %1543 = vmatpush1.msra.mxu0 %v875
    %1544 = vmatprep.subr.mxu0 %v890
    %1545 = vmatpush1.msra.mxu0 %v889
    %1546 = vmatprep.subr.mxu0 %v904
    %1547 = vmatpush1.msra.mxu0 %v903
    %1548 = vmatprep.subr.mxu0 %v918
    %1549 = vmatpush1.msra.mxu0 %v917
    %1550 = vmatprep.subr.mxu0 %v932
    %1551 = vmatpush1.msra.mxu0 %v931
    %1552 = vmatprep.subr.mxu0 %v946
    %1553 = vmatpush1.msra.mxu0 %v945
    %1554 = vmatprep.subr.mxu0 %v960
    %1555 = vmatpush1.msra.mxu0 %v959
    %1556 = vmatprep.subr.mxu0 %v974
    %1557 = vmatpush1.msra.mxu0 %v973
    %1558 = vmatprep.subr.mxu0 %v988
    %1559 = vmatpush1.msra.mxu0 %v987
    %1560 = vmatprep.subr.mxu0 %v1002
    %1561 = vmatpush1.msra.mxu0 %v1001
    %1562 = vmatprep.subr.mxu0 %v1016
    %1563 = vmatpush1.msra.mxu0 %v1015
    %1564 = vmatprep.subr.mxu0 %v1030
    %1565 = vmatpush1.msra.mxu0 %v1029
    %1566 = vmatprep.subr.mxu0 %v1044
    %1567 = vmatpush1.msra.mxu0 %v1043
    %1568 = vmatprep.mubr.f32.mxu0 %v1144
    %1569 = vmatmul.mubr.f32.gmra.mrb[0].mxu0 %v1142
    %v1570 = vpop.f32.mrb[0].mxu0
    %v1571 = vadd.f32 %v1500, %v1570
    %v1572 = vpop.f32.mrb[0].mxu0
    %v1573 = vadd.f32 %v1502, %v1572
    %1574 = vdwg.mxu0
    %1575 = vmatprep.subr.mxu0 %v164
    %1576 = vmatpush1.msra.mxu0 %v163
    %1577 = vmatprep.subr.mxu0 %v178
    %1578 = vmatpush1.msra.mxu0 %v177
    %1579 = vmatprep.subr.mxu0 %v192
    %1580 = vmatpush1.msra.mxu0 %v191
    %1581 = vmatprep.subr.mxu0 %v206
    %1582 = vmatpush1.msra.mxu0 %v205
    %1583 = vmatprep.subr.mxu0 %v220
    %1584 = vmatpush1.msra.mxu0 %v219
    %1585 = vmatprep.subr.mxu0 %v234
    %1586 = vmatpush1.msra.mxu0 %v233
    %1587 = vmatprep.subr.mxu0 %v248
    %1588 = vmatpush1.msra.mxu0 %v247
    %1589 = vmatprep.subr.mxu0 %v262
    %1590 = vmatpush1.msra.mxu0 %v261
    %1591 = vmatprep.subr.mxu0 %v276
    %1592 = vmatpush1.msra.mxu0 %v275
    %1593 = vmatprep.subr.mxu0 %v290
    %1594 = vmatpush1.msra.mxu0 %v289
    %1595 = vmatprep.subr.mxu0 %v304
    %1596 = vmatpush1.msra.mxu0 %v303
    %1597 = vmatprep.subr.mxu0 %v318
    %1598 = vmatpush1.msra.mxu0 %v317
    %1599 = vmatprep.subr.mxu0 %v332
    %1600 = vmatpush1.msra.mxu0 %v331
    %1601 = vmatprep.subr.mxu0 %v346
    %1602 = vmatpush1.msra.mxu0 %v345
    %1603 = vmatprep.subr.mxu0 %v360
    %1604 = vmatpush1.msra.mxu0 %v359
    %1605 = vmatprep.subr.mxu0 %v374
    %1606 = vmatpush1.msra.mxu0 %v373
    %1607 = vmatprep.subr.mxu0 %v388
    %1608 = vmatpush1.msra.mxu0 %v387
    %1609 = vmatprep.subr.mxu0 %v402
    %1610 = vmatpush1.msra.mxu0 %v401
    %1611 = vmatprep.subr.mxu0 %v416
    %1612 = vmatpush1.msra.mxu0 %v415
    %1613 = vmatprep.subr.mxu0 %v430
    %1614 = vmatpush1.msra.mxu0 %v429
    %1615 = vmatprep.subr.mxu0 %v444
    %1616 = vmatpush1.msra.mxu0 %v443
    %1617 = vmatprep.subr.mxu0 %v458
    %1618 = vmatpush1.msra.mxu0 %v457
    %1619 = vmatprep.subr.mxu0 %v472
    %1620 = vmatpush1.msra.mxu0 %v471
    %1621 = vmatprep.subr.mxu0 %v486
    %1622 = vmatpush1.msra.mxu0 %v485
    %1623 = vmatprep.subr.mxu0 %v500
    %1624 = vmatpush1.msra.mxu0 %v499
    %1625 = vmatprep.subr.mxu0 %v514
    %1626 = vmatpush1.msra.mxu0 %v513
    %1627 = vmatprep.subr.mxu0 %v528
    %1628 = vmatpush1.msra.mxu0 %v527
    %1629 = vmatprep.subr.mxu0 %v542
    %1630 = vmatpush1.msra.mxu0 %v541
    %1631 = vmatprep.subr.mxu0 %v556
    %1632 = vmatpush1.msra.mxu0 %v555
    %1633 = vmatprep.subr.mxu0 %v570
    %1634 = vmatpush1.msra.mxu0 %v569
    %1635 = vmatprep.subr.mxu0 %v584
    %1636 = vmatpush1.msra.mxu0 %v583
    %1637 = vmatprep.subr.mxu0 %v598
    %1638 = vmatpush1.msra.mxu0 %v597
    %1639 = vmatprep.mubr.f32.mxu0 %v1143
    %1640 = vmatmul.mubr.f32.gmra.mrb[0].mxu0 %v1135
    %v1641 = vpop.f32.mrb[0].mxu0
    %v1642 = vadd.f32 %v1084, %v1641
    %v1643 = vpop.f32.mrb[0].mxu0
    %v1644 = vadd.f32 %v1088, %v1643
    %1645 = vdwg.mxu0
    %1646 = vmatprep.subr.mxu0 %v612
    %1647 = vmatpush1.msra.mxu0 %v611
    %1648 = vmatprep.subr.mxu0 %v626
    %1649 = vmatpush1.msra.mxu0 %v625
    %1650 = vmatprep.subr.mxu0 %v640
    %1651 = vmatpush1.msra.mxu0 %v639
    %1652 = vmatprep.subr.mxu0 %v654
    %1653 = vmatpush1.msra.mxu0 %v653
    %1654 = vmatprep.subr.mxu0 %v668
    %1655 = vmatpush1.msra.mxu0 %v667
    %1656 = vmatprep.subr.mxu0 %v682
    %1657 = vmatpush1.msra.mxu0 %v681
    %1658 = vmatprep.subr.mxu0 %v696
    %1659 = vmatpush1.msra.mxu0 %v695
    %1660 = vmatprep.subr.mxu0 %v710
    %1661 = vmatpush1.msra.mxu0 %v709
    %1662 = vmatprep.subr.mxu0 %v724
    %1663 = vmatpush1.msra.mxu0 %v723
    %1664 = vmatprep.subr.mxu0 %v738
    %1665 = vmatpush1.msra.mxu0 %v737
    %1666 = vmatprep.subr.mxu0 %v752
    %1667 = vmatpush1.msra.mxu0 %v751
    %1668 = vmatprep.subr.mxu0 %v766
    %1669 = vmatpush1.msra.mxu0 %v765
    %1670 = vmatprep.subr.mxu0 %v780
    %1671 = vmatpush1.msra.mxu0 %v779
    %1672 = vmatprep.subr.mxu0 %v794
    %1673 = vmatpush1.msra.mxu0 %v793
    %1674 = vmatprep.subr.mxu0 %v808
    %1675 = vmatpush1.msra.mxu0 %v807
    %1676 = vmatprep.subr.mxu0 %v822
    %1677 = vmatpush1.msra.mxu0 %v821
    %1678 = vmatprep.subr.mxu0 %v836
    %1679 = vmatpush1.msra.mxu0 %v835
    %1680 = vmatprep.subr.mxu0 %v850
    %1681 = vmatpush1.msra.mxu0 %v849
    %1682 = vmatprep.subr.mxu0 %v864
    %1683 = vmatpush1.msra.mxu0 %v863
    %1684 = vmatprep.subr.mxu0 %v878
    %1685 = vmatpush1.msra.mxu0 %v877
    %1686 = vmatprep.subr.mxu0 %v892
    %1687 = vmatpush1.msra.mxu0 %v891
    %1688 = vmatprep.subr.mxu0 %v906
    %1689 = vmatpush1.msra.mxu0 %v905
    %1690 = vmatprep.subr.mxu0 %v920
    %1691 = vmatpush1.msra.mxu0 %v919
    %1692 = vmatprep.subr.mxu0 %v934
    %1693 = vmatpush1.msra.mxu0 %v933
    %1694 = vmatprep.subr.mxu0 %v948
    %1695 = vmatpush1.msra.mxu0 %v947
    %1696 = vmatprep.subr.mxu0 %v962
    %1697 = vmatpush1.msra.mxu0 %v961
    %1698 = vmatprep.subr.mxu0 %v976
    %1699 = vmatpush1.msra.mxu0 %v975
    %1700 = vmatprep.subr.mxu0 %v990
    %1701 = vmatpush1.msra.mxu0 %v989
    %1702 = vmatprep.subr.mxu0 %v1004
    %1703 = vmatpush1.msra.mxu0 %v1003
    %1704 = vmatprep.subr.mxu0 %v1018
    %1705 = vmatpush1.msra.mxu0 %v1017
    %1706 = vmatprep.subr.mxu0 %v1032
    %1707 = vmatpush1.msra.mxu0 %v1031
    %1708 = vmatprep.subr.mxu0 %v1046
    %1709 = vmatpush1.msra.mxu0 %v1045
    %1710 = vmatprep.mubr.f32.mxu0 %v1144
    %1711 = vmatmul.mubr.f32.gmra.mrb[0].mxu0 %v1142
    %v1712 = vpop.f32.mrb[0].mxu0
    %v1713 = vadd.f32 %v1642, %v1712
    %v1714 = vpop.f32.mrb[0].mxu0
    %v1715 = vadd.f32 %v1644, %v1714
    %1716 = vdwg.mxu0
    %1717 = vmatprep.subr.mxu0 %v166
    %1718 = vmatpush1.msra.mxu0 %v165
    %1719 = vmatprep.subr.mxu0 %v180
    %1720 = vmatpush1.msra.mxu0 %v179
    %1721 = vmatprep.subr.mxu0 %v194
    %1722 = vmatpush1.msra.mxu0 %v193
    %1723 = vmatprep.subr.mxu0 %v208
    %1724 = vmatpush1.msra.mxu0 %v207
    %1725 = vmatprep.subr.mxu0 %v222
    %1726 = vmatpush1.msra.mxu0 %v221
    %1727 = vmatprep.subr.mxu0 %v236
    %1728 = vmatpush1.msra.mxu0 %v235
    %1729 = vmatprep.subr.mxu0 %v250
    %1730 = vmatpush1.msra.mxu0 %v249
    %1731 = vmatprep.subr.mxu0 %v264
    %1732 = vmatpush1.msra.mxu0 %v263
    %1733 = vmatprep.subr.mxu0 %v278
    %1734 = vmatpush1.msra.mxu0 %v277
    %1735 = vmatprep.subr.mxu0 %v292
    %1736 = vmatpush1.msra.mxu0 %v291
    %1737 = vmatprep.subr.mxu0 %v306
    %1738 = vmatpush1.msra.mxu0 %v305
    %1739 = vmatprep.subr.mxu0 %v320
    %1740 = vmatpush1.msra.mxu0 %v319
    %1741 = vmatprep.subr.mxu0 %v334
    %1742 = vmatpush1.msra.mxu0 %v333
    %1743 = vmatprep.subr.mxu0 %v348
    %1744 = vmatpush1.msra.mxu0 %v347
    %1745 = vmatprep.subr.mxu0 %v362
    %1746 = vmatpush1.msra.mxu0 %v361
    %1747 = vmatprep.subr.mxu0 %v376
    %1748 = vmatpush1.msra.mxu0 %v375
    %1749 = vmatprep.subr.mxu0 %v390
    %1750 = vmatpush1.msra.mxu0 %v389
    %1751 = vmatprep.subr.mxu0 %v404
    %1752 = vmatpush1.msra.mxu0 %v403
    %1753 = vmatprep.subr.mxu0 %v418
    %1754 = vmatpush1.msra.mxu0 %v417
    %1755 = vmatprep.subr.mxu0 %v432
    %1756 = vmatpush1.msra.mxu0 %v431
    %1757 = vmatprep.subr.mxu0 %v446
    %1758 = vmatpush1.msra.mxu0 %v445
    %1759 = vmatprep.subr.mxu0 %v460
    %1760 = vmatpush1.msra.mxu0 %v459
    %1761 = vmatprep.subr.mxu0 %v474
    %1762 = vmatpush1.msra.mxu0 %v473
    %1763 = vmatprep.subr.mxu0 %v488
    %1764 = vmatpush1.msra.mxu0 %v487
    %1765 = vmatprep.subr.mxu0 %v502
    %1766 = vmatpush1.msra.mxu0 %v501
    %1767 = vmatprep.subr.mxu0 %v516
    %1768 = vmatpush1.msra.mxu0 %v515
    %1769 = vmatprep.subr.mxu0 %v530
    %1770 = vmatpush1.msra.mxu0 %v529
    %1771 = vmatprep.subr.mxu0 %v544
    %1772 = vmatpush1.msra.mxu0 %v543
    %1773 = vmatprep.subr.mxu0 %v558
    %1774 = vmatpush1.msra.mxu0 %v557
    %1775 = vmatprep.subr.mxu0 %v572
    %1776 = vmatpush1.msra.mxu0 %v571
    %1777 = vmatprep.subr.mxu0 %v586
    %1778 = vmatpush1.msra.mxu0 %v585
    %1779 = vmatprep.subr.mxu0 %v600
    %1780 = vmatpush1.msra.mxu0 %v599
    %1781 = vmatprep.mubr.f32.mxu0 %v1143
    %1782 = vmatmul.mubr.f32.gmra.mrb[0].mxu0 %v1135
    %v1783 = vpop.f32.mrb[0].mxu0
    %v1784 = vadd.f32 %v1092, %v1783
    %v1785 = vpop.f32.mrb[0].mxu0
    %v1786 = vadd.f32 %v1096, %v1785
    %1787 = vdwg.mxu0
    %1788 = vmatprep.subr.mxu0 %v614
    %1789 = vmatpush1.msra.mxu0 %v613
    %1790 = vmatprep.subr.mxu0 %v628
    %1791 = vmatpush1.msra.mxu0 %v627
    %1792 = vmatprep.subr.mxu0 %v642
    %1793 = vmatpush1.msra.mxu0 %v641
    %1794 = vmatprep.subr.mxu0 %v656
    %1795 = vmatpush1.msra.mxu0 %v655
    %1796 = vmatprep.subr.mxu0 %v670
    %1797 = vmatpush1.msra.mxu0 %v669
    %1798 = vmatprep.subr.mxu0 %v684
    %1799 = vmatpush1.msra.mxu0 %v683
    %1800 = vmatprep.subr.mxu0 %v698
    %1801 = vmatpush1.msra.mxu0 %v697
    %1802 = vmatprep.subr.mxu0 %v712
    %1803 = vmatpush1.msra.mxu0 %v711
    %1804 = vmatprep.subr.mxu0 %v726
    %1805 = vmatpush1.msra.mxu0 %v725
    %1806 = vmatprep.subr.mxu0 %v740
    %1807 = vmatpush1.msra.mxu0 %v739
    %1808 = vmatprep.subr.mxu0 %v754
    %1809 = vmatpush1.msra.mxu0 %v753
    %1810 = vmatprep.subr.mxu0 %v768
    %1811 = vmatpush1.msra.mxu0 %v767
    %1812 = vmatprep.subr.mxu0 %v782
    %1813 = vmatpush1.msra.mxu0 %v781
    %1814 = vmatprep.subr.mxu0 %v796
    %1815 = vmatpush1.msra.mxu0 %v795
    %1816 = vmatprep.subr.mxu0 %v810
    %1817 = vmatpush1.msra.mxu0 %v809
    %1818 = vmatprep.subr.mxu0 %v824
    %1819 = vmatpush1.msra.mxu0 %v823
    %1820 = vmatprep.subr.mxu0 %v838
    %1821 = vmatpush1.msra.mxu0 %v837
    %1822 = vmatprep.subr.mxu0 %v852
    %1823 = vmatpush1.msra.mxu0 %v851
    %1824 = vmatprep.subr.mxu0 %v866
    %1825 = vmatpush1.msra.mxu0 %v865
    %1826 = vmatprep.subr.mxu0 %v880
    %1827 = vmatpush1.msra.mxu0 %v879
    %1828 = vmatprep.subr.mxu0 %v894
    %1829 = vmatpush1.msra.mxu0 %v893
    %1830 = vmatprep.subr.mxu0 %v908
    %1831 = vmatpush1.msra.mxu0 %v907
    %1832 = vmatprep.subr.mxu0 %v922
    %1833 = vmatpush1.msra.mxu0 %v921
    %1834 = vmatprep.subr.mxu0 %v936
    %1835 = vmatpush1.msra.mxu0 %v935
    %1836 = vmatprep.subr.mxu0 %v950
    %1837 = vmatpush1.msra.mxu0 %v949
    %1838 = vmatprep.subr.mxu0 %v964
    %1839 = vmatpush1.msra.mxu0 %v963
    %1840 = vmatprep.subr.mxu0 %v978
    %1841 = vmatpush1.msra.mxu0 %v977
    %1842 = vmatprep.subr.mxu0 %v992
    %1843 = vmatpush1.msra.mxu0 %v991
    %1844 = vmatprep.subr.mxu0 %v1006
    %1845 = vmatpush1.msra.mxu0 %v1005
    %1846 = vmatprep.subr.mxu0 %v1020
    %1847 = vmatpush1.msra.mxu0 %v1019
    %1848 = vmatprep.subr.mxu0 %v1034
    %1849 = vmatpush1.msra.mxu0 %v1033
    %1850 = vmatprep.subr.mxu0 %v1048
    %1851 = vmatpush1.msra.mxu0 %v1047
    %1852 = vmatprep.mubr.f32.mxu0 %v1144
    %1853 = vmatmul.mubr.f32.gmra.mrb[0].mxu0 %v1142
    %v1854 = vpop.f32.mrb[0].mxu0
    %v1855 = vadd.f32 %v1784, %v1854
    %v1856 = vpop.f32.mrb[0].mxu0
    %v1857 = vadd.f32 %v1786, %v1856
    %1858 = vdwg.mxu0
    %1859 = vmatprep.subr.mxu0 %v168
    %1860 = vmatpush1.msra.mxu0 %v167
    %1861 = vmatprep.subr.mxu0 %v182
    %1862 = vmatpush1.msra.mxu0 %v181
    %1863 = vmatprep.subr.mxu0 %v196
    %1864 = vmatpush1.msra.mxu0 %v195
    %1865 = vmatprep.subr.mxu0 %v210
    %1866 = vmatpush1.msra.mxu0 %v209
    %1867 = vmatprep.subr.mxu0 %v224
    %1868 = vmatpush1.msra.mxu0 %v223
    %1869 = vmatprep.subr.mxu0 %v238
    %1870 = vmatpush1.msra.mxu0 %v237
    %1871 = vmatprep.subr.mxu0 %v252
    %1872 = vmatpush1.msra.mxu0 %v251
    %1873 = vmatprep.subr.mxu0 %v266
    %1874 = vmatpush1.msra.mxu0 %v265
    %1875 = vmatprep.subr.mxu0 %v280
    %1876 = vmatpush1.msra.mxu0 %v279
    %1877 = vmatprep.subr.mxu0 %v294
    %1878 = vmatpush1.msra.mxu0 %v293
    %1879 = vmatprep.subr.mxu0 %v308
    %1880 = vmatpush1.msra.mxu0 %v307
    %1881 = vmatprep.subr.mxu0 %v322
    %1882 = vmatpush1.msra.mxu0 %v321
    %1883 = vmatprep.subr.mxu0 %v336
    %1884 = vmatpush1.msra.mxu0 %v335
    %1885 = vmatprep.subr.mxu0 %v350
    %1886 = vmatpush1.msra.mxu0 %v349
    %1887 = vmatprep.subr.mxu0 %v364
    %1888 = vmatpush1.msra.mxu0 %v363
    %1889 = vmatprep.subr.mxu0 %v378
    %1890 = vmatpush1.msra.mxu0 %v377
    %1891 = vmatprep.subr.mxu0 %v392
    %1892 = vmatpush1.msra.mxu0 %v391
    %1893 = vmatprep.subr.mxu0 %v406
    %1894 = vmatpush1.msra.mxu0 %v405
    %1895 = vmatprep.subr.mxu0 %v420
    %1896 = vmatpush1.msra.mxu0 %v419
    %1897 = vmatprep.subr.mxu0 %v434
    %1898 = vmatpush1.msra.mxu0 %v433
    %1899 = vmatprep.subr.mxu0 %v448
    %1900 = vmatpush1.msra.mxu0 %v447
    %1901 = vmatprep.subr.mxu0 %v462
    %1902 = vmatpush1.msra.mxu0 %v461
    %1903 = vmatprep.subr.mxu0 %v476
    %1904 = vmatpush1.msra.mxu0 %v475
    %1905 = vmatprep.subr.mxu0 %v490
    %1906 = vmatpush1.msra.mxu0 %v489
    %1907 = vmatprep.subr.mxu0 %v504
    %1908 = vmatpush1.msra.mxu0 %v503
    %1909 = vmatprep.subr.mxu0 %v518
    %1910 = vmatpush1.msra.mxu0 %v517
    %1911 = vmatprep.subr.mxu0 %v532
    %1912 = vmatpush1.msra.mxu0 %v531
    %1913 = vmatprep.subr.mxu0 %v546
    %1914 = vmatpush1.msra.mxu0 %v545
    %1915 = vmatprep.subr.mxu0 %v560
    %1916 = vmatpush1.msra.mxu0 %v559
    %1917 = vmatprep.subr.mxu0 %v574
    %1918 = vmatpush1.msra.mxu0 %v573
    %1919 = vmatprep.subr.mxu0 %v588
    %1920 = vmatpush1.msra.mxu0 %v587
    %1921 = vmatprep.subr.mxu0 %v602
    %1922 = vmatpush1.msra.mxu0 %v601
    %1923 = vmatprep.mubr.f32.mxu0 %v1143
    %1924 = vmatmul.mubr.f32.gmra.mrb[0].mxu0 %v1135
    %v1925 = vpop.f32.mrb[0].mxu0
    %v1926 = vadd.f32 %v1100, %v1925
    %v1927 = vpop.f32.mrb[0].mxu0
    %v1928 = vadd.f32 %v1104, %v1927
    %1929 = vdwg.mxu0
    %1930 = vmatprep.subr.mxu0 %v616
    %1931 = vmatpush1.msra.mxu0 %v615
    %1932 = vmatprep.subr.mxu0 %v630
    %1933 = vmatpush1.msra.mxu0 %v629
    %1934 = vmatprep.subr.mxu0 %v644
    %1935 = vmatpush1.msra.mxu0 %v643
    %1936 = vmatprep.subr.mxu0 %v658
    %1937 = vmatpush1.msra.mxu0 %v657
    %1938 = vmatprep.subr.mxu0 %v672
    %1939 = vmatpush1.msra.mxu0 %v671
    %1940 = vmatprep.subr.mxu0 %v686
    %1941 = vmatpush1.msra.mxu0 %v685
    %1942 = vmatprep.subr.mxu0 %v700
    %1943 = vmatpush1.msra.mxu0 %v699
    %1944 = vmatprep.subr.mxu0 %v714
    %1945 = vmatpush1.msra.mxu0 %v713
    %1946 = vmatprep.subr.mxu0 %v728
    %1947 = vmatpush1.msra.mxu0 %v727
    %1948 = vmatprep.subr.mxu0 %v742
    %1949 = vmatpush1.msra.mxu0 %v741
    %1950 = vmatprep.subr.mxu0 %v756
    %1951 = vmatpush1.msra.mxu0 %v755
    %1952 = vmatprep.subr.mxu0 %v770
    %1953 = vmatpush1.msra.mxu0 %v769
    %1954 = vmatprep.subr.mxu0 %v784
    %1955 = vmatpush1.msra.mxu0 %v783
    %1956 = vmatprep.subr.mxu0 %v798
    %1957 = vmatpush1.msra.mxu0 %v797
    %1958 = vmatprep.subr.mxu0 %v812
    %1959 = vmatpush1.msra.mxu0 %v811
    %1960 = vmatprep.subr.mxu0 %v826
    %1961 = vmatpush1.msra.mxu0 %v825
    %1962 = vmatprep.subr.mxu0 %v840
    %1963 = vmatpush1.msra.mxu0 %v839
    %1964 = vmatprep.subr.mxu0 %v854
    %1965 = vmatpush1.msra.mxu0 %v853
    %1966 = vmatprep.subr.mxu0 %v868
    %1967 = vmatpush1.msra.mxu0 %v867
    %1968 = vmatprep.subr.mxu0 %v882
    %1969 = vmatpush1.msra.mxu0 %v881
    %1970 = vmatprep.subr.mxu0 %v896
    %1971 = vmatpush1.msra.mxu0 %v895
    %1972 = vmatprep.subr.mxu0 %v910
    %1973 = vmatpush1.msra.mxu0 %v909
    %1974 = vmatprep.subr.mxu0 %v924
    %1975 = vmatpush1.msra.mxu0 %v923
    %1976 = vmatprep.subr.mxu0 %v938
    %1977 = vmatpush1.msra.mxu0 %v937
    %1978 = vmatprep.subr.mxu0 %v952
    %1979 = vmatpush1.msra.mxu0 %v951
    %1980 = vmatprep.subr.mxu0 %v966
    %1981 = vmatpush1.msra.mxu0 %v965
    %1982 = vmatprep.subr.mxu0 %v980
    %1983 = vmatpush1.msra.mxu0 %v979
    %1984 = vmatprep.subr.mxu0 %v994
    %1985 = vmatpush1.msra.mxu0 %v993
    %1986 = vmatprep.subr.mxu0 %v1008
    %1987 = vmatpush1.msra.mxu0 %v1007
    %1988 = vmatprep.subr.mxu0 %v1022
    %1989 = vmatpush1.msra.mxu0 %v1021
    %1990 = vmatprep.subr.mxu0 %v1036
    %1991 = vmatpush1.msra.mxu0 %v1035
    %1992 = vmatprep.subr.mxu0 %v1050
    %1993 = vmatpush1.msra.mxu0 %v1049
    %1994 = vmatprep.mubr.f32.mxu0 %v1144
    %1995 = vmatmul.mubr.f32.gmra.mrb[0].mxu0 %v1142
    %v1996 = vpop.f32.mrb[0].mxu0
    %v1997 = vadd.f32 %v1926, %v1996
    %v1998 = vpop.f32.mrb[0].mxu0
    %v1999 = vadd.f32 %v1928, %v1998
    %2000 = vdwg.mxu0
    %2001 = vmatprep.subr.mxu0 %v170
    %2002 = vmatpush1.msra.mxu0 %v169
    %2003 = vmatprep.subr.mxu0 %v184
    %2004 = vmatpush1.msra.mxu0 %v183
    %2005 = vmatprep.subr.mxu0 %v198
    %2006 = vmatpush1.msra.mxu0 %v197
    %2007 = vmatprep.subr.mxu0 %v212
    %2008 = vmatpush1.msra.mxu0 %v211
    %2009 = vmatprep.subr.mxu0 %v226
    %2010 = vmatpush1.msra.mxu0 %v225
    %2011 = vmatprep.subr.mxu0 %v240
    %2012 = vmatpush1.msra.mxu0 %v239
    %2013 = vmatprep.subr.mxu0 %v254
    %2014 = vmatpush1.msra.mxu0 %v253
    %2015 = vmatprep.subr.mxu0 %v268
    %2016 = vmatpush1.msra.mxu0 %v267
    %2017 = vmatprep.subr.mxu0 %v282
    %2018 = vmatpush1.msra.mxu0 %v281
    %2019 = vmatprep.subr.mxu0 %v296
    %2020 = vmatpush1.msra.mxu0 %v295
    %2021 = vmatprep.subr.mxu0 %v310
    %2022 = vmatpush1.msra.mxu0 %v309
    %2023 = vmatprep.subr.mxu0 %v324
    %2024 = vmatpush1.msra.mxu0 %v323
    %2025 = vmatprep.subr.mxu0 %v338
    %2026 = vmatpush1.msra.mxu0 %v337
    %2027 = vmatprep.subr.mxu0 %v352
    %2028 = vmatpush1.msra.mxu0 %v351
    %2029 = vmatprep.subr.mxu0 %v366
    %2030 = vmatpush1.msra.mxu0 %v365
    %2031 = vmatprep.subr.mxu0 %v380
    %2032 = vmatpush1.msra.mxu0 %v379
    %2033 = vmatprep.subr.mxu0 %v394
    %2034 = vmatpush1.msra.mxu0 %v393
    %2035 = vmatprep.subr.mxu0 %v408
    %2036 = vmatpush1.msra.mxu0 %v407
    %2037 = vmatprep.subr.mxu0 %v422
    %2038 = vmatpush1.msra.mxu0 %v421
    %2039 = vmatprep.subr.mxu0 %v436
    %2040 = vmatpush1.msra.mxu0 %v435
    %2041 = vmatprep.subr.mxu0 %v450
    %2042 = vmatpush1.msra.mxu0 %v449
    %2043 = vmatprep.subr.mxu0 %v464
    %2044 = vmatpush1.msra.mxu0 %v463
    %2045 = vmatprep.subr.mxu0 %v478
    %2046 = vmatpush1.msra.mxu0 %v477
    %2047 = vmatprep.subr.mxu0 %v492
    %2048 = vmatpush1.msra.mxu0 %v491
    %2049 = vmatprep.subr.mxu0 %v506
    %2050 = vmatpush1.msra.mxu0 %v505
    %2051 = vmatprep.subr.mxu0 %v520
    %2052 = vmatpush1.msra.mxu0 %v519
    %2053 = vmatprep.subr.mxu0 %v534
    %2054 = vmatpush1.msra.mxu0 %v533
    %2055 = vmatprep.subr.mxu0 %v548
    %2056 = vmatpush1.msra.mxu0 %v547
    %2057 = vmatprep.subr.mxu0 %v562
    %2058 = vmatpush1.msra.mxu0 %v561
    %2059 = vmatprep.subr.mxu0 %v576
    %2060 = vmatpush1.msra.mxu0 %v575
    %2061 = vmatprep.subr.mxu0 %v590
    %2062 = vmatpush1.msra.mxu0 %v589
    %2063 = vmatprep.subr.mxu0 %v604
    %2064 = vmatpush1.msra.mxu0 %v603
    %2065 = vmatprep.mubr.f32.mxu0 %v1143
    %2066 = vmatmul.mubr.f32.gmra.mrb[0].mxu0 %v1135
    %v2067 = vpop.f32.mrb[0].mxu0
    %v2068 = vadd.f32 %v1108, %v2067
    %v2069 = vpop.f32.mrb[0].mxu0
    %v2070 = vadd.f32 %v1112, %v2069
    %2071 = vdwg.mxu0
    %2072 = vmatprep.subr.mxu0 %v618
    %2073 = vmatpush1.msra.mxu0 %v617
    %2074 = vmatprep.subr.mxu0 %v632
    %2075 = vmatpush1.msra.mxu0 %v631
    %2076 = vmatprep.subr.mxu0 %v646
    %2077 = vmatpush1.msra.mxu0 %v645
    %2078 = vmatprep.subr.mxu0 %v660
    %2079 = vmatpush1.msra.mxu0 %v659
    %2080 = vmatprep.subr.mxu0 %v674
    %2081 = vmatpush1.msra.mxu0 %v673
    %2082 = vmatprep.subr.mxu0 %v688
    %2083 = vmatpush1.msra.mxu0 %v687
    %2084 = vmatprep.subr.mxu0 %v702
    %2085 = vmatpush1.msra.mxu0 %v701
    %2086 = vmatprep.subr.mxu0 %v716
    %2087 = vmatpush1.msra.mxu0 %v715
    %2088 = vmatprep.subr.mxu0 %v730
    %2089 = vmatpush1.msra.mxu0 %v729
    %2090 = vmatprep.subr.mxu0 %v744
    %2091 = vmatpush1.msra.mxu0 %v743
    %2092 = vmatprep.subr.mxu0 %v758
    %2093 = vmatpush1.msra.mxu0 %v757
    %2094 = vmatprep.subr.mxu0 %v772
    %2095 = vmatpush1.msra.mxu0 %v771
    %2096 = vmatprep.subr.mxu0 %v786
    %2097 = vmatpush1.msra.mxu0 %v785
    %2098 = vmatprep.subr.mxu0 %v800
    %2099 = vmatpush1.msra.mxu0 %v799
    %2100 = vmatprep.subr.mxu0 %v814
    %2101 = vmatpush1.msra.mxu0 %v813
    %2102 = vmatprep.subr.mxu0 %v828
    %2103 = vmatpush1.msra.mxu0 %v827
    %2104 = vmatprep.subr.mxu0 %v842
    %2105 = vmatpush1.msra.mxu0 %v841
    %2106 = vmatprep.subr.mxu0 %v856
    %2107 = vmatpush1.msra.mxu0 %v855
    %2108 = vmatprep.subr.mxu0 %v870
    %2109 = vmatpush1.msra.mxu0 %v869
    %2110 = vmatprep.subr.mxu0 %v884
    %2111 = vmatpush1.msra.mxu0 %v883
    %2112 = vmatprep.subr.mxu0 %v898
    %2113 = vmatpush1.msra.mxu0 %v897
    %2114 = vmatprep.subr.mxu0 %v912
    %2115 = vmatpush1.msra.mxu0 %v911
    %2116 = vmatprep.subr.mxu0 %v926
    %2117 = vmatpush1.msra.mxu0 %v925
    %2118 = vmatprep.subr.mxu0 %v940
    %2119 = vmatpush1.msra.mxu0 %v939
    %2120 = vmatprep.subr.mxu0 %v954
    %2121 = vmatpush1.msra.mxu0 %v953
    %2122 = vmatprep.subr.mxu0 %v968
    %2123 = vmatpush1.msra.mxu0 %v967
    %2124 = vmatprep.subr.mxu0 %v982
    %2125 = vmatpush1.msra.mxu0 %v981
    %2126 = vmatprep.subr.mxu0 %v996
    %2127 = vmatpush1.msra.mxu0 %v995
    %2128 = vmatprep.subr.mxu0 %v1010
    %2129 = vmatpush1.msra.mxu0 %v1009
    %2130 = vmatprep.subr.mxu0 %v1024
    %2131 = vmatpush1.msra.mxu0 %v1023
    %2132 = vmatprep.subr.mxu0 %v1038
    %2133 = vmatpush1.msra.mxu0 %v1037
    %2134 = vmatprep.subr.mxu0 %v1052
    %2135 = vmatpush1.msra.mxu0 %v1051
    %2136 = vmatprep.mubr.f32.mxu0 %v1144
    %2137 = vmatmul.mubr.f32.gmra.mrb[0].mxu0 %v1142
    %v2138 = vpop.f32.mrb[0].mxu0
    %v2139 = vadd.f32 %v2068, %v2138
    %v2140 = vpop.f32.mrb[0].mxu0
    %v2141 = vadd.f32 %v2070, %v2140
    %2142 = vdwg.mxu0
    %v2157 = vcombine.low %v1287, %v1289
    %v2158 = vcombine.low %v1429, %v1431
    %v2160 = vunpack.c.l.s4 1983009808
    %v2161 = vunpack.c.0.s8 %v2160
    %v2162 = vlaneseq
    %v2163 = vshrl.u32 %v2162, 7
    %v2164 = vsub.s32 %v2161, %v2163
    %v2165 = vrot.slane %v2157, %v2164
    %v2167 = vunpack.c.l.s4 1983009808
    %v2168 = vunpack.c.0.s8 %v2167
    %v2169 = vlaneseq
    %v2170 = vshrl.u32 %v2169, 7
    %v2171 = vsub.s32 %v2168, %v2170
    %v2172 = vrot.slane %v2158, %v2171
    %v2173 = vcombine.low %v2165, %v2172
    %v2174 = vcombine.low %v1571, %v1573
    %v2175 = vcombine.low %v1713, %v1715
    %v2177 = vunpack.c.l.s4 1983009808
    %v2178 = vunpack.c.0.s8 %v2177
    %v2179 = vlaneseq
    %v2180 = vshrl.u32 %v2179, 7
    %v2181 = vsub.s32 %v2178, %v2180
    %v2182 = vrot.slane %v2174, %v2181
    %v2184 = vunpack.c.l.s4 1983009808
    %v2185 = vunpack.c.0.s8 %v2184
    %v2186 = vlaneseq
    %v2187 = vshrl.u32 %v2186, 7
    %v2188 = vsub.s32 %v2185, %v2187
    %v2189 = vrot.slane %v2175, %v2188
    %v2190 = vcombine.low %v2182, %v2189
    %v2191 = vcombine.low %v1855, %v1857
    %v2192 = vcombine.low %v1997, %v1999
    %v2194 = vunpack.c.l.s4 1983009808
    %v2195 = vunpack.c.0.s8 %v2194
    %v2196 = vlaneseq
    %v2197 = vshrl.u32 %v2196, 7
    %v2198 = vsub.s32 %v2195, %v2197
    %v2199 = vrot.slane %v2191, %v2198
    %v2201 = vunpack.c.l.s4 1983009808
    %v2202 = vunpack.c.0.s8 %v2201
    %v2203 = vlaneseq
    %v2204 = vshrl.u32 %v2203, 7
    %v2205 = vsub.s32 %v2202, %v2204
    %v2206 = vrot.slane %v2192, %v2205
    %v2207 = vcombine.low %v2199, %v2206
    %v2208 = vcombine.low %v2139, %v2141
    %v2210 = vunpack.c.l.s4 1983009808
    %v2211 = vunpack.c.0.s8 %v2210
    %v2212 = vlaneseq
    %v2213 = vshrl.u32 %v2212, 7
    %v2214 = vsub.s32 %v2211, %v2213
    %v2215 = vrot.slane %v2208, %v2214
    %2220 = vst [vmem:[%s13] sm:$0xff] %v2173
    %2221 = vst [vmem:[%s13 + $0x8] sm:$0xff] %v2190
    %2222 = vst [vmem:[%s13 + $0x10] sm:$0xff] %v2207
    %2223 = vst [vmem:[%s13 + $0x18] sm:$0xf] %v2215
    %v2224 = vld [vmem:[%s1] sm:$0xf]
    %v2225 = vld [vmem:[#allocation7] sm:$0xff]
    %v2226 = vld [vmem:[#allocation7 + $0x8] sm:$0xff]
    %v2227 = vld [vmem:[#allocation7 + $0x10] sm:$0xff]
    %v2228 = vld [vmem:[#allocation7 + $0x18] sm:$0xff]
    %v2229 = vld [vmem:[#allocation7 + $0x20] sm:$0xff]
    %v2230 = vld [vmem:[#allocation7 + $0x28] sm:$0xff]
    %v2231 = vld [vmem:[#allocation7 + $0x30] sm:$0xff]
    %v2232 = vld [vmem:[#allocation7 + $0x38] sm:$0xff]
    %v2233 = vld [vmem:[#allocation7 + $0x40] sm:$0xff]
    %v2234 = vld [vmem:[#allocation7 + $0x48] sm:$0xff]
    %v2235 = vld [vmem:[#allocation7 + $0x50] sm:$0xff]
    %v2236 = vld [vmem:[#allocation7 + $0x58] sm:$0xff]
    %v2237 = vld [vmem:[#allocation7 + $0x60] sm:$0xff]
    %v2238 = vld [vmem:[#allocation7 + $0x68] sm:$0xff]
    %v2239 = vld [vmem:[#allocation7 + $0x70] sm:$0xff]
    %v2240 = vld [vmem:[#allocation7 + $0x78] sm:$0xff]
    %v2241 = vld [vmem:[#allocation7 + $0x80] sm:$0xff]
    %v2242 = vld [vmem:[#allocation7 + $0x88] sm:$0xff]
    %v2243 = vld [vmem:[#allocation7 + $0x90] sm:$0xff]
    %v2244 = vld [vmem:[#allocation7 + $0x98] sm:$0xff]
    %v2245 = vld [vmem:[#allocation7 + $0xa0] sm:$0xff]
    %v2246 = vld [vmem:[#allocation7 + $0xa8] sm:$0xff]
    %v2247 = vld [vmem:[#allocation7 + $0xb0] sm:$0xff]
    %v2248 = vld [vmem:[#allocation7 + $0xb8] sm:$0xff]
    %v2249 = vld [vmem:[#allocation7 + $0xc0] sm:$0xff]
    %v2250 = vld [vmem:[#allocation7 + $0xc8] sm:$0xff]
    %v2251 = vld [vmem:[#allocation7 + $0xd0] sm:$0xff]
    %v2252 = vld [vmem:[#allocation7 + $0xd8] sm:$0xff]
    %v2253 = vld [vmem:[#allocation7 + $0xe0] sm:$0xff]
    %v2254 = vld [vmem:[#allocation7 + $0xe8] sm:$0xff]
    %v2255 = vld [vmem:[#allocation7 + $0xf0] sm:$0xff]
    %v2256 = vld [vmem:[#allocation7 + $0xf8] sm:$0xff]
    %v2257 = vld [vmem:[#allocation7 + $0x100] sm:$0xff]
    %v2258 = vld [vmem:[#allocation7 + $0x108] sm:$0xff]
    %v2259 = vld [vmem:[#allocation7 + $0x110] sm:$0xff]
    %v2260 = vld [vmem:[#allocation7 + $0x118] sm:$0xff]
    %v2261 = vld [vmem:[#allocation7 + $0x120] sm:$0xff]
    %v2262 = vld [vmem:[#allocation7 + $0x128] sm:$0xff]
    %v2263 = vld [vmem:[#allocation7 + $0x130] sm:$0xff]
    %v2264 = vld [vmem:[#allocation7 + $0x138] sm:$0xff]
    %v2265 = vld [vmem:[#allocation7 + $0x140] sm:$0xff]
    %v2266 = vld [vmem:[#allocation7 + $0x148] sm:$0xff]
    %v2267 = vld [vmem:[#allocation7 + $0x150] sm:$0xff]
    %v2268 = vld [vmem:[#allocation7 + $0x158] sm:$0xff]
    %v2269 = vld [vmem:[#allocation7 + $0x160] sm:$0xff]
    %v2270 = vld [vmem:[#allocation7 + $0x168] sm:$0xff]
    %v2271 = vld [vmem:[#allocation7 + $0x170] sm:$0xff]
    %v2272 = vld [vmem:[#allocation7 + $0x178] sm:$0xff]
    %v2273 = vld [vmem:[#allocation7 + $0x180] sm:$0xff]
    %v2274 = vld [vmem:[#allocation7 + $0x188] sm:$0xff]
    %v2275 = vld [vmem:[#allocation7 + $0x190] sm:$0xff]
    %v2276 = vld [vmem:[#allocation7 + $0x198] sm:$0xff]
    %v2277 = vld [vmem:[#allocation7 + $0x1a0] sm:$0xff]
    %v2278 = vld [vmem:[#allocation7 + $0x1a8] sm:$0xff]
    %v2279 = vld [vmem:[#allocation7 + $0x1b0] sm:$0xff]
    %v2280 = vld [vmem:[#allocation7 + $0x1b8] sm:$0xff]
    %v2281 = vld [vmem:[#allocation7 + $0x1c0] sm:$0xff]
    %v2282 = vld [vmem:[#allocation7 + $0x1c8] sm:$0xff]
    %v2283 = vld [vmem:[#allocation7 + $0x1d0] sm:$0xff]
    %v2284 = vld [vmem:[#allocation7 + $0x1d8] sm:$0xff]
    %v2285 = vld [vmem:[#allocation7 + $0x1e0] sm:$0xff]
    %v2286 = vld [vmem:[#allocation7 + $0x1e8] sm:$0xff]
    %v2287 = vld [vmem:[#allocation7 + $0x1f0] sm:$0xff]
    %v2288 = vld [vmem:[#allocation7 + $0x1f8] sm:$0xff]
    %v2289 = vld [vmem:[#allocation7 + $0x200] sm:$0xff]
    %v2290 = vld [vmem:[#allocation7 + $0x208] sm:$0xff]
    %v2291 = vld [vmem:[#allocation7 + $0x210] sm:$0xff]
    %v2292 = vld [vmem:[#allocation7 + $0x218] sm:$0xff]
    %v2293 = vld [vmem:[#allocation7 + $0x220] sm:$0xff]
    %v2294 = vld [vmem:[#allocation7 + $0x228] sm:$0xff]
    %v2295 = vld [vmem:[#allocation7 + $0x230] sm:$0xff]
    %v2296 = vld [vmem:[#allocation7 + $0x238] sm:$0xff]
    %v2297 = vld [vmem:[#allocation7 + $0x240] sm:$0xff]
    %v2298 = vld [vmem:[#allocation7 + $0x248] sm:$0xff]
    %v2299 = vld [vmem:[#allocation7 + $0x250] sm:$0xff]
    %v2300 = vld [vmem:[#allocation7 + $0x258] sm:$0xff]
    %v2301 = vld [vmem:[#allocation7 + $0x260] sm:$0xff]
    %v2302 = vld [vmem:[#allocation7 + $0x268] sm:$0xff]
    %v2303 = vld [vmem:[#allocation7 + $0x270] sm:$0xff]
    %v2304 = vld [vmem:[#allocation7 + $0x278] sm:$0xff]
    %v2305 = vld [vmem:[#allocation7 + $0x280] sm:$0xff]
    %v2306 = vld [vmem:[#allocation7 + $0x288] sm:$0xff]
    %v2307 = vld [vmem:[#allocation7 + $0x290] sm:$0xff]
    %v2308 = vld [vmem:[#allocation7 + $0x298] sm:$0xff]
    %v2309 = vld [vmem:[#allocation7 + $0x2a0] sm:$0xff]
    %v2310 = vld [vmem:[#allocation7 + $0x2a8] sm:$0xff]
    %v2311 = vld [vmem:[#allocation7 + $0x2b0] sm:$0xff]
    %v2312 = vld [vmem:[#allocation7 + $0x2b8] sm:$0xff]
    %v2313 = vld [vmem:[#allocation7 + $0x2c0] sm:$0xff]
    %v2314 = vld [vmem:[#allocation7 + $0x2c8] sm:$0xff]
    %v2315 = vld [vmem:[#allocation7 + $0x2d0] sm:$0xff]
    %v2316 = vld [vmem:[#allocation7 + $0x2d8] sm:$0xff]
    %v2317 = vld [vmem:[#allocation7 + $0x2e0] sm:$0xff]
    %v2318 = vld [vmem:[#allocation7 + $0x2e8] sm:$0xff]
    %v2319 = vld [vmem:[#allocation7 + $0x2f0] sm:$0xff]
    %v2320 = vld [vmem:[#allocation7 + $0x2f8] sm:$0xff]
    %v2321 = vld [vmem:[#allocation7 + $0x300] sm:$0xff]
    %v2322 = vld [vmem:[#allocation7 + $0x308] sm:$0xff]
    %v2323 = vld [vmem:[#allocation7 + $0x310] sm:$0xff]
    %v2324 = vld [vmem:[#allocation7 + $0x318] sm:$0xff]
    %v2325 = vld [vmem:[#allocation7 + $0x320] sm:$0xff]
    %v2326 = vld [vmem:[#allocation7 + $0x328] sm:$0xff]
    %v2327 = vld [vmem:[#allocation7 + $0x330] sm:$0xff]
    %v2328 = vld [vmem:[#allocation7 + $0x338] sm:$0xff]
    %v2329 = vld [vmem:[#allocation7 + $0x340] sm:$0xff]
    %v2330 = vld [vmem:[#allocation7 + $0x348] sm:$0xff]
    %v2331 = vld [vmem:[#allocation7 + $0x350] sm:$0xff]
    %v2332 = vld [vmem:[#allocation7 + $0x358] sm:$0xff]
    %v2333 = vld [vmem:[#allocation7 + $0x360] sm:$0xff]
    %v2334 = vld [vmem:[#allocation7 + $0x368] sm:$0xff]
    %v2335 = vld [vmem:[#allocation7 + $0x370] sm:$0xff]
    %v2336 = vld [vmem:[#allocation7 + $0x378] sm:$0xff]
    %v2337 = vld [vmem:[#allocation7 + $0x380] sm:$0xff]
    %v2338 = vld [vmem:[#allocation7 + $0x388] sm:$0xff]
    %v2339 = vld [vmem:[#allocation7 + $0x390] sm:$0xff]
    %v2340 = vld [vmem:[#allocation7 + $0x398] sm:$0xff]
    %v2341 = vld [vmem:[#allocation7 + $0x3a0] sm:$0xff]
    %v2342 = vld [vmem:[#allocation7 + $0x3a8] sm:$0xff]
    %v2343 = vld [vmem:[#allocation7 + $0x3b0] sm:$0xff]
    %v2344 = vld [vmem:[#allocation7 + $0x3b8] sm:$0xff]
    %v2345 = vld [vmem:[#allocation7 + $0x3c0] sm:$0xff]
    %v2346 = vld [vmem:[#allocation7 + $0x3c8] sm:$0xff]
    %v2347 = vld [vmem:[#allocation7 + $0x3d0] sm:$0xff]
    %v2348 = vld [vmem:[#allocation7 + $0x3d8] sm:$0xff]
    %v2349 = vld [vmem:[#allocation7 + $0x3e0] sm:$0xff]
    %v2350 = vld [vmem:[#allocation7 + $0x3e8] sm:$0xff]
    %v2351 = vld [vmem:[#allocation7 + $0x3f0] sm:$0xff]
    %v2352 = vld [vmem:[#allocation7 + $0x3f8] sm:$0xff]
    %v2353 = vld [vmem:[#allocation7 + $0x400] sm:$0xff]
    %v2354 = vld [vmem:[#allocation7 + $0x408] sm:$0xff]
    %v2355 = vld [vmem:[#allocation7 + $0x410] sm:$0xff]
    %v2356 = vld [vmem:[#allocation7 + $0x418] sm:$0xff]
    %v2357 = vld [vmem:[#allocation7 + $0x420] sm:$0xff]
    %v2358 = vld [vmem:[#allocation7 + $0x428] sm:$0xff]
    %v2359 = vld [vmem:[#allocation7 + $0x430] sm:$0xff]
    %v2360 = vld [vmem:[#allocation7 + $0x438] sm:$0xff]
    %v2361 = vld [vmem:[#allocation7 + $0x440] sm:$0xff]
    %v2362 = vld [vmem:[#allocation7 + $0x448] sm:$0xff]
    %v2363 = vld [vmem:[#allocation7 + $0x450] sm:$0xff]
    %v2364 = vld [vmem:[#allocation7 + $0x458] sm:$0xff]
    %v2365 = vld [vmem:[#allocation7 + $0x460] sm:$0xff]
    %v2366 = vld [vmem:[#allocation7 + $0x468] sm:$0xff]
    %v2367 = vld [vmem:[#allocation7 + $0x470] sm:$0xff]
    %v2368 = vld [vmem:[#allocation7 + $0x478] sm:$0xff]
    %v2369 = vld [vmem:[#allocation7 + $0x480] sm:$0xff]
    %v2370 = vld [vmem:[#allocation7 + $0x488] sm:$0xff]
    %v2371 = vld [vmem:[#allocation7 + $0x490] sm:$0xff]
    %v2372 = vld [vmem:[#allocation7 + $0x498] sm:$0xff]
    %v2373 = vld [vmem:[#allocation7 + $0x4a0] sm:$0xff]
    %v2374 = vld [vmem:[#allocation7 + $0x4a8] sm:$0xff]
    %v2375 = vld [vmem:[#allocation7 + $0x4b0] sm:$0xff]
    %v2376 = vld [vmem:[#allocation7 + $0x4b8] sm:$0xff]
    %v2377 = vld [vmem:[#allocation7 + $0x4c0] sm:$0xff]
    %v2378 = vld [vmem:[#allocation7 + $0x4c8] sm:$0xff]
    %v2379 = vld [vmem:[#allocation7 + $0x4d0] sm:$0xff]
    %v2380 = vld [vmem:[#allocation7 + $0x4d8] sm:$0xff]
    %v2381 = vld [vmem:[#allocation7 + $0x4e0] sm:$0xff]
    %v2382 = vld [vmem:[#allocation7 + $0x4e8] sm:$0xff]
    %v2383 = vld [vmem:[#allocation7 + $0x4f0] sm:$0xff]
    %v2384 = vld [vmem:[#allocation7 + $0x4f8] sm:$0xff]
    %v2385 = vld [vmem:[#allocation7 + $0x500] sm:$0xff]
    %v2386 = vld [vmem:[#allocation7 + $0x508] sm:$0xff]
    %v2387 = vld [vmem:[#allocation7 + $0x510] sm:$0xff]
    %v2388 = vld [vmem:[#allocation7 + $0x518] sm:$0xff]
    %v2389 = vld [vmem:[#allocation7 + $0x520] sm:$0xff]
    %v2390 = vld [vmem:[#allocation7 + $0x528] sm:$0xff]
    %v2391 = vld [vmem:[#allocation7 + $0x530] sm:$0xff]
    %v2392 = vld [vmem:[#allocation7 + $0x538] sm:$0xff]
    %v2393 = vld [vmem:[#allocation7 + $0x540] sm:$0xff]
    %v2394 = vld [vmem:[#allocation7 + $0x548] sm:$0xff]
    %v2395 = vld [vmem:[#allocation7 + $0x550] sm:$0xff]
    %v2396 = vld [vmem:[#allocation7 + $0x558] sm:$0xff]
    %v2397 = vld [vmem:[#allocation7 + $0x560] sm:$0xff]
    %v2398 = vld [vmem:[#allocation7 + $0x568] sm:$0xff]
    %v2399 = vld [vmem:[#allocation7 + $0x570] sm:$0xff]
    %v2400 = vld [vmem:[#allocation7 + $0x578] sm:$0xff]
    %v2401 = vld [vmem:[#allocation7 + $0x580] sm:$0xff]
    %v2402 = vld [vmem:[#allocation7 + $0x588] sm:$0xff]
    %v2403 = vld [vmem:[#allocation7 + $0x590] sm:$0xff]
    %v2404 = vld [vmem:[#allocation7 + $0x598] sm:$0xff]
    %v2405 = vld [vmem:[#allocation7 + $0x5a0] sm:$0xff]
    %v2406 = vld [vmem:[#allocation7 + $0x5a8] sm:$0xff]
    %v2407 = vld [vmem:[#allocation7 + $0x5b0] sm:$0xff]
    %v2408 = vld [vmem:[#allocation7 + $0x5b8] sm:$0xff]
    %v2409 = vld [vmem:[#allocation7 + $0x5c0] sm:$0xff]
    %v2410 = vld [vmem:[#allocation7 + $0x5c8] sm:$0xff]
    %v2411 = vld [vmem:[#allocation7 + $0x5d0] sm:$0xff]
    %v2412 = vld [vmem:[#allocation7 + $0x5d8] sm:$0xff]
    %v2413 = vld [vmem:[#allocation7 + $0x5e0] sm:$0xff]
    %v2414 = vld [vmem:[#allocation7 + $0x5e8] sm:$0xff]
    %v2415 = vld [vmem:[#allocation7 + $0x5f0] sm:$0xff]
    %v2416 = vld [vmem:[#allocation7 + $0x5f8] sm:$0xff]
    %v2417 = vld [vmem:[#allocation15 + $0xe] sm:$0x3f]
    %v2419 = vlaneseq
    %v2420 = vshrl.u32 %v2419, 7
    %v2421 = vsub.s32 0, %v2420
    %v2422 = vrot.slane %v2417, %v2421
    %v2423 = vlaneseq
    %v2424 = vshrl.u32 %v2423, 7
    %v2425 = vsub.s32 1, %v2424
    %v2426 = vrot.slane %v2417, %v2425
    %v2427 = vlaneseq
    %v2428 = vshrl.u32 %v2427, 7
    %v2429 = vsub.s32 2, %v2428
    %v2430 = vrot.slane %v2417, %v2429
    %v2431 = vlaneseq
    %v2432 = vshrl.u32 %v2431, 7
    %v2433 = vsub.s32 3, %v2432
    %v2434 = vrot.slane %v2417, %v2433
    %v2435 = vlaneseq
    %v2436 = vshrl.u32 %v2435, 7
    %v2437 = vsub.s32 4, %v2436
    %v2438 = vrot.slane %v2417, %v2437
    %v2439 = vlaneseq
    %v2440 = vshrl.u32 %v2439, 7
    %v2441 = vsub.s32 5, %v2440
    %v2442 = vrot.slane %v2417, %v2441
    %v2451 = vunpack.c.l.s4 1983009808
    %v2452 = vunpack.c.0.s8 %v2451
    %v2453 = vlaneseq
    %v2454 = vshrl.u32 %v2453, 7
    %v2455 = vsub.s32 %v2452, %v2454
    %v2456 = vrot.slane %v2224, %v2455
    %v2457 = vcombine.high %v2456, %v2456
    %2460 = vmatprep.subr.mxu0 %v2226
    %2461 = vmatpush1.msra.mxu0 %v2225
    %2462 = vmatprep.subr.mxu0 %v2232
    %2463 = vmatpush1.msra.mxu0 %v2231
    %2464 = vmatprep.subr.mxu0 %v2238
    %2465 = vmatpush1.msra.mxu0 %v2237
    %2466 = vmatprep.subr.mxu0 %v2244
    %2467 = vmatpush1.msra.mxu0 %v2243
    %2468 = vmatprep.subr.mxu0 %v2250
    %2469 = vmatpush1.msra.mxu0 %v2249
    %2470 = vmatprep.subr.mxu0 %v2256
    %2471 = vmatpush1.msra.mxu0 %v2255
    %2472 = vmatprep.subr.mxu0 %v2262
    %2473 = vmatpush1.msra.mxu0 %v2261
    %2474 = vmatprep.subr.mxu0 %v2268
    %2475 = vmatpush1.msra.mxu0 %v2267
    %2476 = vmatprep.subr.mxu0 %v2274
    %2477 = vmatpush1.msra.mxu0 %v2273
    %2478 = vmatprep.subr.mxu0 %v2280
    %2479 = vmatpush1.msra.mxu0 %v2279
    %2480 = vmatprep.subr.mxu0 %v2286
    %2481 = vmatpush1.msra.mxu0 %v2285
    %2482 = vmatprep.subr.mxu0 %v2292
    %2483 = vmatpush1.msra.mxu0 %v2291
    %2484 = vmatprep.subr.mxu0 %v2298
    %2485 = vmatpush1.msra.mxu0 %v2297
    %2486 = vmatprep.subr.mxu0 %v2304
    %2487 = vmatpush1.msra.mxu0 %v2303
    %2488 = vmatprep.subr.mxu0 %v2310
    %2489 = vmatpush1.msra.mxu0 %v2309
    %2490 = vmatprep.subr.mxu0 %v2316
    %2491 = vmatpush1.msra.mxu0 %v2315
    %2492 = vmatprep.subr.mxu0 %v2322
    %2493 = vmatpush1.msra.mxu0 %v2321
    %2494 = vmatprep.subr.mxu0 %v2328
    %2495 = vmatpush1.msra.mxu0 %v2327
    %2496 = vmatprep.subr.mxu0 %v2334
    %2497 = vmatpush1.msra.mxu0 %v2333
    %2498 = vmatprep.subr.mxu0 %v2340
    %2499 = vmatpush1.msra.mxu0 %v2339
    %2500 = vmatprep.subr.mxu0 %v2346
    %2501 = vmatpush1.msra.mxu0 %v2345
    %2502 = vmatprep.subr.mxu0 %v2352
    %2503 = vmatpush1.msra.mxu0 %v2351
    %2504 = vmatprep.subr.mxu0 %v2358
    %2505 = vmatpush1.msra.mxu0 %v2357
    %2506 = vmatprep.subr.mxu0 %v2364
    %2507 = vmatpush1.msra.mxu0 %v2363
    %2508 = vmatprep.subr.mxu0 %v2370
    %2509 = vmatpush1.msra.mxu0 %v2369
    %2510 = vmatprep.subr.mxu0 %v2376
    %2511 = vmatpush1.msra.mxu0 %v2375
    %2512 = vmatprep.subr.mxu0 %v2382
    %2513 = vmatpush1.msra.mxu0 %v2381
    %2514 = vmatprep.subr.mxu0 %v2388
    %2515 = vmatpush1.msra.mxu0 %v2387
    %2516 = vmatprep.subr.mxu0 %v2394
    %2517 = vmatpush1.msra.mxu0 %v2393
    %2518 = vmatprep.subr.mxu0 %v2400
    %2519 = vmatpush1.msra.mxu0 %v2399
    %2520 = vmatprep.subr.mxu0 %v2406
    %2521 = vmatpush1.msra.mxu0 %v2405
    %2522 = vmatprep.subr.mxu0 %v2412
    %2523 = vmatpush1.msra.mxu0 %v2411
    %2524 = vmatprep.mubr.f32.mxu0 %v2457
    %2525 = vmatmul.mubr.f32.gmra.mrb[0].mxu0 %v2456
    %v2526 = vpop.f32.mrb[0].mxu0
    %v2527 = vadd.f32 %v2422, %v2526
    %v2528 = vpop.f32.mrb[0].mxu0
    %v2529 = vadd.f32 %v2426, %v2528
    %2530 = vdwg.mxu0
    %2531 = vmatprep.subr.mxu0 %v2228
    %2532 = vmatpush1.msra.mxu0 %v2227
    %2533 = vmatprep.subr.mxu0 %v2234
    %2534 = vmatpush1.msra.mxu0 %v2233
    %2535 = vmatprep.subr.mxu0 %v2240
    %2536 = vmatpush1.msra.mxu0 %v2239
    %2537 = vmatprep.subr.mxu0 %v2246
    %2538 = vmatpush1.msra.mxu0 %v2245
    %2539 = vmatprep.subr.mxu0 %v2252
    %2540 = vmatpush1.msra.mxu0 %v2251
    %2541 = vmatprep.subr.mxu0 %v2258
    %2542 = vmatpush1.msra.mxu0 %v2257
    %2543 = vmatprep.subr.mxu0 %v2264
    %2544 = vmatpush1.msra.mxu0 %v2263
    %2545 = vmatprep.subr.mxu0 %v2270
    %2546 = vmatpush1.msra.mxu0 %v2269
    %2547 = vmatprep.subr.mxu0 %v2276
    %2548 = vmatpush1.msra.mxu0 %v2275
    %2549 = vmatprep.subr.mxu0 %v2282
    %2550 = vmatpush1.msra.mxu0 %v2281
    %2551 = vmatprep.subr.mxu0 %v2288
    %2552 = vmatpush1.msra.mxu0 %v2287
    %2553 = vmatprep.subr.mxu0 %v2294
    %2554 = vmatpush1.msra.mxu0 %v2293
    %2555 = vmatprep.subr.mxu0 %v2300
    %2556 = vmatpush1.msra.mxu0 %v2299
    %2557 = vmatprep.subr.mxu0 %v2306
    %2558 = vmatpush1.msra.mxu0 %v2305
    %2559 = vmatprep.subr.mxu0 %v2312
    %2560 = vmatpush1.msra.mxu0 %v2311
    %2561 = vmatprep.subr.mxu0 %v2318
    %2562 = vmatpush1.msra.mxu0 %v2317
    %2563 = vmatprep.subr.mxu0 %v2324
    %2564 = vmatpush1.msra.mxu0 %v2323
    %2565 = vmatprep.subr.mxu0 %v2330
    %2566 = vmatpush1.msra.mxu0 %v2329
    %2567 = vmatprep.subr.mxu0 %v2336
    %2568 = vmatpush1.msra.mxu0 %v2335
    %2569 = vmatprep.subr.mxu0 %v2342
    %2570 = vmatpush1.msra.mxu0 %v2341
    %2571 = vmatprep.subr.mxu0 %v2348
    %2572 = vmatpush1.msra.mxu0 %v2347
    %2573 = vmatprep.subr.mxu0 %v2354
    %2574 = vmatpush1.msra.mxu0 %v2353
    %2575 = vmatprep.subr.mxu0 %v2360
    %2576 = vmatpush1.msra.mxu0 %v2359
    %2577 = vmatprep.subr.mxu0 %v2366
    %2578 = vmatpush1.msra.mxu0 %v2365
    %2579 = vmatprep.subr.mxu0 %v2372
    %2580 = vmatpush1.msra.mxu0 %v2371
    %2581 = vmatprep.subr.mxu0 %v2378
    %2582 = vmatpush1.msra.mxu0 %v2377
    %2583 = vmatprep.subr.mxu0 %v2384
    %2584 = vmatpush1.msra.mxu0 %v2383
    %2585 = vmatprep.subr.mxu0 %v2390
    %2586 = vmatpush1.msra.mxu0 %v2389
    %2587 = vmatprep.subr.mxu0 %v2396
    %2588 = vmatpush1.msra.mxu0 %v2395
    %2589 = vmatprep.subr.mxu0 %v2402
    %2590 = vmatpush1.msra.mxu0 %v2401
    %2591 = vmatprep.subr.mxu0 %v2408
    %2592 = vmatpush1.msra.mxu0 %v2407
    %2593 = vmatprep.subr.mxu0 %v2414
    %2594 = vmatpush1.msra.mxu0 %v2413
    %2595 = vmatprep.mubr.f32.mxu0 %v2457
    %2596 = vmatmul.mubr.f32.gmra.mrb[0].mxu0 %v2456
    %v2597 = vpop.f32.mrb[0].mxu0
    %v2598 = vadd.f32 %v2430, %v2597
    %v2599 = vpop.f32.mrb[0].mxu0
    %v2600 = vadd.f32 %v2434, %v2599
    %2601 = vdwg.mxu0
    %2602 = vmatprep.subr.mxu0 %v2230
    %2603 = vmatpush1.msra.mxu0 %v2229
    %2604 = vmatprep.subr.mxu0 %v2236
    %2605 = vmatpush1.msra.mxu0 %v2235
    %2606 = vmatprep.subr.mxu0 %v2242
    %2607 = vmatpush1.msra.mxu0 %v2241
    %2608 = vmatprep.subr.mxu0 %v2248
    %2609 = vmatpush1.msra.mxu0 %v2247
    %2610 = vmatprep.subr.mxu0 %v2254
    %2611 = vmatpush1.msra.mxu0 %v2253
    %2612 = vmatprep.subr.mxu0 %v2260
    %2613 = vmatpush1.msra.mxu0 %v2259
    %2614 = vmatprep.subr.mxu0 %v2266
    %2615 = vmatpush1.msra.mxu0 %v2265
    %2616 = vmatprep.subr.mxu0 %v2272
    %2617 = vmatpush1.msra.mxu0 %v2271
    %2618 = vmatprep.subr.mxu0 %v2278
    %2619 = vmatpush1.msra.mxu0 %v2277
    %2620 = vmatprep.subr.mxu0 %v2284
    %2621 = vmatpush1.msra.mxu0 %v2283
    %2622 = vmatprep.subr.mxu0 %v2290
    %2623 = vmatpush1.msra.mxu0 %v2289
    %2624 = vmatprep.subr.mxu0 %v2296
    %2625 = vmatpush1.msra.mxu0 %v2295
    %2626 = vmatprep.subr.mxu0 %v2302
    %2627 = vmatpush1.msra.mxu0 %v2301
    %2628 = vmatprep.subr.mxu0 %v2308
    %2629 = vmatpush1.msra.mxu0 %v2307
    %2630 = vmatprep.subr.mxu0 %v2314
    %2631 = vmatpush1.msra.mxu0 %v2313
    %2632 = vmatprep.subr.mxu0 %v2320
    %2633 = vmatpush1.msra.mxu0 %v2319
    %2634 = vmatprep.subr.mxu0 %v2326
    %2635 = vmatpush1.msra.mxu0 %v2325
    %2636 = vmatprep.subr.mxu0 %v2332
    %2637 = vmatpush1.msra.mxu0 %v2331
    %2638 = vmatprep.subr.mxu0 %v2338
    %2639 = vmatpush1.msra.mxu0 %v2337
    %2640 = vmatprep.subr.mxu0 %v2344
    %2641 = vmatpush1.msra.mxu0 %v2343
    %2642 = vmatprep.subr.mxu0 %v2350
    %2643 = vmatpush1.msra.mxu0 %v2349
    %2644 = vmatprep.subr.mxu0 %v2356
    %2645 = vmatpush1.msra.mxu0 %v2355
    %2646 = vmatprep.subr.mxu0 %v2362
    %2647 = vmatpush1.msra.mxu0 %v2361
    %2648 = vmatprep.subr.mxu0 %v2368
    %2649 = vmatpush1.msra.mxu0 %v2367
    %2650 = vmatprep.subr.mxu0 %v2374
    %2651 = vmatpush1.msra.mxu0 %v2373
    %2652 = vmatprep.subr.mxu0 %v2380
    %2653 = vmatpush1.msra.mxu0 %v2379
    %2654 = vmatprep.subr.mxu0 %v2386
    %2655 = vmatpush1.msra.mxu0 %v2385
    %2656 = vmatprep.subr.mxu0 %v2392
    %2657 = vmatpush1.msra.mxu0 %v2391
    %2658 = vmatprep.subr.mxu0 %v2398
    %2659 = vmatpush1.msra.mxu0 %v2397
    %2660 = vmatprep.subr.mxu0 %v2404
    %2661 = vmatpush1.msra.mxu0 %v2403
    %2662 = vmatprep.subr.mxu0 %v2410
    %2663 = vmatpush1.msra.mxu0 %v2409
    %2664 = vmatprep.subr.mxu0 %v2416
    %2665 = vmatpush1.msra.mxu0 %v2415
    %2666 = vmatprep.mubr.f32.mxu0 %v2457
    %2667 = vmatmul.mubr.f32.gmra.mrb[0].mxu0 %v2456
    %v2668 = vpop.f32.mrb[0].mxu0
    %v2669 = vadd.f32 %v2438, %v2668
    %v2670 = vpop.f32.mrb[0].mxu0
    %v2671 = vadd.f32 %v2442, %v2670
    %2672 = vdwg.mxu0
    %v2679 = vcombine.low %v2527, %v2529
    %v2680 = vcombine.low %v2598, %v2600
    %v2682 = vunpack.c.l.s4 1983009808
    %v2683 = vunpack.c.0.s8 %v2682
    %v2684 = vlaneseq
    %v2685 = vshrl.u32 %v2684, 7
    %v2686 = vsub.s32 %v2683, %v2685
    %v2687 = vrot.slane %v2679, %v2686
    %v2689 = vunpack.c.l.s4 1983009808
    %v2690 = vunpack.c.0.s8 %v2689
    %v2691 = vlaneseq
    %v2692 = vshrl.u32 %v2691, 7
    %v2693 = vsub.s32 %v2690, %v2692
    %v2694 = vrot.slane %v2680, %v2693
    %v2695 = vcombine.low %v2687, %v2694
    %v2696 = vcombine.low %v2669, %v2671
    %v2698 = vunpack.c.l.s4 1983009808
    %v2699 = vunpack.c.0.s8 %v2698
    %v2700 = vlaneseq
    %v2701 = vshrl.u32 %v2700, 7
    %v2702 = vsub.s32 %v2699, %v2701
    %v2703 = vrot.slane %v2696, %v2702
    %2706 = vst [vmem:[%s13 + $0x1c] sm:$0xff] %v2695
    %2707 = vst [vmem:[%s13 + $0x24] sm:$0xf] %v2703
    %v2708 = vld [vmem:[%s2] sm:$0x3]
    %v2709 = vld [vmem:[#allocation9] sm:$0xff]
    %v2710 = vld [vmem:[#allocation9 + $0x8] sm:$0xff]
    %v2711 = vld [vmem:[#allocation9 + $0x10] sm:$0xff]
    %v2712 = vld [vmem:[#allocation9 + $0x18] sm:$0xff]
    %v2713 = vld [vmem:[#allocation9 + $0x20] sm:$0xff]
    %v2714 = vld [vmem:[#allocation9 + $0x28] sm:$0xff]
    %v2715 = vld [vmem:[#allocation9 + $0x30] sm:$0xff]
    %v2716 = vld [vmem:[#allocation9 + $0x38] sm:$0xff]
    %v2717 = vld [vmem:[#allocation15 + $0x14] sm:$0x3]
    %v2719 = vlaneseq
    %v2720 = vshrl.u32 %v2719, 7
    %v2721 = vsub.s32 0, %v2720
    %v2722 = vrot.slane %v2717, %v2721
    %v2723 = vlaneseq
    %v2724 = vshrl.u32 %v2723, 7
    %v2725 = vsub.s32 1, %v2724
    %v2726 = vrot.slane %v2717, %v2725
    %vm2729 = vcmask 261120
    %v2731 = vsel %vm2729, %v2708, 0
    %2733 = vmatprep.subr.mxu0 %v2710
    %2734 = vmatpush1.msra.mxu0 %v2709
    %2735 = vmatprep.subr.mxu0 %v2712
    %2736 = vmatpush1.msra.mxu0 %v2711
    %2737 = vmatprep.subr.mxu0 %v2714
    %2738 = vmatpush1.msra.mxu0 %v2713
    %2739 = vmatprep.subr.mxu0 %v2716
    %2740 = vmatpush1.msra.mxu0 %v2715
    %2741 = vmatprep.subr.mxu0 0.0
    %2742 = vmatpush1.msra.mxu0 0.0
    %2743 = vmatprep.subr.mxu0 0.0
    %2744 = vmatpush1.msra.mxu0 0.0
    %2745 = vmatprep.subr.mxu0 0.0
    %2746 = vmatpush1.msra.mxu0 0.0
    %2747 = vmatprep.subr.mxu0 0.0
    %2748 = vmatpush1.msra.mxu0 0.0
    %2749 = vmatprep.subr.mxu0 0.0
    %2750 = vmatpush1.msra.mxu0 0.0
    %2751 = vmatprep.subr.mxu0 0.0
    %2752 = vmatpush1.msra.mxu0 0.0
    %2753 = vmatprep.subr.mxu0 0.0
    %2754 = vmatpush1.msra.mxu0 0.0
    %2755 = vmatprep.subr.mxu0 0.0
    %2756 = vmatpush1.msra.mxu0 0.0
    %2757 = vmatprep.subr.mxu0 0.0
    %2758 = vmatpush1.msra.mxu0 0.0
    %2759 = vmatprep.subr.mxu0 0.0
    %2760 = vmatpush1.msra.mxu0 0.0
    %2761 = vmatprep.subr.mxu0 0.0
    %2762 = vmatpush1.msra.mxu0 0.0
    %2763 = vmatprep.subr.mxu0 0.0
    %2764 = vmatpush1.msra.mxu0 0.0
    %2765 = vmatprep.subr.mxu0 0.0
    %2766 = vmatpush1.msra.mxu0 0.0
    %2767 = vmatprep.subr.mxu0 0.0
    %2768 = vmatpush1.msra.mxu0 0.0
    %2769 = vmatprep.subr.mxu0 0.0
    %2770 = vmatpush1.msra.mxu0 0.0
    %2771 = vmatprep.subr.mxu0 0.0
    %2772 = vmatpush1.msra.mxu0 0.0
    %2773 = vmatprep.subr.mxu0 0.0
    %2774 = vmatpush1.msra.mxu0 0.0
    %2775 = vmatprep.subr.mxu0 0.0
    %2776 = vmatpush1.msra.mxu0 0.0
    %2777 = vmatprep.subr.mxu0 0.0
    %2778 = vmatpush1.msra.mxu0 0.0
    %2779 = vmatprep.subr.mxu0 0.0
    %2780 = vmatpush1.msra.mxu0 0.0
    %2781 = vmatprep.subr.mxu0 0.0
    %2782 = vmatpush1.msra.mxu0 0.0
    %2783 = vmatprep.subr.mxu0 0.0
    %2784 = vmatpush1.msra.mxu0 0.0
    %2785 = vmatprep.subr.mxu0 0.0
    %2786 = vmatpush1.msra.mxu0 0.0
    %2787 = vmatprep.subr.mxu0 0.0
    %2788 = vmatpush1.msra.mxu0 0.0
    %2789 = vmatprep.subr.mxu0 0.0
    %2790 = vmatpush1.msra.mxu0 0.0
    %2791 = vmatprep.subr.mxu0 0.0
    %2792 = vmatpush1.msra.mxu0 0.0
    %2793 = vmatprep.subr.mxu0 0.0
    %2794 = vmatpush1.msra.mxu0 0.0
    %2795 = vmatprep.subr.mxu0 0.0
    %2796 = vmatpush1.msra.mxu0 0.0
    %2797 = vmatprep.mubr.f32.mxu0 0.0
    %2798 = vmatmul.mubr.f32.gmra.mrb[0].mxu0 %v2731
    %v2799 = vpop.f32.mrb[0].mxu0
    %v2800 = vadd.f32 %v2722, %v2799
    %v2801 = vpop.f32.mrb[0].mxu0
    %v2802 = vadd.f32 %v2726, %v2801
    %2803 = vdwg.mxu0
    %v2806 = vcombine.low %v2800, %v2802
    %v2808 = vunpack.c.l.s4 1983009808
    %v2809 = vunpack.c.0.s8 %v2808
    %v2810 = vlaneseq
    %v2811 = vshrl.u32 %v2810, 7
    %v2812 = vsub.s32 %v2809, %v2811
    %v2813 = vrot.slane %v2806, %v2812
    %2815 = vst [vmem:[%s13 + $0x28] sm:$0xf] %v2813
    %v2816 = vld [vmem:[%s3] sm:$0x3]
    %v2817 = vld [vmem:[#allocation10] sm:$0xff]
    %v2818 = vld [vmem:[#allocation10 + $0x8] sm:$0xff]
    %v2819 = vld [vmem:[#allocation10 + $0x10] sm:$0xff]
    %v2820 = vld [vmem:[#allocation10 + $0x18] sm:$0xff]
    %v2821 = vld [vmem:[#allocation10 + $0x20] sm:$0xff]
    %v2822 = vld [vmem:[#allocation10 + $0x28] sm:$0xff]
    %v2823 = vld [vmem:[#allocation10 + $0x30] sm:$0xff]
    %v2824 = vld [vmem:[#allocation10 + $0x38] sm:$0xff]
    %v2825 = vld [vmem:[#allocation15 + $0x16] sm:$0x3]
    %v2827 = vlaneseq
    %v2828 = vshrl.u32 %v2827, 7
    %v2829 = vsub.s32 0, %v2828
    %v2830 = vrot.slane %v2825, %v2829
    %v2831 = vlaneseq
    %v2832 = vshrl.u32 %v2831, 7
    %v2833 = vsub.s32 1, %v2832
    %v2834 = vrot.slane %v2825, %v2833
    %v2838 = vsel %vm2729, %v2816, 0
    %2840 = vmatprep.subr.mxu0 %v2818
    %2841 = vmatpush1.msra.mxu0 %v2817
    %2842 = vmatprep.subr.mxu0 %v2820
    %2843 = vmatpush1.msra.mxu0 %v2819
    %2844 = vmatprep.subr.mxu0 %v2822
    %2845 = vmatpush1.msra.mxu0 %v2821
    %2846 = vmatprep.subr.mxu0 %v2824
    %2847 = vmatpush1.msra.mxu0 %v2823
    %2848 = vmatprep.subr.mxu0 0.0
    %2849 = vmatpush1.msra.mxu0 0.0
    %2850 = vmatprep.subr.mxu0 0.0
    %2851 = vmatpush1.msra.mxu0 0.0
    %2852 = vmatprep.subr.mxu0 0.0
    %2853 = vmatpush1.msra.mxu0 0.0
    %2854 = vmatprep.subr.mxu0 0.0
    %2855 = vmatpush1.msra.mxu0 0.0
    %2856 = vmatprep.subr.mxu0 0.0
    %2857 = vmatpush1.msra.mxu0 0.0
    %2858 = vmatprep.subr.mxu0 0.0
    %2859 = vmatpush1.msra.mxu0 0.0
    %2860 = vmatprep.subr.mxu0 0.0
    %2861 = vmatpush1.msra.mxu0 0.0
    %2862 = vmatprep.subr.mxu0 0.0
    %2863 = vmatpush1.msra.mxu0 0.0
    %2864 = vmatprep.subr.mxu0 0.0
    %2865 = vmatpush1.msra.mxu0 0.0
    %2866 = vmatprep.subr.mxu0 0.0
    %2867 = vmatpush1.msra.mxu0 0.0
    %2868 = vmatprep.subr.mxu0 0.0
    %2869 = vmatpush1.msra.mxu0 0.0
    %2870 = vmatprep.subr.mxu0 0.0
    %2871 = vmatpush1.msra.mxu0 0.0
    %2872 = vmatprep.subr.mxu0 0.0
    %2873 = vmatpush1.msra.mxu0 0.0
    %2874 = vmatprep.subr.mxu0 0.0
    %2875 = vmatpush1.msra.mxu0 0.0
    %2876 = vmatprep.subr.mxu0 0.0
    %2877 = vmatpush1.msra.mxu0 0.0
    %2878 = vmatprep.subr.mxu0 0.0
    %2879 = vmatpush1.msra.mxu0 0.0
    %2880 = vmatprep.subr.mxu0 0.0
    %2881 = vmatpush1.msra.mxu0 0.0
    %2882 = vmatprep.subr.mxu0 0.0
    %2883 = vmatpush1.msra.mxu0 0.0
    %2884 = vmatprep.subr.mxu0 0.0
    %2885 = vmatpush1.msra.mxu0 0.0
    %2886 = vmatprep.subr.mxu0 0.0
    %2887 = vmatpush1.msra.mxu0 0.0
    %2888 = vmatprep.subr.mxu0 0.0
    %2889 = vmatpush1.msra.mxu0 0.0
    %2890 = vmatprep.subr.mxu0 0.0
    %2891 = vmatpush1.msra.mxu0 0.0
    %2892 = vmatprep.subr.mxu0 0.0
    %2893 = vmatpush1.msra.mxu0 0.0
    %2894 = vmatprep.subr.mxu0 0.0
    %2895 = vmatpush1.msra.mxu0 0.0
    %2896 = vmatprep.subr.mxu0 0.0
    %2897 = vmatpush1.msra.mxu0 0.0
    %2898 = vmatprep.subr.mxu0 0.0
    %2899 = vmatpush1.msra.mxu0 0.0
    %2900 = vmatprep.subr.mxu0 0.0
    %2901 = vmatpush1.msra.mxu0 0.0
    %2902 = vmatprep.subr.mxu0 0.0
    %2903 = vmatpush1.msra.mxu0 0.0
    %2904 = vmatprep.mubr.f32.mxu0 0.0
    %2905 = vmatmul.mubr.f32.gmra.mrb[0].mxu0 %v2838
    %v2906 = vpop.f32.mrb[0].mxu0
    %v2907 = vadd.f32 %v2830, %v2906
    %v2908 = vpop.f32.mrb[0].mxu0
    %v2909 = vadd.f32 %v2834, %v2908
    %2910 = vdwg.mxu0
    %v2913 = vcombine.low %v2907, %v2909
    %v2915 = vunpack.c.l.s4 1983009808
    %v2916 = vunpack.c.0.s8 %v2915
    %v2917 = vlaneseq
    %v2918 = vshrl.u32 %v2917, 7
    %v2919 = vsub.s32 %v2916, %v2918
    %v2920 = vrot.slane %v2913, %v2919
    %2922 = vst [vmem:[%s13 + $0x2c] sm:$0xf] %v2920
    %v2923 = vld [vmem:[#allocation2] sm:$0x3]
    %v2924 = vld [vmem:[#allocation12] sm:$0xff]
    %v2925 = vld [vmem:[#allocation15 + $0x18] sm:$0x1]
    %v2927 = vlaneseq
    %v2928 = vshrl.u32 %v2927, 7
    %v2929 = vsub.s32 0, %v2928
    %v2930 = vrot.slane %v2925, %v2929
    %vm2932 = vcmask 64512
    %v2934 = vsel %vm2932, %v2923, 0
    %2936 = vmatprep.subr.mxu0 0.0
    %2937 = vmatpush1.msra.mxu0 %v2924
    %2938 = vmatprep.subr.mxu0 0.0
    %2939 = vmatpush1.msra.mxu0 0.0
    %2940 = vmatprep.subr.mxu0 0.0
    %2941 = vmatpush1.msra.mxu0 0.0
    %2942 = vmatprep.subr.mxu0 0.0
    %2943 = vmatpush1.msra.mxu0 0.0
    %2944 = vmatprep.subr.mxu0 0.0
    %2945 = vmatpush1.msra.mxu0 0.0
    %2946 = vmatprep.subr.mxu0 0.0
    %2947 = vmatpush1.msra.mxu0 0.0
    %2948 = vmatprep.subr.mxu0 0.0
    %2949 = vmatpush1.msra.mxu0 0.0
    %2950 = vmatprep.subr.mxu0 0.0
    %2951 = vmatpush1.msra.mxu0 0.0
    %2952 = vmatprep.subr.mxu0 0.0
    %2953 = vmatpush1.msra.mxu0 0.0
    %2954 = vmatprep.subr.mxu0 0.0
    %2955 = vmatpush1.msra.mxu0 0.0
    %2956 = vmatprep.subr.mxu0 0.0
    %2957 = vmatpush1.msra.mxu0 0.0
    %2958 = vmatprep.subr.mxu0 0.0
    %2959 = vmatpush1.msra.mxu0 0.0
    %2960 = vmatprep.subr.mxu0 0.0
    %2961 = vmatpush1.msra.mxu0 0.0
    %2962 = vmatprep.subr.mxu0 0.0
    %2963 = vmatpush1.msra.mxu0 0.0
    %2964 = vmatprep.subr.mxu0 0.0
    %2965 = vmatpush1.msra.mxu0 0.0
    %2966 = vmatprep.subr.mxu0 0.0
    %2967 = vmatpush1.msra.mxu0 0.0
    %2968 = vmatprep.subr.mxu0 0.0
    %2969 = vmatpush1.msra.mxu0 0.0
    %2970 = vmatprep.subr.mxu0 0.0
    %2971 = vmatpush1.msra.mxu0 0.0
    %2972 = vmatprep.subr.mxu0 0.0
    %2973 = vmatpush1.msra.mxu0 0.0
    %2974 = vmatprep.subr.mxu0 0.0
    %2975 = vmatpush1.msra.mxu0 0.0
    %2976 = vmatprep.subr.mxu0 0.0
    %2977 = vmatpush1.msra.mxu0 0.0
    %2978 = vmatprep.subr.mxu0 0.0
    %2979 = vmatpush1.msra.mxu0 0.0
    %2980 = vmatprep.subr.mxu0 0.0
    %2981 = vmatpush1.msra.mxu0 0.0
    %2982 = vmatprep.subr.mxu0 0.0
    %2983 = vmatpush1.msra.mxu0 0.0
    %2984 = vmatprep.subr.mxu0 0.0
    %2985 = vmatpush1.msra.mxu0 0.0
    %2986 = vmatprep.subr.mxu0 0.0
    %2987 = vmatpush1.msra.mxu0 0.0
    %2988 = vmatprep.subr.mxu0 0.0
    %2989 = vmatpush1.msra.mxu0 0.0
    %2990 = vmatprep.subr.mxu0 0.0
    %2991 = vmatpush1.msra.mxu0 0.0
    %2992 = vmatprep.subr.mxu0 0.0
    %2993 = vmatpush1.msra.mxu0 0.0
    %2994 = vmatprep.subr.mxu0 0.0
    %2995 = vmatpush1.msra.mxu0 0.0
    %2996 = vmatprep.subr.mxu0 0.0
    %2997 = vmatpush1.msra.mxu0 0.0
    %2998 = vmatprep.subr.mxu0 0.0
    %2999 = vmatpush1.msra.mxu0 0.0
    %3000 = vmatprep.mubr.f32.mxu0 0.0
    %3001 = vmatmul.mubr.f32.gmra.mrb[0].mxu0 %v2934
    %v3002 = vpop.f32.mrb[0].mxu0
    %v3003 = vadd.f32 %v2930, %v3002
    %v3004 = vpop.f32.mrb[0].mxu0
    %3005 = vdwg.mxu0
    %3006 = vst [vmem:[%s13 + $0x30] sm:$0x3] %v3003
    %v3007 = vld [vmem:[#allocation4] sm:$0x3]
    %v3008 = vld [vmem:[#allocation13] sm:$0xff]
    %v3009 = vld [vmem:[#allocation15 + $0x19] sm:$0x1]
    %v3011 = vlaneseq
    %v3012 = vshrl.u32 %v3011, 7
    %v3013 = vsub.s32 0, %v3012
    %v3014 = vrot.slane %v3009, %v3013
    %v3017 = vsel %vm2932, %v3007, 0
    %3019 = vmatprep.subr.mxu0 0.0
    %3020 = vmatpush1.msra.mxu0 %v3008
    %3021 = vmatprep.subr.mxu0 0.0
    %3022 = vmatpush1.msra.mxu0 0.0
    %3023 = vmatprep.subr.mxu0 0.0
    %3024 = vmatpush1.msra.mxu0 0.0
    %3025 = vmatprep.subr.mxu0 0.0
    %3026 = vmatpush1.msra.mxu0 0.0
    %3027 = vmatprep.subr.mxu0 0.0
    %3028 = vmatpush1.msra.mxu0 0.0
    %3029 = vmatprep.subr.mxu0 0.0
    %3030 = vmatpush1.msra.mxu0 0.0
    %3031 = vmatprep.subr.mxu0 0.0
    %3032 = vmatpush1.msra.mxu0 0.0
    %3033 = vmatprep.subr.mxu0 0.0
    %3034 = vmatpush1.msra.mxu0 0.0
    %3035 = vmatprep.subr.mxu0 0.0
    %3036 = vmatpush1.msra.mxu0 0.0
    %3037 = vmatprep.subr.mxu0 0.0
    %3038 = vmatpush1.msra.mxu0 0.0
    %3039 = vmatprep.subr.mxu0 0.0
    %3040 = vmatpush1.msra.mxu0 0.0
    %3041 = vmatprep.subr.mxu0 0.0
    %3042 = vmatpush1.msra.mxu0 0.0
    %3043 = vmatprep.subr.mxu0 0.0
    %3044 = vmatpush1.msra.mxu0 0.0
    %3045 = vmatprep.subr.mxu0 0.0
    %3046 = vmatpush1.msra.mxu0 0.0
    %3047 = vmatprep.subr.mxu0 0.0
    %3048 = vmatpush1.msra.mxu0 0.0
    %3049 = vmatprep.subr.mxu0 0.0
    %3050 = vmatpush1.msra.mxu0 0.0
    %3051 = vmatprep.subr.mxu0 0.0
    %3052 = vmatpush1.msra.mxu0 0.0
    %3053 = vmatprep.subr.mxu0 0.0
    %3054 = vmatpush1.msra.mxu0 0.0
    %3055 = vmatprep.subr.mxu0 0.0
    %3056 = vmatpush1.msra.mxu0 0.0
    %3057 = vmatprep.subr.mxu0 0.0
    %3058 = vmatpush1.msra.mxu0 0.0
    %3059 = vmatprep.subr.mxu0 0.0
    %3060 = vmatpush1.msra.mxu0 0.0
    %3061 = vmatprep.subr.mxu0 0.0
    %3062 = vmatpush1.msra.mxu0 0.0
    %3063 = vmatprep.subr.mxu0 0.0
    %3064 = vmatpush1.msra.mxu0 0.0
    %3065 = vmatprep.subr.mxu0 0.0
    %3066 = vmatpush1.msra.mxu0 0.0
    %3067 = vmatprep.subr.mxu0 0.0
    %3068 = vmatpush1.msra.mxu0 0.0
    %3069 = vmatprep.subr.mxu0 0.0
    %3070 = vmatpush1.msra.mxu0 0.0
    %3071 = vmatprep.subr.mxu0 0.0
    %3072 = vmatpush1.msra.mxu0 0.0
    %3073 = vmatprep.subr.mxu0 0.0
    %3074 = vmatpush1.msra.mxu0 0.0
    %3075 = vmatprep.subr.mxu0 0.0
    %3076 = vmatpush1.msra.mxu0 0.0
    %3077 = vmatprep.subr.mxu0 0.0
    %3078 = vmatpush1.msra.mxu0 0.0
    %3079 = vmatprep.subr.mxu0 0.0
    %3080 = vmatpush1.msra.mxu0 0.0
    %3081 = vmatprep.subr.mxu0 0.0
    %3082 = vmatpush1.msra.mxu0 0.0
    %3083 = vmatprep.mubr.f32.mxu0 0.0
    %3084 = vmatmul.mubr.f32.gmra.mrb[0].mxu0 %v3017
    %v3085 = vpop.f32.mrb[0].mxu0
    %v3086 = vadd.f32 %v3014, %v3085
    %v3087 = vpop.f32.mrb[0].mxu0
    %3088 = vdwg.mxu0
    %3089 = vst [vmem:[%s13 + $0x32] sm:$0x3] %v3086
    // Predicated region
    $region90: #{_forward_pallas.1} parent=1 // pred_check
      _
    $region91: #{_forward_pallas.1} parent=1 // pred_check_branch
      %3091 = sbr.rel (0) target = $region93
    $region92: #{_forward_pallas.1} parent=1 // pred_region
      _
    $region93: #{_forward_pallas.1} parent=1 // pred_fallthru
      _
    // Predicated region
    $region94: #{_forward_pallas.1} parent=1 // pred_check
      _
    $region95: #{_forward_pallas.1} parent=1 // pred_check_branch
      %3093 = sbr.rel (0) target = $region97
    $region96: #{_forward_pallas.1} parent=1 // pred_region
      _
    $region97: #{_forward_pallas.1} parent=1 // pred_fallthru
      _
    %3094 = vsyncpa [#allocation3], 1
    %3095 = vsyncpa [#allocation5], 1
    %3096 = vsyncpa [#allocation8], 1
    %3097 = vsyncpa [#allocation11], 1
    %3098 = vsyncpa [#allocation14], 1

</llo_original>
